<compile_context>
chip_gen: v6e
topology: v6e:2x2x1
jax: 0.10.0
libtpu: 0.0.40
codegen_flags: <defaults>
</compile_context>

<pallas_src>
import jax
import jax.numpy as jnp
from jax.experimental import pallas as pl
from jax.experimental.pallas import tpu as pltpu


def _make_set_criterion_kernel(no_object_class):
    """Kernel factory; no_object_class (= num_classes) is a static constant."""

    def kernel(logits_ref, tgt_ref, roww_ref, out_ref, num_acc, corr_acc):
        i = pl.program_id(1)  # reduction (row-block) axis

        @pl.when(i == 0)
        def _():
            num_acc[...] = jnp.zeros_like(num_acc)
            corr_acc[...] = jnp.zeros_like(corr_acc)

        logits = logits_ref[...]            # (tile_n, C+1) f32
        tgt = tgt_ref[...]                  # (tile_n, 1) int32
        row_w = roww_ref[...]               # (tile_n, 1) f32, 0 for padded rows

        # log-softmax pieces over the class (lane) axis
        m = jnp.max(logits, axis=-1, keepdims=True)
        lse = jnp.log(jnp.sum(jnp.exp(logits - m), axis=-1, keepdims=True))

        lane = jax.lax.broadcasted_iota(jnp.int32, logits.shape, 1)
        onehot = (lane == tgt).astype(jnp.float32)
        # logit at the target class (exact: exactly one non-zero term)
        tsel = jnp.sum(onehot * logits, axis=-1, keepdims=True)

        nll = (m + lse) - tsel              # -log_softmax(logits)[target]
        num_acc[...] += row_w * nll

        # top-1 accuracy on matched queries; matched == (target != no-object).
        # Note: an exact float tie at the max counts the target as correct even
        # if it is not the first max index (torch.topk picks the first); ties
        # are measure-zero for real-valued logits.
        matched = tgt != no_object_class
        corr = jnp.logical_and(matched, tsel >= m)
        corr_acc[...] += jnp.where(corr, 1.0, 0.0)

        @pl.when(i == pl.num_programs(1) - 1)
        def _():
            num_s = jnp.sum(num_acc[...])
            corr_s = jnp.sum(corr_acc[...])
            lane_o = jax.lax.broadcasted_iota(jnp.int32, out_ref.shape, 2)
            out_ref[...] = jnp.where(
                lane_o == 0, num_s,
                jnp.where(lane_o == 1, corr_s, 0.0)).astype(out_ref.dtype)

    return kernel


def set_criterion_losses(pred_logits, target_classes, matched_mask, empty_weight,
                         *, tile_n=512, num_splits=2):
    """Returns {'loss_ce', 'class_error'} matching SetCriterion.loss_labels."""
    B, Q, C1 = pred_logits.shape
    no_object = C1 - 1
    N = B * Q
    block_rows = tile_n * num_splits
    n_pad = ((N + block_rows - 1) // block_rows) * block_rows
    inner_blocks = n_pad // (num_splits * tile_n)

    logits = pred_logits.reshape(N, C1).astype(jnp.float32)
    tgt = target_classes.reshape(N, 1).astype(jnp.int32)
    # per-row class weight: tiny XLA gather done once, outside the hot loop
    row_w = empty_weight.astype(jnp.float32)[target_classes.reshape(N)]
    row_w = row_w.reshape(N, 1)

    if n_pad != N:
        pad = n_pad - N
        logits = jnp.pad(logits, ((0, pad), (0, 0)))
        # padded rows: target = no-object (excluded from accuracy), weight = 0
        tgt = jnp.pad(tgt, ((0, pad), (0, 0)), constant_values=no_object)
        row_w = jnp.pad(row_w, ((0, pad), (0, 0)))

    kernel = _make_set_criterion_kernel(no_object)
    row_block = lambda s, i: (s * inner_blocks + i, 0)

    partials = pl.pallas_call(
        kernel,
        out_shape=jax.ShapeDtypeStruct((num_splits, 1, 128), jnp.float32),
        grid_spec=pltpu.PrefetchScalarGridSpec(
            num_scalar_prefetch=0,
            grid=(num_splits, inner_blocks),
            in_specs=[
                pl.BlockSpec((tile_n, C1), row_block),
                pl.BlockSpec((tile_n, 1), row_block),
                pl.BlockSpec((tile_n, 1), row_block),
            ],
            out_specs=pl.BlockSpec((1, 1, 128), lambda s, i: (s, 0, 0)),
            scratch_shapes=[pltpu.VMEM((tile_n, 1), jnp.float32),
                            pltpu.VMEM((tile_n, 1), jnp.float32)],
        ),
        compiler_params=pltpu.CompilerParams(
            # "parallel" on the row-split axis lets v7x use both TensorCores;
            # the reduction axis stays sequential ("arbitrary").
            dimension_semantics=("parallel", "arbitrary")),
    )(logits, tgt, row_w)

    num = jnp.sum(partials[:, 0, 0])    # sum(w[y] * nll)
    corr = jnp.sum(partials[:, 0, 1])   # correct matched predictions
    # Normalizer and matched-query count depend only on tiny per-row data.
    den = jnp.sum(row_w)
    cnt = jnp.maximum(jnp.sum(matched_mask.astype(jnp.float32)), 1.0)

    loss_ce = num / den
    class_error = 100.0 - 100.0 * corr / cnt
    # TODO(synk): loss_cardinality and the end of forward() raise
    # ValueError('not implemented') in the reference; not reproduced here.
    return {"loss_ce": loss_ce, "class_error": class_error}


if __name__ == "__main__":
    key = jax.random.PRNGKey(0)
    B, Q, num_classes = 2, 8, 6
    eos_coef = 0.1
    C1 = num_classes + 1

    k_logits, k_labels = jax.random.split(key)
    pred_logits = jax.random.normal(k_logits, (B, Q, C1), dtype=jnp.float32)

    # TODO(synk): Hungarian matcher is a combinatorial CPU algorithm; use a
    # deterministic identity matching (query i <-> target i) instead.
    num_targets = [3, 2]
    label_keys = jax.random.split(k_labels, B)
    labels = [jax.random.randint(k, (n,), 0, num_classes)
              for k, n in zip(label_keys, num_targets)]

    target_classes = jnp.full((B, Q), num_classes, dtype=jnp.int32)
    matched_mask = jnp.zeros((B, Q), dtype=jnp.float32)
    for b, lab in enumerate(labels):
        n = int(lab.shape[0])
        target_classes = target_classes.at[b, :n].set(lab)
        matched_mask = matched_mask.at[b, :n].set(1.0)

    # empty_weight buffer from __init__: ones(num_classes+1), last = eos_coef
    empty_weight = jnp.ones((C1,), jnp.float32).at[-1].set(eos_coef)

    losses = set_criterion_losses(pred_logits, target_classes, matched_mask,
                                  empty_weight)
    losses = {k: jax.block_until_ready(v) for k, v in losses.items()}

    # pure-JAX reference for correctness
    logp = jax.nn.log_softmax(pred_logits, axis=-1)
    nll = -jnp.take_along_axis(logp, target_classes[..., None], axis=-1)[..., 0]
    wt = empty_weight[target_classes]
    ref_ce = jnp.sum(wt * nll) / jnp.sum(wt)
    pred = jnp.argmax(pred_logits, axis=-1)
    corr = jnp.sum((pred == target_classes) * matched_mask)
    ref_err = 100.0 - 100.0 * corr / jnp.sum(matched_mask)

    assert jnp.allclose(losses["loss_ce"], ref_ce, rtol=1e-4, atol=1e-4), (
        losses["loss_ce"], ref_ce)
    assert jnp.allclose(losses["class_error"], ref_err, rtol=1e-4, atol=1e-4), (
        losses["class_error"], ref_err)
    print("KERNEL_OK")
</pallas_src>

<mosaic_0001>
module attributes {stable_mosaic.version = 11 : i64} {
  func.func @kernel(%arg0: i32, %arg1: i32, %arg2: memref<512x7xf32, #tpu.memory_space<vmem>>, %arg3: memref<512x1xi32, #tpu.memory_space<vmem>>, %arg4: memref<512x1xf32, #tpu.memory_space<vmem>>, %arg5: memref<1x1x128xf32, #tpu.memory_space<vmem>>, %arg6: memref<512x1xf32, #tpu.memory_space<vmem>>, %arg7: memref<512x1xf32, #tpu.memory_space<vmem>>) attributes {dimension_semantics = [#tpu.dimension_semantics<parallel>, #tpu.dimension_semantics<arbitrary>], iteration_bounds = array<i64: 2, 1>, scalar_prefetch = 0 : i64, scratch_operands = 2 : i64, tpu.core_type = #tpu.core_type<tc>, window_params = [{transform_indices = @transform_0, window_bounds = array<i64: 512, 7>}, {transform_indices = @transform_1, window_bounds = array<i64: 512, 1>}, {transform_indices = @transform_2, window_bounds = array<i64: 512, 1>}, {transform_indices = @transform_3, window_bounds = array<i64: 1, 1, 128>}]} {
    %c0_i32 = arith.constant 0 : i32
    %0 = arith.cmpi eq, %arg1, %c0_i32 : i32
    %1 = arith.extui %0 : i1 to i32
    %c0_i32_0 = arith.constant 0 : i32
    %2 = arith.cmpi ne, %1, %c0_i32_0 : i32
    scf.if %2 {
      %cst_20 = arith.constant 0.000000e+00 : f32
      %41 = vector.broadcast %cst_20 : f32 to vector<512x1xf32>
      %c0_21 = arith.constant 0 : index
      %c0_22 = arith.constant 0 : index
      %42 = vector.load %arg6[%c0_21, %c0_22] : memref<512x1xf32, #tpu.memory_space<vmem>>, vector<512x1xf32>
      tpu.vector_store %arg6[%c0_21, %c0_22], %41 {strides = array<i32>} : memref<512x1xf32, #tpu.memory_space<vmem>>, vector<512x1xf32>,
      %cst_23 = arith.constant 0.000000e+00 : f32
      %43 = vector.broadcast %cst_23 : f32 to vector<512x1xf32>
      %c0_24 = arith.constant 0 : index
      %c0_25 = arith.constant 0 : index
      %44 = vector.load %arg7[%c0_24, %c0_25] : memref<512x1xf32, #tpu.memory_space<vmem>>, vector<512x1xf32>
      tpu.vector_store %arg7[%c0_24, %c0_25], %43 {strides = array<i32>} : memref<512x1xf32, #tpu.memory_space<vmem>>, vector<512x1xf32>,
    } else {
    }
    %c0 = arith.constant 0 : index
    %c0_1 = arith.constant 0 : index
    %3 = vector.load %arg2[%c0, %c0_1] : memref<512x7xf32, #tpu.memory_space<vmem>>, vector<512x7xf32>
    %c0_2 = arith.constant 0 : index
    %c0_3 = arith.constant 0 : index
    %4 = vector.load %arg3[%c0_2, %c0_3] : memref<512x1xi32, #tpu.memory_space<vmem>>, vector<512x1xi32>
    %c0_4 = arith.constant 0 : index
    %c0_5 = arith.constant 0 : index
    %5 = vector.load %arg4[%c0_4, %c0_5] : memref<512x1xf32, #tpu.memory_space<vmem>>, vector<512x1xf32>
    %cst = arith.constant dense<0xFF800000> : vector<512xf32>
    %6 = vector.multi_reduction <maximumf>, %3, %cst [1] : vector<512x7xf32> to vector<512xf32>
    %7 = vector.shape_cast %6 : vector<512xf32> to vector<512x1xf32>
    %8 = vector.broadcast %7 : vector<512x1xf32> to vector<512x7xf32>
    %9 = arith.subf %3, %8 : vector<512x7xf32>
    %10 = math.exp %9 : vector<512x7xf32>
    %cst_6 = arith.constant dense<0.000000e+00> : vector<512xf32>
    %11 = vector.multi_reduction <add>, %10, %cst_6 [1] : vector<512x7xf32> to vector<512xf32>
    %12 = vector.shape_cast %11 : vector<512xf32> to vector<512x1xf32>
    %13 = math.log %12 : vector<512x1xf32>
    %14 = tpu.iota {dimensions = array<i32: 1>} : vector<512x7xi32>
    %15 = vector.broadcast %4 : vector<512x1xi32> to vector<512x7xi32>
    %16 = arith.cmpi eq, %14, %15 : vector<512x7xi32>
    %17 = arith.extui %16 : vector<512x7xi1> to vector<512x7xi32>
    %18 = arith.sitofp %17 : vector<512x7xi32> to vector<512x7xf32>
    %19 = arith.mulf %18, %3 : vector<512x7xf32>
    %cst_7 = arith.constant dense<0.000000e+00> : vector<512xf32>
    %20 = vector.multi_reduction <add>, %19, %cst_7 [1] : vector<512x7xf32> to vector<512xf32>
    %21 = vector.shape_cast %20 : vector<512xf32> to vector<512x1xf32>
    %22 = arith.addf %7, %13 : vector<512x1xf32>
    %23 = arith.subf %22, %21 : vector<512x1xf32>
    %c0_8 = arith.constant 0 : index
    %c0_9 = arith.constant 0 : index
    %24 = vector.load %arg6[%c0_8, %c0_9] : memref<512x1xf32, #tpu.memory_space<vmem>>, vector<512x1xf32>
    %25 = arith.mulf %5, %23 : vector<512x1xf32>
    %26 = arith.addf %24, %25 : vector<512x1xf32>
    %c0_10 = arith.constant 0 : index
    %c0_11 = arith.constant 0 : index
    %27 = vector.load %arg6[%c0_10, %c0_11] : memref<512x1xf32, #tpu.memory_space<vmem>>, vector<512x1xf32>
    tpu.vector_store %arg6[%c0_10, %c0_11], %26 {strides = array<i32>} : memref<512x1xf32, #tpu.memory_space<vmem>>, vector<512x1xf32>,
    %c6_i32 = arith.constant 6 : i32
    %28 = vector.broadcast %c6_i32 : i32 to vector<512x1xi32>
    %29 = arith.cmpi ne, %4, %28 : vector<512x1xi32>
    %30 = arith.cmpf oge, %21, %7 : vector<512x1xf32>
    %31 = arith.andi %29, %30 : vector<512x1xi1>
    %c0_12 = arith.constant 0 : index
    %c0_13 = arith.constant 0 : index
    %32 = vector.load %arg7[%c0_12, %c0_13] : memref<512x1xf32, #tpu.memory_space<vmem>>, vector<512x1xf32>
    %cst_14 = arith.constant 1.000000e+00 : f32
    %cst_15 = arith.constant 0.000000e+00 : f32
    %33 = vector.broadcast %cst_14 : f32 to vector<512x1xf32>
    %34 = vector.broadcast %cst_15 : f32 to vector<512x1xf32>
    %35 = arith.select %31, %33, %34 : vector<512x1xi1>, vector<512x1xf32>
    %36 = arith.addf %32, %35 : vector<512x1xf32>
    %c0_16 = arith.constant 0 : index
    %c0_17 = arith.constant 0 : index
    %37 = vector.load %arg7[%c0_16, %c0_17] : memref<512x1xf32, #tpu.memory_space<vmem>>, vector<512x1xf32>
    tpu.vector_store %arg7[%c0_16, %c0_17], %36 {strides = array<i32>} : memref<512x1xf32, #tpu.memory_space<vmem>>, vector<512x1xf32>,
    %c0_i32_18 = arith.constant 0 : i32
    %38 = arith.cmpi eq, %arg1, %c0_i32_18 : i32
    %39 = arith.extui %38 : i1 to i32
    %c0_i32_19 = arith.constant 0 : i32
    %40 = arith.cmpi ne, %39, %c0_i32_19 : i32
    scf.if %40 {
      %c0_20 = arith.constant 0 : index
      %c0_21 = arith.constant 0 : index
      %41 = vector.load %arg6[%c0_20, %c0_21] : memref<512x1xf32, #tpu.memory_space<vmem>>, vector<512x1xf32>
      %42 = vector.shape_cast %41 : vector<512x1xf32> to vector<1x512x1xf32>
      %cst_22 = arith.constant dense<0.000000e+00> : vector<1xf32>
      %43 = vector.multi_reduction <add>, %42, %cst_22 [1, 2] : vector<1x512x1xf32> to vector<1xf32>
      %44 = vector.shape_cast %43 : vector<1xf32> to vector<1x1x1xf32>
      %45 = vector.extract %44[0, 0, 0] : f32 from vector<1x1x1xf32>
      %c0_23 = arith.constant 0 : index
      %c0_24 = arith.constant 0 : index
      %46 = vector.load %arg7[%c0_23, %c0_24] : memref<512x1xf32, #tpu.memory_space<vmem>>, vector<512x1xf32>
      %47 = vector.shape_cast %46 : vector<512x1xf32> to vector<1x512x1xf32>
      %cst_25 = arith.constant dense<0.000000e+00> : vector<1xf32>
      %48 = vector.multi_reduction <add>, %47, %cst_25 [1, 2] : vector<1x512x1xf32> to vector<1xf32>
      %49 = vector.shape_cast %48 : vector<1xf32> to vector<1x1x1xf32>
      %50 = vector.extract %49[0, 0, 0] : f32 from vector<1x1x1xf32>
      %51 = tpu.iota {dimensions = array<i32: 2>} : vector<1x1x128xi32>
      %c0_i32_26 = arith.constant 0 : i32
      %52 = vector.broadcast %c0_i32_26 : i32 to vector<1x1x128xi32>
      %53 = arith.cmpi eq, %51, %52 : vector<1x1x128xi32>
      %c1_i32 = arith.constant 1 : i32
      %54 = vector.broadcast %c1_i32 : i32 to vector<1x1x128xi32>
      %55 = arith.cmpi eq, %51, %54 : vector<1x1x128xi32>
      %cst_27 = arith.constant 0.000000e+00 : f32
      %56 = vector.broadcast %50 : f32 to vector<1x1x128xf32>
      %57 = vector.broadcast %cst_27 : f32 to vector<1x1x128xf32>
      %58 = arith.select %55, %56, %57 : vector<1x1x128xi1>, vector<1x1x128xf32>
      %59 = vector.broadcast %45 : f32 to vector<1x1x128xf32>
      %60 = arith.select %53, %59, %58 : vector<1x1x128xi1>, vector<1x1x128xf32>
      %c0_28 = arith.constant 0 : index
      %c0_29 = arith.constant 0 : index
      %c0_30 = arith.constant 0 : index
      %61 = vector.load %arg5[%c0_28, %c0_29, %c0_30] : memref<1x1x128xf32, #tpu.memory_space<vmem>>, vector<1x1x128xf32>
      tpu.vector_store %arg5[%c0_28, %c0_29, %c0_30], %60 {strides = array<i32>} : memref<1x1x128xf32, #tpu.memory_space<vmem>>, vector<1x1x128xf32>,
    } else {
    }
    return
  }
  func.func @transform_0(%arg0: i32, %arg1: i32) -> (i32, i32) {
    %c1_i32 = arith.constant 1 : i32
    %0 = arith.muli %arg0, %c1_i32 : i32
    %1 = arith.addi %0, %arg1 : i32
    %c0_i32 = arith.constant 0 : i32
    %c0_i32_0 = arith.constant 0 : i32
    return %1, %c0_i32 : i32, i32
  }
  func.func @transform_1(%arg0: i32, %arg1: i32) -> (i32, i32) {
    %c1_i32 = arith.constant 1 : i32
    %0 = arith.muli %arg0, %c1_i32 : i32
    %1 = arith.addi %0, %arg1 : i32
    %c0_i32 = arith.constant 0 : i32
    %c0_i32_0 = arith.constant 0 : i32
    return %1, %c0_i32 : i32, i32
  }
  func.func @transform_2(%arg0: i32, %arg1: i32) -> (i32, i32) {
    %c1_i32 = arith.constant 1 : i32
    %0 = arith.muli %arg0, %c1_i32 : i32
    %1 = arith.addi %0, %arg1 : i32
    %c0_i32 = arith.constant 0 : i32
    %c0_i32_0 = arith.constant 0 : i32
    return %1, %c0_i32 : i32, i32
  }
  func.func @transform_3(%arg0: i32, %arg1: i32) -> (i32, i32, i32) {
    %c0_i32 = arith.constant 0 : i32
    %c0_i32_0 = arith.constant 0 : i32
    %c0_i32_1 = arith.constant 0 : i32
    return %arg0, %c0_i32, %c0_i32_0 : i32, i32, i32
  }
}

</mosaic_0001>

<llo_original>
// kernel: tpu_custom_call.1
$region0: #{tpu_custom_call.1}
  #allocation0 [shape = 'u32[]', space=smem, size = 0x4, offset = 0x4, fixed_abs, tag = 'smem constant byte address 0x4 - core index']
  #allocation1 [shape = 'u32[144,128]{1,0:T(1,128)}', space=vmem, size = 0x12000, scoped, tag = 'internal scratch']
  #allocation2 [shape = 'f32[512,1]{1,0:T(8,128)}', space=vmem, size = 0x40000, scoped, tag = 'scratch operand']
  #allocation3 [shape = 'f32[512,1]{1,0:T(8,128)}', space=vmem, size = 0x40000, scoped, tag = 'scratch operand']
  %s0 = inlined_call_operand.vmem [shape: f32[1024,7], index: 0, kind: input, shape index: {}]
  %s1 = inlined_call_operand.vmem [shape: s32[1024,1], index: 1, kind: input, shape index: {}]
  %s2 = inlined_call_operand.vmem [shape: f32[1024,1], index: 2, kind: input, shape index: {}]
  %s3 = inlined_call_operand.hbm [shape: f32[2,1,128], index: 3, kind: output, shape index: {}]
  %s4 = sld [smem:[#allocation0]]
  $region53: #{tpu_custom_call.1} parent=0
    _
  %s6 = ssub.s32 1, %s4
  %s7 = scalar_select 0, %s6, %s4
  $region1: #{tpu_custom_call.1} parent=0
    #allocation4 [shape = 'u8[1024]{0}', space=vmem, size = 0x400, scoped, tag = 'output window, operand 0']
    #allocation5 [shape = 's32[2]{0}', space=sflag, size = 0x8, scoped, tag = 'scoped memory for tpu_custom_call.1']
    %8 = vsyncpa [#allocation5], 0
    %s9 = scalar_lea.sflag [#allocation5], 1
    %10 = vsyncpa %s9, 0
    loop: start=0, step=1, limit=4
    $region2: #{tpu_custom_call.1} parent=1 // loop_pre_header
      _
    $region3: #{tpu_custom_call.1} parent=1 // loop_header
      %s12 = sphi 0, %s16
      %p13 = scmp.ge.s32.totalorder %s12, 4
      %s19 = sphi 0, %s31
      %s20 = sphi 0, %s27
      %s21 = sphi 0, %s19
      %s22 = sphi 0, %s20
      %s23 = sphi 0, %s21
      %s24 = sphi 0, %s22
      %s36 = sphi 0, %s38
      %s39 = sphi 0, %s36
      %s40 = sphi 0, %s39
      %s56 = sphi 0, %s40
      %s64 = sphi 0, %s66
      %s67 = sphi 0, %s64
      %s68 = sphi 0, %s67
      %s84 = sphi 0, %s68
      %s92 = sphi 0, %s94
      %s95 = sphi 0, %s92
      %s96 = sphi 0, %s95
      %s112 = sphi 0, %s96
      %s118 = sphi 0, %s120
      %s121 = sphi 0, %s118
      %s122 = sphi 0, %s121
      %s138 = sphi 0, %s122
    $region4: #{tpu_custom_call.1} parent=1 // loop_header_branch
      %15 = sbr.rel (%p13) target = $region8
    $region5: #{tpu_custom_call.1} parent=1 // loop_body
      %s17 = ssub.s32 %s12, 1
      %s18 = ssub.s32 %s12, 2
      %s25 = sadd.s32 1, %s20
      %p26 = scmp.ge.s32.totalorder %s25, 1
      %s27 = scalar_select %p26, 0, %s25
      %s28 = sadd.s32 1, %s19
      %s29 = scalar_select %p26, %s28, %s19
      %p30 = scmp.ge.s32.totalorder %s29, 2
      %s31 = scalar_select %p30, 0, %s29
      %s32 = sadd.s32 %s19, %s20
      %s33 = sadd.s32 %s31, %s27
      %s34 = ssub.s32 %s32, %s33
      %p35 = scmp.eq.s32.totalorder %s34, 0
      %s37 = sadd.s32 %s36, 1
      %s38 = scalar_select %p35, %s36, %s37
      %p41 = pneg %p35
      %p42 = scmp.eq.s32.totalorder %s12, 1
      %p43 = por %p41, %p42
      %p44 = scmp.ne.s32.totalorder %s36, %s39
      %p45 = scmp.eq.s32.totalorder %s12, 0
      %p46 = por %p44, %p45
      %p47 = scmp.ne.s32.totalorder %s36, %s39
      %p48 = scmp.eq.s32.totalorder %s17, 1
      %p49 = por %p47, %p48
      %p50 = scmp.ne.s32.totalorder %s39, %s40
      %p51 = scmp.eq.s32.totalorder %s17, 0
      %p52 = por %p50, %p51
      %p53 = scmp.ne.s32.totalorder %s39, %s40
      %p54 = scmp.eq.s32.totalorder %s18, 1
      %p55 = por %p53, %p54
      %p57 = scmp.ne.s32.totalorder %s40, %s56
      %p58 = scmp.eq.s32.totalorder %s18, 0
      %p59 = por %p57, %p58
      %s60 = sadd.s32 %s19, %s20
      %s61 = sadd.s32 %s31, %s27
      %s62 = ssub.s32 %s60, %s61
      %p63 = scmp.eq.s32.totalorder %s62, 0
      %s65 = sadd.s32 %s64, 1
      %s66 = scalar_select %p63, %s64, %s65
      %p69 = pneg %p63
      %p70 = scmp.eq.s32.totalorder %s12, 1
      %p71 = por %p69, %p70
      %p72 = scmp.ne.s32.totalorder %s64, %s67
      %p73 = scmp.eq.s32.totalorder %s12, 0
      %p74 = por %p72, %p73
      %p75 = scmp.ne.s32.totalorder %s64, %s67
      %p76 = scmp.eq.s32.totalorder %s17, 1
      %p77 = por %p75, %p76
      %p78 = scmp.ne.s32.totalorder %s67, %s68
      %p79 = scmp.eq.s32.totalorder %s17, 0
      %p80 = por %p78, %p79
      %p81 = scmp.ne.s32.totalorder %s67, %s68
      %p82 = scmp.eq.s32.totalorder %s18, 1
      %p83 = por %p81, %p82
      %p85 = scmp.ne.s32.totalorder %s68, %s84
      %p86 = scmp.eq.s32.totalorder %s18, 0
      %p87 = por %p85, %p86
      %s88 = sadd.s32 %s19, %s20
      %s89 = sadd.s32 %s31, %s27
      %s90 = ssub.s32 %s88, %s89
      %p91 = scmp.eq.s32.totalorder %s90, 0
      %s93 = sadd.s32 %s92, 1
      %s94 = scalar_select %p91, %s92, %s93
      %p97 = pneg %p91
      %p98 = scmp.eq.s32.totalorder %s12, 1
      %p99 = por %p97, %p98
      %p100 = scmp.ne.s32.totalorder %s92, %s95
      %p101 = scmp.eq.s32.totalorder %s12, 0
      %p102 = por %p100, %p101
      %p103 = scmp.ne.s32.totalorder %s92, %s95
      %p104 = scmp.eq.s32.totalorder %s17, 1
      %p105 = por %p103, %p104
      %p106 = scmp.ne.s32.totalorder %s95, %s96
      %p107 = scmp.eq.s32.totalorder %s17, 0
      %p108 = por %p106, %p107
      %p109 = scmp.ne.s32.totalorder %s95, %s96
      %p110 = scmp.eq.s32.totalorder %s18, 1
      %p111 = por %p109, %p110
      %p113 = scmp.ne.s32.totalorder %s96, %s112
      %p114 = scmp.eq.s32.totalorder %s18, 0
      %p115 = por %p113, %p114
      %s116 = ssub.s32 %s19, %s31
      %p117 = scmp.eq.s32.totalorder %s116, 0
      %s119 = sadd.s32 %s118, 1
      %s120 = scalar_select %p117, %s118, %s119
      %p123 = pneg %p117
      %p124 = scmp.eq.s32.totalorder %s12, 1
      %p125 = por %p123, %p124
      %p126 = scmp.ne.s32.totalorder %s118, %s121
      %p127 = scmp.eq.s32.totalorder %s12, 0
      %p128 = por %p126, %p127
      %p129 = scmp.ne.s32.totalorder %s118, %s121
      %p130 = scmp.eq.s32.totalorder %s17, 1
      %p131 = por %p129, %p130
      %p132 = scmp.ne.s32.totalorder %s121, %s122
      %p133 = scmp.eq.s32.totalorder %s17, 0
      %p134 = por %p132, %p133
      %p135 = scmp.ne.s32.totalorder %s121, %s122
      %p136 = scmp.eq.s32.totalorder %s18, 1
      %p137 = por %p135, %p136
      %p139 = scmp.ne.s32.totalorder %s122, %s138
      %p140 = scmp.eq.s32.totalorder %s18, 0
      %p141 = por %p139, %p140
      %p142 = scmp.le.s32.totalorder 1, %s12
      %p143 = scmp.lt.s32.totalorder %s12, 3
      %p144 = pnand %p142, %p143
      %p145 = pneg %p144
      // Predicated region
      $region9: #{tpu_custom_call.1} parent=5 // pred_check
        _
      $region10: #{tpu_custom_call.1} parent=5 // pred_check_branch
        %147 = sbr.rel (%p144) target = $region12
      $region11: #{tpu_custom_call.1} parent=5 // pred_region
        %s148 = ssub.s32 %s12, 1
      $region12: #{tpu_custom_call.1} parent=5 // pred_fallthru
        _
      %p149 = scmp.lt.s32.totalorder %s12, 2
      // Predicated region
      $region13: #{tpu_custom_call.1} parent=5 // pred_check
        %p150 = pneg %p149
      $region14: #{tpu_custom_call.1} parent=5 // pred_check_branch
        %152 = sbr.rel (%p150) target = $region16
      $region15: #{tpu_custom_call.1} parent=5 // pred_region
        // Predicated region
        $region17: #{tpu_custom_call.1} parent=15 // pred_check
          %p153 = pneg %p46
        $region18: #{tpu_custom_call.1} parent=15 // pred_check_branch
          %155 = sbr.rel (%p153) target = $region20
        $region19: #{tpu_custom_call.1} parent=15 // pred_region
          %s156 = sadd.s32 %s19, %s20
          %s157 = smul.u32 64, %s156
          %p158 = scmp.lt.s32.totalorder %s157, 127
          %s159 = scalar_select %p158, %s157, 127
          %s160 = smul.addr %s159, 8
          %s161 = scalar_lea.vmem %s0, %s160
          %s162 = sadd.s32 %s19, %s20
          %s163 = smul.u32 64, %s162
        $region20: #{tpu_custom_call.1} parent=15 // pred_fallthru
          _
        // Predicated region
        $region21: #{tpu_custom_call.1} parent=15 // pred_check
          %p164 = pneg %p74
        $region22: #{tpu_custom_call.1} parent=15 // pred_check_branch
          %166 = sbr.rel (%p164) target = $region24
        $region23: #{tpu_custom_call.1} parent=15 // pred_region
          %s167 = sadd.s32 %s19, %s20
          %s168 = smul.u32 64, %s167
          %p169 = scmp.lt.s32.totalorder %s168, 127
          %s170 = scalar_select %p169, %s168, 127
          %s171 = smul.addr %s170, 8
          %s172 = scalar_lea.vmem %s1, %s171
          %s173 = sadd.s32 %s19, %s20
          %s174 = smul.u32 64, %s173
        $region24: #{tpu_custom_call.1} parent=15 // pred_fallthru
          _
        // Predicated region
        $region25: #{tpu_custom_call.1} parent=15 // pred_check
          %p175 = pneg %p102
        $region26: #{tpu_custom_call.1} parent=15 // pred_check_branch
          %177 = sbr.rel (%p175) target = $region28
        $region27: #{tpu_custom_call.1} parent=15 // pred_region
          %s178 = sadd.s32 %s19, %s20
          %s179 = smul.u32 64, %s178
          %p180 = scmp.lt.s32.totalorder %s179, 127
          %s181 = scalar_select %p180, %s179, 127
          %s182 = smul.addr %s181, 8
          %s183 = scalar_lea.vmem %s2, %s182
          %s184 = sadd.s32 %s19, %s20
          %s185 = smul.u32 64, %s184
        $region28: #{tpu_custom_call.1} parent=15 // pred_fallthru
          _
      $region16: #{tpu_custom_call.1} parent=5 // pred_fallthru
        _
      %p186 = scmp.le.s32.totalorder 1, %s12
      %p187 = scmp.lt.s32.totalorder %s12, 3
      %p188 = pnand %p186, %p187
      %p189 = pneg %p188
      // Predicated region
      $region29: #{tpu_custom_call.1} parent=5 // pred_check
        _
      $region30: #{tpu_custom_call.1} parent=5 // pred_check_branch
        %191 = sbr.rel (%p188) target = $region32
      $region31: #{tpu_custom_call.1} parent=5 // pred_region
        %s192 = ssub.s32 %s12, 1
        %s193 = sadd.s32 %s21, %s22
        %s194 = smul.u32 64, %s193
        %p195 = scmp.lt.s32.totalorder %s194, 127
        %s196 = scalar_select %p195, %s194, 127
        %s197 = smul.addr %s196, 8
        %s198 = scalar_lea.vmem %s0, %s197
        %p199 = pneg %p52
        %p200 = pneg %p49
        %s201 = sadd.s32 %s21, %s22
        %s202 = smul.u32 64, %s201
        %p203 = scmp.lt.s32.totalorder %s202, 127
        %s204 = scalar_select %p203, %s202, 127
        %s205 = smul.addr %s204, 8
        %s206 = scalar_lea.vmem %s1, %s205
        %p207 = pneg %p80
        %p208 = pneg %p77
        %s209 = sadd.s32 %s21, %s22
        %s210 = smul.u32 64, %s209
        %p211 = scmp.lt.s32.totalorder %s210, 127
        %s212 = scalar_select %p211, %s210, 127
        %s213 = smul.addr %s212, 8
        %s214 = scalar_lea.vmem %s2, %s213
        %p215 = pneg %p108
        %p216 = pneg %p105
        %p217 = pneg %p134
        %p218 = pneg %p131
        %s219 = sand.u32 %s121, 1
        %s220 = scalar_lea.sflag [#allocation5], %s219
        %s221 = sand.u32 %s121, 1
        %s222 = scalar_lea.vmem [#allocation4], %s221
        %s223 = sadd.s32 %s21, %s22
        %s224 = smul.u32 64, %s223
        %p225 = scmp.lt.s32.totalorder %s224, 127
        %s226 = scalar_select %p225, %s224, 127
        %s227 = smul.addr %s226, 8
        %s228 = scalar_lea.vmem %s0, %s227
        %s229 = sadd.s32 %s21, %s22
        %s230 = smul.u32 64, %s229
        %s231 = sadd.s32 %s21, %s22
        %s232 = smul.u32 64, %s231
        %p233 = scmp.lt.s32.totalorder %s232, 127
        %s234 = scalar_select %p233, %s232, 127
        %s235 = smul.addr %s234, 8
        %s236 = scalar_lea.vmem %s1, %s235
        %s237 = sadd.s32 %s21, %s22
        %s238 = smul.u32 64, %s237
        %s239 = sadd.s32 %s21, %s22
        %s240 = smul.u32 64, %s239
        %p241 = scmp.lt.s32.totalorder %s240, 127
        %s242 = scalar_select %p241, %s240, 127
        %s243 = smul.addr %s242, 8
        %s244 = scalar_lea.vmem %s2, %s243
        %s245 = sadd.s32 %s21, %s22
        %s246 = smul.u32 64, %s245
        %p247 = scmp.eq.s32.totalorder %s22, 0
        // Predicated region
        $region33: #{tpu_custom_call.1} parent=31 // pred_check
          %p248 = pneg %p247
        $region34: #{tpu_custom_call.1} parent=31 // pred_check_branch
          %250 = sbr.rel (%p248) target = $region36
        $region35: #{tpu_custom_call.1} parent=31 // pred_region
          %vm251 = vcmask 7168
          %252 = vst.msk [vmem:[#allocation2] sm:$0xff] %vm251, 0.0
          %253 = vst.msk [vmem:[#allocation2 + $0x8] sm:$0xff] %vm251, 0.0
          %254 = vst.msk [vmem:[#allocation2 + $0x10] sm:$0xff] %vm251, 0.0
          %255 = vst.msk [vmem:[#allocation2 + $0x18] sm:$0xff] %vm251, 0.0
          %256 = vst.msk [vmem:[#allocation2 + $0x20] sm:$0xff] %vm251, 0.0
          %257 = vst.msk [vmem:[#allocation2 + $0x28] sm:$0xff] %vm251, 0.0
          %258 = vst.msk [vmem:[#allocation2 + $0x30] sm:$0xff] %vm251, 0.0
          %259 = vst.msk [vmem:[#allocation2 + $0x38] sm:$0xff] %vm251, 0.0
          %260 = vst.msk [vmem:[#allocation2 + $0x40] sm:$0xff] %vm251, 0.0
          %261 = vst.msk [vmem:[#allocation2 + $0x48] sm:$0xff] %vm251, 0.0
          %262 = vst.msk [vmem:[#allocation2 + $0x50] sm:$0xff] %vm251, 0.0
          %263 = vst.msk [vmem:[#allocation2 + $0x58] sm:$0xff] %vm251, 0.0
          %264 = vst.msk [vmem:[#allocation2 + $0x60] sm:$0xff] %vm251, 0.0
          %265 = vst.msk [vmem:[#allocation2 + $0x68] sm:$0xff] %vm251, 0.0
          %266 = vst.msk [vmem:[#allocation2 + $0x70] sm:$0xff] %vm251, 0.0
          %267 = vst.msk [vmem:[#allocation2 + $0x78] sm:$0xff] %vm251, 0.0
          %268 = vst.msk [vmem:[#allocation2 + $0x80] sm:$0xff] %vm251, 0.0
          %269 = vst.msk [vmem:[#allocation2 + $0x88] sm:$0xff] %vm251, 0.0
          %270 = vst.msk [vmem:[#allocation2 + $0x90] sm:$0xff] %vm251, 0.0
          %271 = vst.msk [vmem:[#allocation2 + $0x98] sm:$0xff] %vm251, 0.0
          %272 = vst.msk [vmem:[#allocation2 + $0xa0] sm:$0xff] %vm251, 0.0
          %273 = vst.msk [vmem:[#allocation2 + $0xa8] sm:$0xff] %vm251, 0.0
          %274 = vst.msk [vmem:[#allocation2 + $0xb0] sm:$0xff] %vm251, 0.0
          %275 = vst.msk [vmem:[#allocation2 + $0xb8] sm:$0xff] %vm251, 0.0
          %276 = vst.msk [vmem:[#allocation2 + $0xc0] sm:$0xff] %vm251, 0.0
          %277 = vst.msk [vmem:[#allocation2 + $0xc8] sm:$0xff] %vm251, 0.0
          %278 = vst.msk [vmem:[#allocation2 + $0xd0] sm:$0xff] %vm251, 0.0
          %279 = vst.msk [vmem:[#allocation2 + $0xd8] sm:$0xff] %vm251, 0.0
          %280 = vst.msk [vmem:[#allocation2 + $0xe0] sm:$0xff] %vm251, 0.0
          %281 = vst.msk [vmem:[#allocation2 + $0xe8] sm:$0xff] %vm251, 0.0
          %282 = vst.msk [vmem:[#allocation2 + $0xf0] sm:$0xff] %vm251, 0.0
          %283 = vst.msk [vmem:[#allocation2 + $0xf8] sm:$0xff] %vm251, 0.0
          %284 = vst.msk [vmem:[#allocation2 + $0x100] sm:$0xff] %vm251, 0.0
          %285 = vst.msk [vmem:[#allocation2 + $0x108] sm:$0xff] %vm251, 0.0
          %286 = vst.msk [vmem:[#allocation2 + $0x110] sm:$0xff] %vm251, 0.0
          %287 = vst.msk [vmem:[#allocation2 + $0x118] sm:$0xff] %vm251, 0.0
          %288 = vst.msk [vmem:[#allocation2 + $0x120] sm:$0xff] %vm251, 0.0
          %289 = vst.msk [vmem:[#allocation2 + $0x128] sm:$0xff] %vm251, 0.0
          %290 = vst.msk [vmem:[#allocation2 + $0x130] sm:$0xff] %vm251, 0.0
          %291 = vst.msk [vmem:[#allocation2 + $0x138] sm:$0xff] %vm251, 0.0
          %292 = vst.msk [vmem:[#allocation2 + $0x140] sm:$0xff] %vm251, 0.0
          %293 = vst.msk [vmem:[#allocation2 + $0x148] sm:$0xff] %vm251, 0.0
          %294 = vst.msk [vmem:[#allocation2 + $0x150] sm:$0xff] %vm251, 0.0
          %295 = vst.msk [vmem:[#allocation2 + $0x158] sm:$0xff] %vm251, 0.0
          %296 = vst.msk [vmem:[#allocation2 + $0x160] sm:$0xff] %vm251, 0.0
          %297 = vst.msk [vmem:[#allocation2 + $0x168] sm:$0xff] %vm251, 0.0
          %298 = vst.msk [vmem:[#allocation2 + $0x170] sm:$0xff] %vm251, 0.0
          %299 = vst.msk [vmem:[#allocation2 + $0x178] sm:$0xff] %vm251, 0.0
          %300 = vst.msk [vmem:[#allocation2 + $0x180] sm:$0xff] %vm251, 0.0
          %301 = vst.msk [vmem:[#allocation2 + $0x188] sm:$0xff] %vm251, 0.0
          %302 = vst.msk [vmem:[#allocation2 + $0x190] sm:$0xff] %vm251, 0.0
          %303 = vst.msk [vmem:[#allocation2 + $0x198] sm:$0xff] %vm251, 0.0
          %304 = vst.msk [vmem:[#allocation2 + $0x1a0] sm:$0xff] %vm251, 0.0
          %305 = vst.msk [vmem:[#allocation2 + $0x1a8] sm:$0xff] %vm251, 0.0
          %306 = vst.msk [vmem:[#allocation2 + $0x1b0] sm:$0xff] %vm251, 0.0
          %307 = vst.msk [vmem:[#allocation2 + $0x1b8] sm:$0xff] %vm251, 0.0
          %308 = vst.msk [vmem:[#allocation2 + $0x1c0] sm:$0xff] %vm251, 0.0
          %309 = vst.msk [vmem:[#allocation2 + $0x1c8] sm:$0xff] %vm251, 0.0
          %310 = vst.msk [vmem:[#allocation2 + $0x1d0] sm:$0xff] %vm251, 0.0
          %311 = vst.msk [vmem:[#allocation2 + $0x1d8] sm:$0xff] %vm251, 0.0
          %312 = vst.msk [vmem:[#allocation2 + $0x1e0] sm:$0xff] %vm251, 0.0
          %313 = vst.msk [vmem:[#allocation2 + $0x1e8] sm:$0xff] %vm251, 0.0
          %314 = vst.msk [vmem:[#allocation2 + $0x1f0] sm:$0xff] %vm251, 0.0
          %315 = vst.msk [vmem:[#allocation2 + $0x1f8] sm:$0xff] %vm251, 0.0
          %316 = vst.msk [vmem:[#allocation3] sm:$0xff] %vm251, 0.0
          %317 = vst.msk [vmem:[#allocation3 + $0x8] sm:$0xff] %vm251, 0.0
          %318 = vst.msk [vmem:[#allocation3 + $0x10] sm:$0xff] %vm251, 0.0
          %319 = vst.msk [vmem:[#allocation3 + $0x18] sm:$0xff] %vm251, 0.0
          %320 = vst.msk [vmem:[#allocation3 + $0x20] sm:$0xff] %vm251, 0.0
          %321 = vst.msk [vmem:[#allocation3 + $0x28] sm:$0xff] %vm251, 0.0
          %322 = vst.msk [vmem:[#allocation3 + $0x30] sm:$0xff] %vm251, 0.0
          %323 = vst.msk [vmem:[#allocation3 + $0x38] sm:$0xff] %vm251, 0.0
          %324 = vst.msk [vmem:[#allocation3 + $0x40] sm:$0xff] %vm251, 0.0
          %325 = vst.msk [vmem:[#allocation3 + $0x48] sm:$0xff] %vm251, 0.0
          %326 = vst.msk [vmem:[#allocation3 + $0x50] sm:$0xff] %vm251, 0.0
          %327 = vst.msk [vmem:[#allocation3 + $0x58] sm:$0xff] %vm251, 0.0
          %328 = vst.msk [vmem:[#allocation3 + $0x60] sm:$0xff] %vm251, 0.0
          %329 = vst.msk [vmem:[#allocation3 + $0x68] sm:$0xff] %vm251, 0.0
          %330 = vst.msk [vmem:[#allocation3 + $0x70] sm:$0xff] %vm251, 0.0
          %331 = vst.msk [vmem:[#allocation3 + $0x78] sm:$0xff] %vm251, 0.0
          %332 = vst.msk [vmem:[#allocation3 + $0x80] sm:$0xff] %vm251, 0.0
          %333 = vst.msk [vmem:[#allocation3 + $0x88] sm:$0xff] %vm251, 0.0
          %334 = vst.msk [vmem:[#allocation3 + $0x90] sm:$0xff] %vm251, 0.0
          %335 = vst.msk [vmem:[#allocation3 + $0x98] sm:$0xff] %vm251, 0.0
          %336 = vst.msk [vmem:[#allocation3 + $0xa0] sm:$0xff] %vm251, 0.0
          %337 = vst.msk [vmem:[#allocation3 + $0xa8] sm:$0xff] %vm251, 0.0
          %338 = vst.msk [vmem:[#allocation3 + $0xb0] sm:$0xff] %vm251, 0.0
          %339 = vst.msk [vmem:[#allocation3 + $0xb8] sm:$0xff] %vm251, 0.0
          %340 = vst.msk [vmem:[#allocation3 + $0xc0] sm:$0xff] %vm251, 0.0
          %341 = vst.msk [vmem:[#allocation3 + $0xc8] sm:$0xff] %vm251, 0.0
          %342 = vst.msk [vmem:[#allocation3 + $0xd0] sm:$0xff] %vm251, 0.0
          %343 = vst.msk [vmem:[#allocation3 + $0xd8] sm:$0xff] %vm251, 0.0
          %344 = vst.msk [vmem:[#allocation3 + $0xe0] sm:$0xff] %vm251, 0.0
          %345 = vst.msk [vmem:[#allocation3 + $0xe8] sm:$0xff] %vm251, 0.0
          %346 = vst.msk [vmem:[#allocation3 + $0xf0] sm:$0xff] %vm251, 0.0
          %347 = vst.msk [vmem:[#allocation3 + $0xf8] sm:$0xff] %vm251, 0.0
          %348 = vst.msk [vmem:[#allocation3 + $0x100] sm:$0xff] %vm251, 0.0
          %349 = vst.msk [vmem:[#allocation3 + $0x108] sm:$0xff] %vm251, 0.0
          %350 = vst.msk [vmem:[#allocation3 + $0x110] sm:$0xff] %vm251, 0.0
          %351 = vst.msk [vmem:[#allocation3 + $0x118] sm:$0xff] %vm251, 0.0
          %352 = vst.msk [vmem:[#allocation3 + $0x120] sm:$0xff] %vm251, 0.0
          %353 = vst.msk [vmem:[#allocation3 + $0x128] sm:$0xff] %vm251, 0.0
          %354 = vst.msk [vmem:[#allocation3 + $0x130] sm:$0xff] %vm251, 0.0
          %355 = vst.msk [vmem:[#allocation3 + $0x138] sm:$0xff] %vm251, 0.0
          %356 = vst.msk [vmem:[#allocation3 + $0x140] sm:$0xff] %vm251, 0.0
          %357 = vst.msk [vmem:[#allocation3 + $0x148] sm:$0xff] %vm251, 0.0
          %358 = vst.msk [vmem:[#allocation3 + $0x150] sm:$0xff] %vm251, 0.0
          %359 = vst.msk [vmem:[#allocation3 + $0x158] sm:$0xff] %vm251, 0.0
          %360 = vst.msk [vmem:[#allocation3 + $0x160] sm:$0xff] %vm251, 0.0
          %361 = vst.msk [vmem:[#allocation3 + $0x168] sm:$0xff] %vm251, 0.0
          %362 = vst.msk [vmem:[#allocation3 + $0x170] sm:$0xff] %vm251, 0.0
          %363 = vst.msk [vmem:[#allocation3 + $0x178] sm:$0xff] %vm251, 0.0
          %364 = vst.msk [vmem:[#allocation3 + $0x180] sm:$0xff] %vm251, 0.0
          %365 = vst.msk [vmem:[#allocation3 + $0x188] sm:$0xff] %vm251, 0.0
          %366 = vst.msk [vmem:[#allocation3 + $0x190] sm:$0xff] %vm251, 0.0
          %367 = vst.msk [vmem:[#allocation3 + $0x198] sm:$0xff] %vm251, 0.0
          %368 = vst.msk [vmem:[#allocation3 + $0x1a0] sm:$0xff] %vm251, 0.0
          %369 = vst.msk [vmem:[#allocation3 + $0x1a8] sm:$0xff] %vm251, 0.0
          %370 = vst.msk [vmem:[#allocation3 + $0x1b0] sm:$0xff] %vm251, 0.0
          %371 = vst.msk [vmem:[#allocation3 + $0x1b8] sm:$0xff] %vm251, 0.0
          %372 = vst.msk [vmem:[#allocation3 + $0x1c0] sm:$0xff] %vm251, 0.0
          %373 = vst.msk [vmem:[#allocation3 + $0x1c8] sm:$0xff] %vm251, 0.0
          %374 = vst.msk [vmem:[#allocation3 + $0x1d0] sm:$0xff] %vm251, 0.0
          %375 = vst.msk [vmem:[#allocation3 + $0x1d8] sm:$0xff] %vm251, 0.0
          %376 = vst.msk [vmem:[#allocation3 + $0x1e0] sm:$0xff] %vm251, 0.0
          %377 = vst.msk [vmem:[#allocation3 + $0x1e8] sm:$0xff] %vm251, 0.0
          %378 = vst.msk [vmem:[#allocation3 + $0x1f0] sm:$0xff] %vm251, 0.0
          %379 = vst.msk [vmem:[#allocation3 + $0x1f8] sm:$0xff] %vm251, 0.0
        $region36: #{tpu_custom_call.1} parent=31 // pred_fallthru
          _
        %v380 = vld [vmem:[%s228] sm:$0xff]
        %v381 = vld [vmem:[%s228 + $0x8] sm:$0xff]
        %v382 = vld [vmem:[%s228 + $0x10] sm:$0xff]
        %v383 = vld [vmem:[%s228 + $0x18] sm:$0xff]
        %v384 = vld [vmem:[%s228 + $0x20] sm:$0xff]
        %v385 = vld [vmem:[%s228 + $0x28] sm:$0xff]
        %v386 = vld [vmem:[%s228 + $0x30] sm:$0xff]
        %v387 = vld [vmem:[%s228 + $0x38] sm:$0xff]
        %v388 = vld [vmem:[%s228 + $0x40] sm:$0xff]
        %v389 = vld [vmem:[%s228 + $0x48] sm:$0xff]
        %v390 = vld [vmem:[%s228 + $0x50] sm:$0xff]
        %v391 = vld [vmem:[%s228 + $0x58] sm:$0xff]
        %v392 = vld [vmem:[%s228 + $0x60] sm:$0xff]
        %v393 = vld [vmem:[%s228 + $0x68] sm:$0xff]
        %v394 = vld [vmem:[%s228 + $0x70] sm:$0xff]
        %v395 = vld [vmem:[%s228 + $0x78] sm:$0xff]
        %v396 = vld [vmem:[%s228 + $0x80] sm:$0xff]
        %v397 = vld [vmem:[%s228 + $0x88] sm:$0xff]
        %v398 = vld [vmem:[%s228 + $0x90] sm:$0xff]
        %v399 = vld [vmem:[%s228 + $0x98] sm:$0xff]
        %v400 = vld [vmem:[%s228 + $0xa0] sm:$0xff]
        %v401 = vld [vmem:[%s228 + $0xa8] sm:$0xff]
        %v402 = vld [vmem:[%s228 + $0xb0] sm:$0xff]
        %v403 = vld [vmem:[%s228 + $0xb8] sm:$0xff]
        %v404 = vld [vmem:[%s228 + $0xc0] sm:$0xff]
        %v405 = vld [vmem:[%s228 + $0xc8] sm:$0xff]
        %v406 = vld [vmem:[%s228 + $0xd0] sm:$0xff]
        %v407 = vld [vmem:[%s228 + $0xd8] sm:$0xff]
        %v408 = vld [vmem:[%s228 + $0xe0] sm:$0xff]
        %v409 = vld [vmem:[%s228 + $0xe8] sm:$0xff]
        %v410 = vld [vmem:[%s228 + $0xf0] sm:$0xff]
        %v411 = vld [vmem:[%s228 + $0xf8] sm:$0xff]
        %v412 = vld [vmem:[%s228 + $0x100] sm:$0xff]
        %v413 = vld [vmem:[%s228 + $0x108] sm:$0xff]
        %v414 = vld [vmem:[%s228 + $0x110] sm:$0xff]
        %v415 = vld [vmem:[%s228 + $0x118] sm:$0xff]
        %v416 = vld [vmem:[%s228 + $0x120] sm:$0xff]
        %v417 = vld [vmem:[%s228 + $0x128] sm:$0xff]
        %v418 = vld [vmem:[%s228 + $0x130] sm:$0xff]
        %v419 = vld [vmem:[%s228 + $0x138] sm:$0xff]
        %v420 = vld [vmem:[%s228 + $0x140] sm:$0xff]
        %v421 = vld [vmem:[%s228 + $0x148] sm:$0xff]
        %v422 = vld [vmem:[%s228 + $0x150] sm:$0xff]
        %v423 = vld [vmem:[%s228 + $0x158] sm:$0xff]
        %v424 = vld [vmem:[%s228 + $0x160] sm:$0xff]
        %v425 = vld [vmem:[%s228 + $0x168] sm:$0xff]
        %v426 = vld [vmem:[%s228 + $0x170] sm:$0xff]
        %v427 = vld [vmem:[%s228 + $0x178] sm:$0xff]
        %v428 = vld [vmem:[%s228 + $0x180] sm:$0xff]
        %v429 = vld [vmem:[%s228 + $0x188] sm:$0xff]
        %v430 = vld [vmem:[%s228 + $0x190] sm:$0xff]
        %v431 = vld [vmem:[%s228 + $0x198] sm:$0xff]
        %v432 = vld [vmem:[%s228 + $0x1a0] sm:$0xff]
        %v433 = vld [vmem:[%s228 + $0x1a8] sm:$0xff]
        %v434 = vld [vmem:[%s228 + $0x1b0] sm:$0xff]
        %v435 = vld [vmem:[%s228 + $0x1b8] sm:$0xff]
        %v436 = vld [vmem:[%s228 + $0x1c0] sm:$0xff]
        %v437 = vld [vmem:[%s228 + $0x1c8] sm:$0xff]
        %v438 = vld [vmem:[%s228 + $0x1d0] sm:$0xff]
        %v439 = vld [vmem:[%s228 + $0x1d8] sm:$0xff]
        %v440 = vld [vmem:[%s228 + $0x1e0] sm:$0xff]
        %v441 = vld [vmem:[%s228 + $0x1e8] sm:$0xff]
        %v442 = vld [vmem:[%s228 + $0x1f0] sm:$0xff]
        %v443 = vld [vmem:[%s228 + $0x1f8] sm:$0xff]
        %v444 = vld [vmem:[%s236] sm:$0xff]
        %v445 = vld [vmem:[%s236 + $0x8] sm:$0xff]
        %v446 = vld [vmem:[%s236 + $0x10] sm:$0xff]
        %v447 = vld [vmem:[%s236 + $0x18] sm:$0xff]
        %v448 = vld [vmem:[%s236 + $0x20] sm:$0xff]
        %v449 = vld [vmem:[%s236 + $0x28] sm:$0xff]
        %v450 = vld [vmem:[%s236 + $0x30] sm:$0xff]
        %v451 = vld [vmem:[%s236 + $0x38] sm:$0xff]
        %v452 = vld [vmem:[%s236 + $0x40] sm:$0xff]
        %v453 = vld [vmem:[%s236 + $0x48] sm:$0xff]
        %v454 = vld [vmem:[%s236 + $0x50] sm:$0xff]
        %v455 = vld [vmem:[%s236 + $0x58] sm:$0xff]
        %v456 = vld [vmem:[%s236 + $0x60] sm:$0xff]
        %v457 = vld [vmem:[%s236 + $0x68] sm:$0xff]
        %v458 = vld [vmem:[%s236 + $0x70] sm:$0xff]
        %v459 = vld [vmem:[%s236 + $0x78] sm:$0xff]
        %v460 = vld [vmem:[%s236 + $0x80] sm:$0xff]
        %v461 = vld [vmem:[%s236 + $0x88] sm:$0xff]
        %v462 = vld [vmem:[%s236 + $0x90] sm:$0xff]
        %v463 = vld [vmem:[%s236 + $0x98] sm:$0xff]
        %v464 = vld [vmem:[%s236 + $0xa0] sm:$0xff]
        %v465 = vld [vmem:[%s236 + $0xa8] sm:$0xff]
        %v466 = vld [vmem:[%s236 + $0xb0] sm:$0xff]
        %v467 = vld [vmem:[%s236 + $0xb8] sm:$0xff]
        %v468 = vld [vmem:[%s236 + $0xc0] sm:$0xff]
        %v469 = vld [vmem:[%s236 + $0xc8] sm:$0xff]
        %v470 = vld [vmem:[%s236 + $0xd0] sm:$0xff]
        %v471 = vld [vmem:[%s236 + $0xd8] sm:$0xff]
        %v472 = vld [vmem:[%s236 + $0xe0] sm:$0xff]
        %v473 = vld [vmem:[%s236 + $0xe8] sm:$0xff]
        %v474 = vld [vmem:[%s236 + $0xf0] sm:$0xff]
        %v475 = vld [vmem:[%s236 + $0xf8] sm:$0xff]
        %v476 = vld [vmem:[%s236 + $0x100] sm:$0xff]
        %v477 = vld [vmem:[%s236 + $0x108] sm:$0xff]
        %v478 = vld [vmem:[%s236 + $0x110] sm:$0xff]
        %v479 = vld [vmem:[%s236 + $0x118] sm:$0xff]
        %v480 = vld [vmem:[%s236 + $0x120] sm:$0xff]
        %v481 = vld [vmem:[%s236 + $0x128] sm:$0xff]
        %v482 = vld [vmem:[%s236 + $0x130] sm:$0xff]
        %v483 = vld [vmem:[%s236 + $0x138] sm:$0xff]
        %v484 = vld [vmem:[%s236 + $0x140] sm:$0xff]
        %v485 = vld [vmem:[%s236 + $0x148] sm:$0xff]
        %v486 = vld [vmem:[%s236 + $0x150] sm:$0xff]
        %v487 = vld [vmem:[%s236 + $0x158] sm:$0xff]
        %v488 = vld [vmem:[%s236 + $0x160] sm:$0xff]
        %v489 = vld [vmem:[%s236 + $0x168] sm:$0xff]
        %v490 = vld [vmem:[%s236 + $0x170] sm:$0xff]
        %v491 = vld [vmem:[%s236 + $0x178] sm:$0xff]
        %v492 = vld [vmem:[%s236 + $0x180] sm:$0xff]
        %v493 = vld [vmem:[%s236 + $0x188] sm:$0xff]
        %v494 = vld [vmem:[%s236 + $0x190] sm:$0xff]
        %v495 = vld [vmem:[%s236 + $0x198] sm:$0xff]
        %v496 = vld [vmem:[%s236 + $0x1a0] sm:$0xff]
        %v497 = vld [vmem:[%s236 + $0x1a8] sm:$0xff]
        %v498 = vld [vmem:[%s236 + $0x1b0] sm:$0xff]
        %v499 = vld [vmem:[%s236 + $0x1b8] sm:$0xff]
        %v500 = vld [vmem:[%s236 + $0x1c0] sm:$0xff]
        %v501 = vld [vmem:[%s236 + $0x1c8] sm:$0xff]
        %v502 = vld [vmem:[%s236 + $0x1d0] sm:$0xff]
        %v503 = vld [vmem:[%s236 + $0x1d8] sm:$0xff]
        %v504 = vld [vmem:[%s236 + $0x1e0] sm:$0xff]
        %v505 = vld [vmem:[%s236 + $0x1e8] sm:$0xff]
        %v506 = vld [vmem:[%s236 + $0x1f0] sm:$0xff]
        %v507 = vld [vmem:[%s236 + $0x1f8] sm:$0xff]
        %v508 = vld [vmem:[%s244] sm:$0xff]
        %v509 = vld [vmem:[%s244 + $0x8] sm:$0xff]
        %v510 = vld [vmem:[%s244 + $0x10] sm:$0xff]
        %v511 = vld [vmem:[%s244 + $0x18] sm:$0xff]
        %v512 = vld [vmem:[%s244 + $0x20] sm:$0xff]
        %v513 = vld [vmem:[%s244 + $0x28] sm:$0xff]
        %v514 = vld [vmem:[%s244 + $0x30] sm:$0xff]
        %v515 = vld [vmem:[%s244 + $0x38] sm:$0xff]
        %v516 = vld [vmem:[%s244 + $0x40] sm:$0xff]
        %v517 = vld [vmem:[%s244 + $0x48] sm:$0xff]
        %v518 = vld [vmem:[%s244 + $0x50] sm:$0xff]
        %v519 = vld [vmem:[%s244 + $0x58] sm:$0xff]
        %v520 = vld [vmem:[%s244 + $0x60] sm:$0xff]
        %v521 = vld [vmem:[%s244 + $0x68] sm:$0xff]
        %v522 = vld [vmem:[%s244 + $0x70] sm:$0xff]
        %v523 = vld [vmem:[%s244 + $0x78] sm:$0xff]
        %v524 = vld [vmem:[%s244 + $0x80] sm:$0xff]
        %v525 = vld [vmem:[%s244 + $0x88] sm:$0xff]
        %v526 = vld [vmem:[%s244 + $0x90] sm:$0xff]
        %v527 = vld [vmem:[%s244 + $0x98] sm:$0xff]
        %v528 = vld [vmem:[%s244 + $0xa0] sm:$0xff]
        %v529 = vld [vmem:[%s244 + $0xa8] sm:$0xff]
        %v530 = vld [vmem:[%s244 + $0xb0] sm:$0xff]
        %v531 = vld [vmem:[%s244 + $0xb8] sm:$0xff]
        %v532 = vld [vmem:[%s244 + $0xc0] sm:$0xff]
        %v533 = vld [vmem:[%s244 + $0xc8] sm:$0xff]
        %v534 = vld [vmem:[%s244 + $0xd0] sm:$0xff]
        %v535 = vld [vmem:[%s244 + $0xd8] sm:$0xff]
        %v536 = vld [vmem:[%s244 + $0xe0] sm:$0xff]
        %v537 = vld [vmem:[%s244 + $0xe8] sm:$0xff]
        %v538 = vld [vmem:[%s244 + $0xf0] sm:$0xff]
        %v539 = vld [vmem:[%s244 + $0xf8] sm:$0xff]
        %v540 = vld [vmem:[%s244 + $0x100] sm:$0xff]
        %v541 = vld [vmem:[%s244 + $0x108] sm:$0xff]
        %v542 = vld [vmem:[%s244 + $0x110] sm:$0xff]
        %v543 = vld [vmem:[%s244 + $0x118] sm:$0xff]
        %v544 = vld [vmem:[%s244 + $0x120] sm:$0xff]
        %v545 = vld [vmem:[%s244 + $0x128] sm:$0xff]
        %v546 = vld [vmem:[%s244 + $0x130] sm:$0xff]
        %v547 = vld [vmem:[%s244 + $0x138] sm:$0xff]
        %v548 = vld [vmem:[%s244 + $0x140] sm:$0xff]
        %v549 = vld [vmem:[%s244 + $0x148] sm:$0xff]
        %v550 = vld [vmem:[%s244 + $0x150] sm:$0xff]
        %v551 = vld [vmem:[%s244 + $0x158] sm:$0xff]
        %v552 = vld [vmem:[%s244 + $0x160] sm:$0xff]
        %v553 = vld [vmem:[%s244 + $0x168] sm:$0xff]
        %v554 = vld [vmem:[%s244 + $0x170] sm:$0xff]
        %v555 = vld [vmem:[%s244 + $0x178] sm:$0xff]
        %v556 = vld [vmem:[%s244 + $0x180] sm:$0xff]
        %v557 = vld [vmem:[%s244 + $0x188] sm:$0xff]
        %v558 = vld [vmem:[%s244 + $0x190] sm:$0xff]
        %v559 = vld [vmem:[%s244 + $0x198] sm:$0xff]
        %v560 = vld [vmem:[%s244 + $0x1a0] sm:$0xff]
        %v561 = vld [vmem:[%s244 + $0x1a8] sm:$0xff]
        %v562 = vld [vmem:[%s244 + $0x1b0] sm:$0xff]
        %v563 = vld [vmem:[%s244 + $0x1b8] sm:$0xff]
        %v564 = vld [vmem:[%s244 + $0x1c0] sm:$0xff]
        %v565 = vld [vmem:[%s244 + $0x1c8] sm:$0xff]
        %v566 = vld [vmem:[%s244 + $0x1d0] sm:$0xff]
        %v567 = vld [vmem:[%s244 + $0x1d8] sm:$0xff]
        %v568 = vld [vmem:[%s244 + $0x1e0] sm:$0xff]
        %v569 = vld [vmem:[%s244 + $0x1e8] sm:$0xff]
        %v570 = vld [vmem:[%s244 + $0x1f0] sm:$0xff]
        %v571 = vld [vmem:[%s244 + $0x1f8] sm:$0xff]
        %vm572 = vcmask 56320
        %v573 = vsel %vm572, %v380, -inf
        %574 = vmax.xlane.f32.xlu0 %v573
        %v575 = vpop.xlane.xlu0 %574
        %v576 = vsel %vm572, %v381, -inf
        %577 = vmax.xlane.f32.xlu0 %v576
        %v578 = vpop.xlane.xlu0 %577
        %v579 = vsel %vm572, %v382, -inf
        %580 = vmax.xlane.f32.xlu0 %v579
        %v581 = vpop.xlane.xlu0 %580
        %v582 = vsel %vm572, %v383, -inf
        %583 = vmax.xlane.f32.xlu0 %v582
        %v584 = vpop.xlane.xlu0 %583
        %v585 = vsel %vm572, %v384, -inf
        %586 = vmax.xlane.f32.xlu0 %v585
        %v587 = vpop.xlane.xlu0 %586
        %v588 = vsel %vm572, %v385, -inf
        %589 = vmax.xlane.f32.xlu0 %v588
        %v590 = vpop.xlane.xlu0 %589
        %v591 = vsel %vm572, %v386, -inf
        %592 = vmax.xlane.f32.xlu0 %v591
        %v593 = vpop.xlane.xlu0 %592
        %v594 = vsel %vm572, %v387, -inf
        %595 = vmax.xlane.f32.xlu0 %v594
        %v596 = vpop.xlane.xlu0 %595
        %v597 = vsel %vm572, %v388, -inf
        %598 = vmax.xlane.f32.xlu0 %v597
        %v599 = vpop.xlane.xlu0 %598
        %v600 = vsel %vm572, %v389, -inf
        %601 = vmax.xlane.f32.xlu0 %v600
        %v602 = vpop.xlane.xlu0 %601
        %v603 = vsel %vm572, %v390, -inf
        %604 = vmax.xlane.f32.xlu0 %v603
        %v605 = vpop.xlane.xlu0 %604
        %v606 = vsel %vm572, %v391, -inf
        %607 = vmax.xlane.f32.xlu0 %v606
        %v608 = vpop.xlane.xlu0 %607
        %v609 = vsel %vm572, %v392, -inf
        %610 = vmax.xlane.f32.xlu0 %v609
        %v611 = vpop.xlane.xlu0 %610
        %v612 = vsel %vm572, %v393, -inf
        %613 = vmax.xlane.f32.xlu0 %v612
        %v614 = vpop.xlane.xlu0 %613
        %v615 = vsel %vm572, %v394, -inf
        %616 = vmax.xlane.f32.xlu0 %v615
        %v617 = vpop.xlane.xlu0 %616
        %v618 = vsel %vm572, %v395, -inf
        %619 = vmax.xlane.f32.xlu0 %v618
        %v620 = vpop.xlane.xlu0 %619
        %v621 = vsel %vm572, %v396, -inf
        %622 = vmax.xlane.f32.xlu0 %v621
        %v623 = vpop.xlane.xlu0 %622
        %v624 = vsel %vm572, %v397, -inf
        %625 = vmax.xlane.f32.xlu0 %v624
        %v626 = vpop.xlane.xlu0 %625
        %v627 = vsel %vm572, %v398, -inf
        %628 = vmax.xlane.f32.xlu0 %v627
        %v629 = vpop.xlane.xlu0 %628
        %v630 = vsel %vm572, %v399, -inf
        %631 = vmax.xlane.f32.xlu0 %v630
        %v632 = vpop.xlane.xlu0 %631
        %v633 = vsel %vm572, %v400, -inf
        %634 = vmax.xlane.f32.xlu0 %v633
        %v635 = vpop.xlane.xlu0 %634
        %v636 = vsel %vm572, %v401, -inf
        %637 = vmax.xlane.f32.xlu0 %v636
        %v638 = vpop.xlane.xlu0 %637
        %v639 = vsel %vm572, %v402, -inf
        %640 = vmax.xlane.f32.xlu0 %v639
        %v641 = vpop.xlane.xlu0 %640
        %v642 = vsel %vm572, %v403, -inf
        %643 = vmax.xlane.f32.xlu0 %v642
        %v644 = vpop.xlane.xlu0 %643
        %v645 = vsel %vm572, %v404, -inf
        %646 = vmax.xlane.f32.xlu0 %v645
        %v647 = vpop.xlane.xlu0 %646
        %v648 = vsel %vm572, %v405, -inf
        %649 = vmax.xlane.f32.xlu0 %v648
        %v650 = vpop.xlane.xlu0 %649
        %v651 = vsel %vm572, %v406, -inf
        %652 = vmax.xlane.f32.xlu0 %v651
        %v653 = vpop.xlane.xlu0 %652
        %v654 = vsel %vm572, %v407, -inf
        %655 = vmax.xlane.f32.xlu0 %v654
        %v656 = vpop.xlane.xlu0 %655
        %v657 = vsel %vm572, %v408, -inf
        %658 = vmax.xlane.f32.xlu0 %v657
        %v659 = vpop.xlane.xlu0 %658
        %v660 = vsel %vm572, %v409, -inf
        %661 = vmax.xlane.f32.xlu0 %v660
        %v662 = vpop.xlane.xlu0 %661
        %v663 = vsel %vm572, %v410, -inf
        %664 = vmax.xlane.f32.xlu0 %v663
        %v665 = vpop.xlane.xlu0 %664
        %v666 = vsel %vm572, %v411, -inf
        %667 = vmax.xlane.f32.xlu0 %v666
        %v668 = vpop.xlane.xlu0 %667
        %v669 = vsel %vm572, %v412, -inf
        %670 = vmax.xlane.f32.xlu0 %v669
        %v671 = vpop.xlane.xlu0 %670
        %v672 = vsel %vm572, %v413, -inf
        %673 = vmax.xlane.f32.xlu0 %v672
        %v674 = vpop.xlane.xlu0 %673
        %v675 = vsel %vm572, %v414, -inf
        %676 = vmax.xlane.f32.xlu0 %v675
        %v677 = vpop.xlane.xlu0 %676
        %v678 = vsel %vm572, %v415, -inf
        %679 = vmax.xlane.f32.xlu0 %v678
        %v680 = vpop.xlane.xlu0 %679
        %v681 = vsel %vm572, %v416, -inf
        %682 = vmax.xlane.f32.xlu0 %v681
        %v683 = vpop.xlane.xlu0 %682
        %v684 = vsel %vm572, %v417, -inf
        %685 = vmax.xlane.f32.xlu0 %v684
        %v686 = vpop.xlane.xlu0 %685
        %v687 = vsel %vm572, %v418, -inf
        %688 = vmax.xlane.f32.xlu0 %v687
        %v689 = vpop.xlane.xlu0 %688
        %v690 = vsel %vm572, %v419, -inf
        %691 = vmax.xlane.f32.xlu0 %v690
        %v692 = vpop.xlane.xlu0 %691
        %v693 = vsel %vm572, %v420, -inf
        %694 = vmax.xlane.f32.xlu0 %v693
        %v695 = vpop.xlane.xlu0 %694
        %v696 = vsel %vm572, %v421, -inf
        %697 = vmax.xlane.f32.xlu0 %v696
        %v698 = vpop.xlane.xlu0 %697
        %v699 = vsel %vm572, %v422, -inf
        %700 = vmax.xlane.f32.xlu0 %v699
        %v701 = vpop.xlane.xlu0 %700
        %v702 = vsel %vm572, %v423, -inf
        %703 = vmax.xlane.f32.xlu0 %v702
        %v704 = vpop.xlane.xlu0 %703
        %v705 = vsel %vm572, %v424, -inf
        %706 = vmax.xlane.f32.xlu0 %v705
        %v707 = vpop.xlane.xlu0 %706
        %v708 = vsel %vm572, %v425, -inf
        %709 = vmax.xlane.f32.xlu0 %v708
        %v710 = vpop.xlane.xlu0 %709
        %v711 = vsel %vm572, %v426, -inf
        %712 = vmax.xlane.f32.xlu0 %v711
        %v713 = vpop.xlane.xlu0 %712
        %v714 = vsel %vm572, %v427, -inf
        %715 = vmax.xlane.f32.xlu0 %v714
        %v716 = vpop.xlane.xlu0 %715
        %v717 = vsel %vm572, %v428, -inf
        %718 = vmax.xlane.f32.xlu0 %v717
        %v719 = vpop.xlane.xlu0 %718
        %v720 = vsel %vm572, %v429, -inf
        %721 = vmax.xlane.f32.xlu0 %v720
        %v722 = vpop.xlane.xlu0 %721
        %v723 = vsel %vm572, %v430, -inf
        %724 = vmax.xlane.f32.xlu0 %v723
        %v725 = vpop.xlane.xlu0 %724
        %v726 = vsel %vm572, %v431, -inf
        %727 = vmax.xlane.f32.xlu0 %v726
        %v728 = vpop.xlane.xlu0 %727
        %v729 = vsel %vm572, %v432, -inf
        %730 = vmax.xlane.f32.xlu0 %v729
        %v731 = vpop.xlane.xlu0 %730
        %v732 = vsel %vm572, %v433, -inf
        %733 = vmax.xlane.f32.xlu0 %v732
        %v734 = vpop.xlane.xlu0 %733
        %v735 = vsel %vm572, %v434, -inf
        %736 = vmax.xlane.f32.xlu0 %v735
        %v737 = vpop.xlane.xlu0 %736
        %v738 = vsel %vm572, %v435, -inf
        %739 = vmax.xlane.f32.xlu0 %v738
        %v740 = vpop.xlane.xlu0 %739
        %v741 = vsel %vm572, %v436, -inf
        %742 = vmax.xlane.f32.xlu0 %v741
        %v743 = vpop.xlane.xlu0 %742
        %v744 = vsel %vm572, %v437, -inf
        %745 = vmax.xlane.f32.xlu0 %v744
        %v746 = vpop.xlane.xlu0 %745
        %v747 = vsel %vm572, %v438, -inf
        %748 = vmax.xlane.f32.xlu0 %v747
        %v749 = vpop.xlane.xlu0 %748
        %v750 = vsel %vm572, %v439, -inf
        %751 = vmax.xlane.f32.xlu0 %v750
        %v752 = vpop.xlane.xlu0 %751
        %v753 = vsel %vm572, %v440, -inf
        %754 = vmax.xlane.f32.xlu0 %v753
        %v755 = vpop.xlane.xlu0 %754
        %v756 = vsel %vm572, %v441, -inf
        %757 = vmax.xlane.f32.xlu0 %v756
        %v758 = vpop.xlane.xlu0 %757
        %v759 = vsel %vm572, %v442, -inf
        %760 = vmax.xlane.f32.xlu0 %v759
        %v761 = vpop.xlane.xlu0 %760
        %v762 = vsel %vm572, %v443, -inf
        %763 = vmax.xlane.f32.xlu0 %v762
        %v764 = vpop.xlane.xlu0 %763
        %v765 = vsub.f32 %v380, %v575
        %v766 = vsub.f32 %v381, %v578
        %v767 = vsub.f32 %v382, %v581
        %v768 = vsub.f32 %v383, %v584
        %v769 = vsub.f32 %v384, %v587
        %v770 = vsub.f32 %v385, %v590
        %v771 = vsub.f32 %v386, %v593
        %v772 = vsub.f32 %v387, %v596
        %v773 = vsub.f32 %v388, %v599
        %v774 = vsub.f32 %v389, %v602
        %v775 = vsub.f32 %v390, %v605
        %v776 = vsub.f32 %v391, %v608
        %v777 = vsub.f32 %v392, %v611
        %v778 = vsub.f32 %v393, %v614
        %v779 = vsub.f32 %v394, %v617
        %v780 = vsub.f32 %v395, %v620
        %v781 = vsub.f32 %v396, %v623
        %v782 = vsub.f32 %v397, %v626
        %v783 = vsub.f32 %v398, %v629
        %v784 = vsub.f32 %v399, %v632
        %v785 = vsub.f32 %v400, %v635
        %v786 = vsub.f32 %v401, %v638
        %v787 = vsub.f32 %v402, %v641
        %v788 = vsub.f32 %v403, %v644
        %v789 = vsub.f32 %v404, %v647
        %v790 = vsub.f32 %v405, %v650
        %v791 = vsub.f32 %v406, %v653
        %v792 = vsub.f32 %v407, %v656
        %v793 = vsub.f32 %v408, %v659
        %v794 = vsub.f32 %v409, %v662
        %v795 = vsub.f32 %v410, %v665
        %v796 = vsub.f32 %v411, %v668
        %v797 = vsub.f32 %v412, %v671
        %v798 = vsub.f32 %v413, %v674
        %v799 = vsub.f32 %v414, %v677
        %v800 = vsub.f32 %v415, %v680
        %v801 = vsub.f32 %v416, %v683
        %v802 = vsub.f32 %v417, %v686
        %v803 = vsub.f32 %v418, %v689
        %v804 = vsub.f32 %v419, %v692
        %v805 = vsub.f32 %v420, %v695
        %v806 = vsub.f32 %v421, %v698
        %v807 = vsub.f32 %v422, %v701
        %v808 = vsub.f32 %v423, %v704
        %v809 = vsub.f32 %v424, %v707
        %v810 = vsub.f32 %v425, %v710
        %v811 = vsub.f32 %v426, %v713
        %v812 = vsub.f32 %v427, %v716
        %v813 = vsub.f32 %v428, %v719
        %v814 = vsub.f32 %v429, %v722
        %v815 = vsub.f32 %v430, %v725
        %v816 = vsub.f32 %v431, %v728
        %v817 = vsub.f32 %v432, %v731
        %v818 = vsub.f32 %v433, %v734
        %v819 = vsub.f32 %v434, %v737
        %v820 = vsub.f32 %v435, %v740
        %v821 = vsub.f32 %v436, %v743
        %v822 = vsub.f32 %v437, %v746
        %v823 = vsub.f32 %v438, %v749
        %v824 = vsub.f32 %v439, %v752
        %v825 = vsub.f32 %v440, %v755
        %v826 = vsub.f32 %v441, %v758
        %v827 = vsub.f32 %v442, %v761
        %v828 = vsub.f32 %v443, %v764
        %v829 = vmul.f32 %v765, 1.442695
        %v830 = vpow.pop %v829
        %v831 = vmul.f32 %v766, 1.442695
        %v832 = vpow.pop %v831
        %v833 = vmul.f32 %v767, 1.442695
        %v834 = vpow.pop %v833
        %v835 = vmul.f32 %v768, 1.442695
        %v836 = vpow.pop %v835
        %v837 = vmul.f32 %v769, 1.442695
        %v838 = vpow.pop %v837
        %v839 = vmul.f32 %v770, 1.442695
        %v840 = vpow.pop %v839
        %v841 = vmul.f32 %v771, 1.442695
        %v842 = vpow.pop %v841
        %v843 = vmul.f32 %v772, 1.442695
        %v844 = vpow.pop %v843
        %v845 = vmul.f32 %v773, 1.442695
        %v846 = vpow.pop %v845
        %v847 = vmul.f32 %v774, 1.442695
        %v848 = vpow.pop %v847
        %v849 = vmul.f32 %v775, 1.442695
        %v850 = vpow.pop %v849
        %v851 = vmul.f32 %v776, 1.442695
        %v852 = vpow.pop %v851
        %v853 = vmul.f32 %v777, 1.442695
        %v854 = vpow.pop %v853
        %v855 = vmul.f32 %v778, 1.442695
        %v856 = vpow.pop %v855
        %v857 = vmul.f32 %v779, 1.442695
        %v858 = vpow.pop %v857
        %v859 = vmul.f32 %v780, 1.442695
        %v860 = vpow.pop %v859
        %v861 = vmul.f32 %v781, 1.442695
        %v862 = vpow.pop %v861
        %v863 = vmul.f32 %v782, 1.442695
        %v864 = vpow.pop %v863
        %v865 = vmul.f32 %v783, 1.442695
        %v866 = vpow.pop %v865
        %v867 = vmul.f32 %v784, 1.442695
        %v868 = vpow.pop %v867
        %v869 = vmul.f32 %v785, 1.442695
        %v870 = vpow.pop %v869
        %v871 = vmul.f32 %v786, 1.442695
        %v872 = vpow.pop %v871
        %v873 = vmul.f32 %v787, 1.442695
        %v874 = vpow.pop %v873
        %v875 = vmul.f32 %v788, 1.442695
        %v876 = vpow.pop %v875
        %v877 = vmul.f32 %v789, 1.442695
        %v878 = vpow.pop %v877
        %v879 = vmul.f32 %v790, 1.442695
        %v880 = vpow.pop %v879
        %v881 = vmul.f32 %v791, 1.442695
        %v882 = vpow.pop %v881
        %v883 = vmul.f32 %v792, 1.442695
        %v884 = vpow.pop %v883
        %v885 = vmul.f32 %v793, 1.442695
        %v886 = vpow.pop %v885
        %v887 = vmul.f32 %v794, 1.442695
        %v888 = vpow.pop %v887
        %v889 = vmul.f32 %v795, 1.442695
        %v890 = vpow.pop %v889
        %v891 = vmul.f32 %v796, 1.442695
        %v892 = vpow.pop %v891
        %v893 = vmul.f32 %v797, 1.442695
        %v894 = vpow.pop %v893
        %v895 = vmul.f32 %v798, 1.442695
        %v896 = vpow.pop %v895
        %v897 = vmul.f32 %v799, 1.442695
        %v898 = vpow.pop %v897
        %v899 = vmul.f32 %v800, 1.442695
        %v900 = vpow.pop %v899
        %v901 = vmul.f32 %v801, 1.442695
        %v902 = vpow.pop %v901
        %v903 = vmul.f32 %v802, 1.442695
        %v904 = vpow.pop %v903
        %v905 = vmul.f32 %v803, 1.442695
        %v906 = vpow.pop %v905
        %v907 = vmul.f32 %v804, 1.442695
        %v908 = vpow.pop %v907
        %v909 = vmul.f32 %v805, 1.442695
        %v910 = vpow.pop %v909
        %v911 = vmul.f32 %v806, 1.442695
        %v912 = vpow.pop %v911
        %v913 = vmul.f32 %v807, 1.442695
        %v914 = vpow.pop %v913
        %v915 = vmul.f32 %v808, 1.442695
        %v916 = vpow.pop %v915
        %v917 = vmul.f32 %v809, 1.442695
        %v918 = vpow.pop %v917
        %v919 = vmul.f32 %v810, 1.442695
        %v920 = vpow.pop %v919
        %v921 = vmul.f32 %v811, 1.442695
        %v922 = vpow.pop %v921
        %v923 = vmul.f32 %v812, 1.442695
        %v924 = vpow.pop %v923
        %v925 = vmul.f32 %v813, 1.442695
        %v926 = vpow.pop %v925
        %v927 = vmul.f32 %v814, 1.442695
        %v928 = vpow.pop %v927
        %v929 = vmul.f32 %v815, 1.442695
        %v930 = vpow.pop %v929
        %v931 = vmul.f32 %v816, 1.442695
        %v932 = vpow.pop %v931
        %v933 = vmul.f32 %v817, 1.442695
        %v934 = vpow.pop %v933
        %v935 = vmul.f32 %v818, 1.442695
        %v936 = vpow.pop %v935
        %v937 = vmul.f32 %v819, 1.442695
        %v938 = vpow.pop %v937
        %v939 = vmul.f32 %v820, 1.442695
        %v940 = vpow.pop %v939
        %v941 = vmul.f32 %v821, 1.442695
        %v942 = vpow.pop %v941
        %v943 = vmul.f32 %v822, 1.442695
        %v944 = vpow.pop %v943
        %v945 = vmul.f32 %v823, 1.442695
        %v946 = vpow.pop %v945
        %v947 = vmul.f32 %v824, 1.442695
        %v948 = vpow.pop %v947
        %v949 = vmul.f32 %v825, 1.442695
        %v950 = vpow.pop %v949
        %v951 = vmul.f32 %v826, 1.442695
        %v952 = vpow.pop %v951
        %v953 = vmul.f32 %v827, 1.442695
        %v954 = vpow.pop %v953
        %v955 = vmul.f32 %v828, 1.442695
        %v956 = vpow.pop %v955
        %v957 = vsel %vm572, %v830, 0.0
        %958 = vadd.xlane.f32.xlu0 %v957
        %v959 = vpop.xlane.xlu0 %958
        %v960 = vsel %vm572, %v832, 0.0
        %961 = vadd.xlane.f32.xlu0 %v960
        %v962 = vpop.xlane.xlu0 %961
        %v963 = vsel %vm572, %v834, 0.0
        %964 = vadd.xlane.f32.xlu0 %v963
        %v965 = vpop.xlane.xlu0 %964
        %v966 = vsel %vm572, %v836, 0.0
        %967 = vadd.xlane.f32.xlu0 %v966
        %v968 = vpop.xlane.xlu0 %967
        %v969 = vsel %vm572, %v838, 0.0
        %970 = vadd.xlane.f32.xlu0 %v969
        %v971 = vpop.xlane.xlu0 %970
        %v972 = vsel %vm572, %v840, 0.0
        %973 = vadd.xlane.f32.xlu0 %v972
        %v974 = vpop.xlane.xlu0 %973
        %v975 = vsel %vm572, %v842, 0.0
        %976 = vadd.xlane.f32.xlu0 %v975
        %v977 = vpop.xlane.xlu0 %976
        %v978 = vsel %vm572, %v844, 0.0
        %979 = vadd.xlane.f32.xlu0 %v978
        %v980 = vpop.xlane.xlu0 %979
        %v981 = vsel %vm572, %v846, 0.0
        %982 = vadd.xlane.f32.xlu0 %v981
        %v983 = vpop.xlane.xlu0 %982
        %v984 = vsel %vm572, %v848, 0.0
        %985 = vadd.xlane.f32.xlu0 %v984
        %v986 = vpop.xlane.xlu0 %985
        %v987 = vsel %vm572, %v850, 0.0
        %988 = vadd.xlane.f32.xlu0 %v987
        %v989 = vpop.xlane.xlu0 %988
        %v990 = vsel %vm572, %v852, 0.0
        %991 = vadd.xlane.f32.xlu0 %v990
        %v992 = vpop.xlane.xlu0 %991
        %v993 = vsel %vm572, %v854, 0.0
        %994 = vadd.xlane.f32.xlu0 %v993
        %v995 = vpop.xlane.xlu0 %994
        %v996 = vsel %vm572, %v856, 0.0
        %997 = vadd.xlane.f32.xlu0 %v996
        %v998 = vpop.xlane.xlu0 %997
        %v999 = vsel %vm572, %v858, 0.0
        %1000 = vadd.xlane.f32.xlu0 %v999
        %v1001 = vpop.xlane.xlu0 %1000
        %v1002 = vsel %vm572, %v860, 0.0
        %1003 = vadd.xlane.f32.xlu0 %v1002
        %v1004 = vpop.xlane.xlu0 %1003
        %v1005 = vsel %vm572, %v862, 0.0
        %1006 = vadd.xlane.f32.xlu0 %v1005
        %v1007 = vpop.xlane.xlu0 %1006
        %v1008 = vsel %vm572, %v864, 0.0
        %1009 = vadd.xlane.f32.xlu0 %v1008
        %v1010 = vpop.xlane.xlu0 %1009
        %v1011 = vsel %vm572, %v866, 0.0
        %1012 = vadd.xlane.f32.xlu0 %v1011
        %v1013 = vpop.xlane.xlu0 %1012
        %v1014 = vsel %vm572, %v868, 0.0
        %1015 = vadd.xlane.f32.xlu0 %v1014
        %v1016 = vpop.xlane.xlu0 %1015
        %v1017 = vsel %vm572, %v870, 0.0
        %1018 = vadd.xlane.f32.xlu0 %v1017
        %v1019 = vpop.xlane.xlu0 %1018
        %v1020 = vsel %vm572, %v872, 0.0
        %1021 = vadd.xlane.f32.xlu0 %v1020
        %v1022 = vpop.xlane.xlu0 %1021
        %v1023 = vsel %vm572, %v874, 0.0
        %1024 = vadd.xlane.f32.xlu0 %v1023
        %v1025 = vpop.xlane.xlu0 %1024
        %v1026 = vsel %vm572, %v876, 0.0
        %1027 = vadd.xlane.f32.xlu0 %v1026
        %v1028 = vpop.xlane.xlu0 %1027
        %v1029 = vsel %vm572, %v878, 0.0
        %1030 = vadd.xlane.f32.xlu0 %v1029
        %v1031 = vpop.xlane.xlu0 %1030
        %v1032 = vsel %vm572, %v880, 0.0
        %1033 = vadd.xlane.f32.xlu0 %v1032
        %v1034 = vpop.xlane.xlu0 %1033
        %v1035 = vsel %vm572, %v882, 0.0
        %1036 = vadd.xlane.f32.xlu0 %v1035
        %v1037 = vpop.xlane.xlu0 %1036
        %v1038 = vsel %vm572, %v884, 0.0
        %1039 = vadd.xlane.f32.xlu0 %v1038
        %v1040 = vpop.xlane.xlu0 %1039
        %v1041 = vsel %vm572, %v886, 0.0
        %1042 = vadd.xlane.f32.xlu0 %v1041
        %v1043 = vpop.xlane.xlu0 %1042
        %v1044 = vsel %vm572, %v888, 0.0
        %1045 = vadd.xlane.f32.xlu0 %v1044
        %v1046 = vpop.xlane.xlu0 %1045
        %v1047 = vsel %vm572, %v890, 0.0
        %1048 = vadd.xlane.f32.xlu0 %v1047
        %v1049 = vpop.xlane.xlu0 %1048
        %v1050 = vsel %vm572, %v892, 0.0
        %1051 = vadd.xlane.f32.xlu0 %v1050
        %v1052 = vpop.xlane.xlu0 %1051
        %v1053 = vsel %vm572, %v894, 0.0
        %1054 = vadd.xlane.f32.xlu0 %v1053
        %v1055 = vpop.xlane.xlu0 %1054
        %v1056 = vsel %vm572, %v896, 0.0
        %1057 = vadd.xlane.f32.xlu0 %v1056
        %v1058 = vpop.xlane.xlu0 %1057
        %v1059 = vsel %vm572, %v898, 0.0
        %1060 = vadd.xlane.f32.xlu0 %v1059
        %v1061 = vpop.xlane.xlu0 %1060
        %v1062 = vsel %vm572, %v900, 0.0
        %1063 = vadd.xlane.f32.xlu0 %v1062
        %v1064 = vpop.xlane.xlu0 %1063
        %v1065 = vsel %vm572, %v902, 0.0
        %1066 = vadd.xlane.f32.xlu0 %v1065
        %v1067 = vpop.xlane.xlu0 %1066
        %v1068 = vsel %vm572, %v904, 0.0
        %1069 = vadd.xlane.f32.xlu0 %v1068
        %v1070 = vpop.xlane.xlu0 %1069
        %v1071 = vsel %vm572, %v906, 0.0
        %1072 = vadd.xlane.f32.xlu0 %v1071
        %v1073 = vpop.xlane.xlu0 %1072
        %v1074 = vsel %vm572, %v908, 0.0
        %1075 = vadd.xlane.f32.xlu0 %v1074
        %v1076 = vpop.xlane.xlu0 %1075
        %v1077 = vsel %vm572, %v910, 0.0
        %1078 = vadd.xlane.f32.xlu0 %v1077
        %v1079 = vpop.xlane.xlu0 %1078
        %v1080 = vsel %vm572, %v912, 0.0
        %1081 = vadd.xlane.f32.xlu0 %v1080
        %v1082 = vpop.xlane.xlu0 %1081
        %v1083 = vsel %vm572, %v914, 0.0
        %1084 = vadd.xlane.f32.xlu0 %v1083
        %v1085 = vpop.xlane.xlu0 %1084
        %v1086 = vsel %vm572, %v916, 0.0
        %1087 = vadd.xlane.f32.xlu0 %v1086
        %v1088 = vpop.xlane.xlu0 %1087
        %v1089 = vsel %vm572, %v918, 0.0
        %1090 = vadd.xlane.f32.xlu0 %v1089
        %v1091 = vpop.xlane.xlu0 %1090
        %v1092 = vsel %vm572, %v920, 0.0
        %1093 = vadd.xlane.f32.xlu0 %v1092
        %v1094 = vpop.xlane.xlu0 %1093
        %v1095 = vsel %vm572, %v922, 0.0
        %1096 = vadd.xlane.f32.xlu0 %v1095
        %v1097 = vpop.xlane.xlu0 %1096
        %v1098 = vsel %vm572, %v924, 0.0
        %1099 = vadd.xlane.f32.xlu0 %v1098
        %v1100 = vpop.xlane.xlu0 %1099
        %v1101 = vsel %vm572, %v926, 0.0
        %1102 = vadd.xlane.f32.xlu0 %v1101
        %v1103 = vpop.xlane.xlu0 %1102
        %v1104 = vsel %vm572, %v928, 0.0
        %1105 = vadd.xlane.f32.xlu0 %v1104
        %v1106 = vpop.xlane.xlu0 %1105
        %v1107 = vsel %vm572, %v930, 0.0
        %1108 = vadd.xlane.f32.xlu0 %v1107
        %v1109 = vpop.xlane.xlu0 %1108
        %v1110 = vsel %vm572, %v932, 0.0
        %1111 = vadd.xlane.f32.xlu0 %v1110
        %v1112 = vpop.xlane.xlu0 %1111
        %v1113 = vsel %vm572, %v934, 0.0
        %1114 = vadd.xlane.f32.xlu0 %v1113
        %v1115 = vpop.xlane.xlu0 %1114
        %v1116 = vsel %vm572, %v936, 0.0
        %1117 = vadd.xlane.f32.xlu0 %v1116
        %v1118 = vpop.xlane.xlu0 %1117
        %v1119 = vsel %vm572, %v938, 0.0
        %1120 = vadd.xlane.f32.xlu0 %v1119
        %v1121 = vpop.xlane.xlu0 %1120
        %v1122 = vsel %vm572, %v940, 0.0
        %1123 = vadd.xlane.f32.xlu0 %v1122
        %v1124 = vpop.xlane.xlu0 %1123
        %v1125 = vsel %vm572, %v942, 0.0
        %1126 = vadd.xlane.f32.xlu0 %v1125
        %v1127 = vpop.xlane.xlu0 %1126
        %v1128 = vsel %vm572, %v944, 0.0
        %1129 = vadd.xlane.f32.xlu0 %v1128
        %v1130 = vpop.xlane.xlu0 %1129
        %v1131 = vsel %vm572, %v946, 0.0
        %1132 = vadd.xlane.f32.xlu0 %v1131
        %v1133 = vpop.xlane.xlu0 %1132
        %v1134 = vsel %vm572, %v948, 0.0
        %1135 = vadd.xlane.f32.xlu0 %v1134
        %v1136 = vpop.xlane.xlu0 %1135
        %v1137 = vsel %vm572, %v950, 0.0
        %1138 = vadd.xlane.f32.xlu0 %v1137
        %v1139 = vpop.xlane.xlu0 %1138
        %v1140 = vsel %vm572, %v952, 0.0
        %1141 = vadd.xlane.f32.xlu0 %v1140
        %v1142 = vpop.xlane.xlu0 %1141
        %v1143 = vsel %vm572, %v954, 0.0
        %1144 = vadd.xlane.f32.xlu0 %v1143
        %v1145 = vpop.xlane.xlu0 %1144
        %v1146 = vsel %vm572, %v956, 0.0
        %1147 = vadd.xlane.f32.xlu0 %v1146
        %v1148 = vpop.xlane.xlu0 %1147
        %v1149 = vlog2.pop %v959
        %v1150 = vmul.f32 %v1149, 0.6931472
        %v1151 = vlog2.pop %v962
        %v1152 = vmul.f32 %v1151, 0.6931472
        %v1153 = vlog2.pop %v965
        %v1154 = vmul.f32 %v1153, 0.6931472
        %v1155 = vlog2.pop %v968
        %v1156 = vmul.f32 %v1155, 0.6931472
        %v1157 = vlog2.pop %v971
        %v1158 = vmul.f32 %v1157, 0.6931472
        %v1159 = vlog2.pop %v974
        %v1160 = vmul.f32 %v1159, 0.6931472
        %v1161 = vlog2.pop %v977
        %v1162 = vmul.f32 %v1161, 0.6931472
        %v1163 = vlog2.pop %v980
        %v1164 = vmul.f32 %v1163, 0.6931472
        %v1165 = vlog2.pop %v983
        %v1166 = vmul.f32 %v1165, 0.6931472
        %v1167 = vlog2.pop %v986
        %v1168 = vmul.f32 %v1167, 0.6931472
        %v1169 = vlog2.pop %v989
        %v1170 = vmul.f32 %v1169, 0.6931472
        %v1171 = vlog2.pop %v992
        %v1172 = vmul.f32 %v1171, 0.6931472
        %v1173 = vlog2.pop %v995
        %v1174 = vmul.f32 %v1173, 0.6931472
        %v1175 = vlog2.pop %v998
        %v1176 = vmul.f32 %v1175, 0.6931472
        %v1177 = vlog2.pop %v1001
        %v1178 = vmul.f32 %v1177, 0.6931472
        %v1179 = vlog2.pop %v1004
        %v1180 = vmul.f32 %v1179, 0.6931472
        %v1181 = vlog2.pop %v1007
        %v1182 = vmul.f32 %v1181, 0.6931472
        %v1183 = vlog2.pop %v1010
        %v1184 = vmul.f32 %v1183, 0.6931472
        %v1185 = vlog2.pop %v1013
        %v1186 = vmul.f32 %v1185, 0.6931472
        %v1187 = vlog2.pop %v1016
        %v1188 = vmul.f32 %v1187, 0.6931472
        %v1189 = vlog2.pop %v1019
        %v1190 = vmul.f32 %v1189, 0.6931472
        %v1191 = vlog2.pop %v1022
        %v1192 = vmul.f32 %v1191, 0.6931472
        %v1193 = vlog2.pop %v1025
        %v1194 = vmul.f32 %v1193, 0.6931472
        %v1195 = vlog2.pop %v1028
        %v1196 = vmul.f32 %v1195, 0.6931472
        %v1197 = vlog2.pop %v1031
        %v1198 = vmul.f32 %v1197, 0.6931472
        %v1199 = vlog2.pop %v1034
        %v1200 = vmul.f32 %v1199, 0.6931472
        %v1201 = vlog2.pop %v1037
        %v1202 = vmul.f32 %v1201, 0.6931472
        %v1203 = vlog2.pop %v1040
        %v1204 = vmul.f32 %v1203, 0.6931472
        %v1205 = vlog2.pop %v1043
        %v1206 = vmul.f32 %v1205, 0.6931472
        %v1207 = vlog2.pop %v1046
        %v1208 = vmul.f32 %v1207, 0.6931472
        %v1209 = vlog2.pop %v1049
        %v1210 = vmul.f32 %v1209, 0.6931472
        %v1211 = vlog2.pop %v1052
        %v1212 = vmul.f32 %v1211, 0.6931472
        %v1213 = vlog2.pop %v1055
        %v1214 = vmul.f32 %v1213, 0.6931472
        %v1215 = vlog2.pop %v1058
        %v1216 = vmul.f32 %v1215, 0.6931472
        %v1217 = vlog2.pop %v1061
        %v1218 = vmul.f32 %v1217, 0.6931472
        %v1219 = vlog2.pop %v1064
        %v1220 = vmul.f32 %v1219, 0.6931472
        %v1221 = vlog2.pop %v1067
        %v1222 = vmul.f32 %v1221, 0.6931472
        %v1223 = vlog2.pop %v1070
        %v1224 = vmul.f32 %v1223, 0.6931472
        %v1225 = vlog2.pop %v1073
        %v1226 = vmul.f32 %v1225, 0.6931472
        %v1227 = vlog2.pop %v1076
        %v1228 = vmul.f32 %v1227, 0.6931472
        %v1229 = vlog2.pop %v1079
        %v1230 = vmul.f32 %v1229, 0.6931472
        %v1231 = vlog2.pop %v1082
        %v1232 = vmul.f32 %v1231, 0.6931472
        %v1233 = vlog2.pop %v1085
        %v1234 = vmul.f32 %v1233, 0.6931472
        %v1235 = vlog2.pop %v1088
        %v1236 = vmul.f32 %v1235, 0.6931472
        %v1237 = vlog2.pop %v1091
        %v1238 = vmul.f32 %v1237, 0.6931472
        %v1239 = vlog2.pop %v1094
        %v1240 = vmul.f32 %v1239, 0.6931472
        %v1241 = vlog2.pop %v1097
        %v1242 = vmul.f32 %v1241, 0.6931472
        %v1243 = vlog2.pop %v1100
        %v1244 = vmul.f32 %v1243, 0.6931472
        %v1245 = vlog2.pop %v1103
        %v1246 = vmul.f32 %v1245, 0.6931472
        %v1247 = vlog2.pop %v1106
        %v1248 = vmul.f32 %v1247, 0.6931472
        %v1249 = vlog2.pop %v1109
        %v1250 = vmul.f32 %v1249, 0.6931472
        %v1251 = vlog2.pop %v1112
        %v1252 = vmul.f32 %v1251, 0.6931472
        %v1253 = vlog2.pop %v1115
        %v1254 = vmul.f32 %v1253, 0.6931472
        %v1255 = vlog2.pop %v1118
        %v1256 = vmul.f32 %v1255, 0.6931472
        %v1257 = vlog2.pop %v1121
        %v1258 = vmul.f32 %v1257, 0.6931472
        %v1259 = vlog2.pop %v1124
        %v1260 = vmul.f32 %v1259, 0.6931472
        %v1261 = vlog2.pop %v1127
        %v1262 = vmul.f32 %v1261, 0.6931472
        %v1263 = vlog2.pop %v1130
        %v1264 = vmul.f32 %v1263, 0.6931472
        %v1265 = vlog2.pop %v1133
        %v1266 = vmul.f32 %v1265, 0.6931472
        %v1267 = vlog2.pop %v1136
        %v1268 = vmul.f32 %v1267, 0.6931472
        %v1269 = vlog2.pop %v1139
        %v1270 = vmul.f32 %v1269, 0.6931472
        %v1271 = vlog2.pop %v1142
        %v1272 = vmul.f32 %v1271, 0.6931472
        %v1273 = vlog2.pop %v1145
        %v1274 = vmul.f32 %v1273, 0.6931472
        %v1275 = vlog2.pop %v1148
        %v1276 = vmul.f32 %v1275, 0.6931472
        %v1277 = vlaneseq
        %v1278 = vand.u32 %v1277, 127
        %1279 = vset.pattern.permute.xlu0 0
        %1280 = vperm.xlu0 %1279, %v444
        %v1281 = vpop.permute.xlu0 %1280
        %1282 = vset.pattern.permute.xlu0 0
        %1283 = vperm.xlu0 %1282, %v445
        %v1284 = vpop.permute.xlu0 %1283
        %1285 = vset.pattern.permute.xlu0 0
        %1286 = vperm.xlu0 %1285, %v446
        %v1287 = vpop.permute.xlu0 %1286
        %1288 = vset.pattern.permute.xlu0 0
        %1289 = vperm.xlu0 %1288, %v447
        %v1290 = vpop.permute.xlu0 %1289
        %1291 = vset.pattern.permute.xlu0 0
        %1292 = vperm.xlu0 %1291, %v448
        %v1293 = vpop.permute.xlu0 %1292
        %1294 = vset.pattern.permute.xlu0 0
        %1295 = vperm.xlu0 %1294, %v449
        %v1296 = vpop.permute.xlu0 %1295
        %1297 = vset.pattern.permute.xlu0 0
        %1298 = vperm.xlu0 %1297, %v450
        %v1299 = vpop.permute.xlu0 %1298
        %1300 = vset.pattern.permute.xlu0 0
        %1301 = vperm.xlu0 %1300, %v451
        %v1302 = vpop.permute.xlu0 %1301
        %1303 = vset.pattern.permute.xlu0 0
        %1304 = vperm.xlu0 %1303, %v452
        %v1305 = vpop.permute.xlu0 %1304
        %1306 = vset.pattern.permute.xlu0 0
        %1307 = vperm.xlu0 %1306, %v453
        %v1308 = vpop.permute.xlu0 %1307
        %1309 = vset.pattern.permute.xlu0 0
        %1310 = vperm.xlu0 %1309, %v454
        %v1311 = vpop.permute.xlu0 %1310
        %1312 = vset.pattern.permute.xlu0 0
        %1313 = vperm.xlu0 %1312, %v455
        %v1314 = vpop.permute.xlu0 %1313
        %1315 = vset.pattern.permute.xlu0 0
        %1316 = vperm.xlu0 %1315, %v456
        %v1317 = vpop.permute.xlu0 %1316
        %1318 = vset.pattern.permute.xlu0 0
        %1319 = vperm.xlu0 %1318, %v457
        %v1320 = vpop.permute.xlu0 %1319
        %1321 = vset.pattern.permute.xlu0 0
        %1322 = vperm.xlu0 %1321, %v458
        %v1323 = vpop.permute.xlu0 %1322
        %1324 = vset.pattern.permute.xlu0 0
        %1325 = vperm.xlu0 %1324, %v459
        %v1326 = vpop.permute.xlu0 %1325
        %1327 = vset.pattern.permute.xlu0 0
        %1328 = vperm.xlu0 %1327, %v460
        %v1329 = vpop.permute.xlu0 %1328
        %1330 = vset.pattern.permute.xlu0 0
        %1331 = vperm.xlu0 %1330, %v461
        %v1332 = vpop.permute.xlu0 %1331
        %1333 = vset.pattern.permute.xlu0 0
        %1334 = vperm.xlu0 %1333, %v462
        %v1335 = vpop.permute.xlu0 %1334
        %1336 = vset.pattern.permute.xlu0 0
        %1337 = vperm.xlu0 %1336, %v463
        %v1338 = vpop.permute.xlu0 %1337
        %1339 = vset.pattern.permute.xlu0 0
        %1340 = vperm.xlu0 %1339, %v464
        %v1341 = vpop.permute.xlu0 %1340
        %1342 = vset.pattern.permute.xlu0 0
        %1343 = vperm.xlu0 %1342, %v465
        %v1344 = vpop.permute.xlu0 %1343
        %1345 = vset.pattern.permute.xlu0 0
        %1346 = vperm.xlu0 %1345, %v466
        %v1347 = vpop.permute.xlu0 %1346
        %1348 = vset.pattern.permute.xlu0 0
        %1349 = vperm.xlu0 %1348, %v467
        %v1350 = vpop.permute.xlu0 %1349
        %1351 = vset.pattern.permute.xlu0 0
        %1352 = vperm.xlu0 %1351, %v468
        %v1353 = vpop.permute.xlu0 %1352
        %1354 = vset.pattern.permute.xlu0 0
        %1355 = vperm.xlu0 %1354, %v469
        %v1356 = vpop.permute.xlu0 %1355
        %1357 = vset.pattern.permute.xlu0 0
        %1358 = vperm.xlu0 %1357, %v470
        %v1359 = vpop.permute.xlu0 %1358
        %1360 = vset.pattern.permute.xlu0 0
        %1361 = vperm.xlu0 %1360, %v471
        %v1362 = vpop.permute.xlu0 %1361
        %1363 = vset.pattern.permute.xlu0 0
        %1364 = vperm.xlu0 %1363, %v472
        %v1365 = vpop.permute.xlu0 %1364
        %1366 = vset.pattern.permute.xlu0 0
        %1367 = vperm.xlu0 %1366, %v473
        %v1368 = vpop.permute.xlu0 %1367
        %1369 = vset.pattern.permute.xlu0 0
        %1370 = vperm.xlu0 %1369, %v474
        %v1371 = vpop.permute.xlu0 %1370
        %1372 = vset.pattern.permute.xlu0 0
        %1373 = vperm.xlu0 %1372, %v475
        %v1374 = vpop.permute.xlu0 %1373
        %1375 = vset.pattern.permute.xlu0 0
        %1376 = vperm.xlu0 %1375, %v476
        %v1377 = vpop.permute.xlu0 %1376
        %1378 = vset.pattern.permute.xlu0 0
        %1379 = vperm.xlu0 %1378, %v477
        %v1380 = vpop.permute.xlu0 %1379
        %1381 = vset.pattern.permute.xlu0 0
        %1382 = vperm.xlu0 %1381, %v478
        %v1383 = vpop.permute.xlu0 %1382
        %1384 = vset.pattern.permute.xlu0 0
        %1385 = vperm.xlu0 %1384, %v479
        %v1386 = vpop.permute.xlu0 %1385
        %1387 = vset.pattern.permute.xlu0 0
        %1388 = vperm.xlu0 %1387, %v480
        %v1389 = vpop.permute.xlu0 %1388
        %1390 = vset.pattern.permute.xlu0 0
        %1391 = vperm.xlu0 %1390, %v481
        %v1392 = vpop.permute.xlu0 %1391
        %1393 = vset.pattern.permute.xlu0 0
        %1394 = vperm.xlu0 %1393, %v482
        %v1395 = vpop.permute.xlu0 %1394
        %1396 = vset.pattern.permute.xlu0 0
        %1397 = vperm.xlu0 %1396, %v483
        %v1398 = vpop.permute.xlu0 %1397
        %1399 = vset.pattern.permute.xlu0 0
        %1400 = vperm.xlu0 %1399, %v484
        %v1401 = vpop.permute.xlu0 %1400
        %1402 = vset.pattern.permute.xlu0 0
        %1403 = vperm.xlu0 %1402, %v485
        %v1404 = vpop.permute.xlu0 %1403
        %1405 = vset.pattern.permute.xlu0 0
        %1406 = vperm.xlu0 %1405, %v486
        %v1407 = vpop.permute.xlu0 %1406
        %1408 = vset.pattern.permute.xlu0 0
        %1409 = vperm.xlu0 %1408, %v487
        %v1410 = vpop.permute.xlu0 %1409
        %1411 = vset.pattern.permute.xlu0 0
        %1412 = vperm.xlu0 %1411, %v488
        %v1413 = vpop.permute.xlu0 %1412
        %1414 = vset.pattern.permute.xlu0 0
        %1415 = vperm.xlu0 %1414, %v489
        %v1416 = vpop.permute.xlu0 %1415
        %1417 = vset.pattern.permute.xlu0 0
        %1418 = vperm.xlu0 %1417, %v490
        %v1419 = vpop.permute.xlu0 %1418
        %1420 = vset.pattern.permute.xlu0 0
        %1421 = vperm.xlu0 %1420, %v491
        %v1422 = vpop.permute.xlu0 %1421
        %1423 = vset.pattern.permute.xlu0 0
        %1424 = vperm.xlu0 %1423, %v492
        %v1425 = vpop.permute.xlu0 %1424
        %1426 = vset.pattern.permute.xlu0 0
        %1427 = vperm.xlu0 %1426, %v493
        %v1428 = vpop.permute.xlu0 %1427
        %1429 = vset.pattern.permute.xlu0 0
        %1430 = vperm.xlu0 %1429, %v494
        %v1431 = vpop.permute.xlu0 %1430
        %1432 = vset.pattern.permute.xlu0 0
        %1433 = vperm.xlu0 %1432, %v495
        %v1434 = vpop.permute.xlu0 %1433
        %1435 = vset.pattern.permute.xlu0 0
        %1436 = vperm.xlu0 %1435, %v496
        %v1437 = vpop.permute.xlu0 %1436
        %1438 = vset.pattern.permute.xlu0 0
        %1439 = vperm.xlu0 %1438, %v497
        %v1440 = vpop.permute.xlu0 %1439
        %1441 = vset.pattern.permute.xlu0 0
        %1442 = vperm.xlu0 %1441, %v498
        %v1443 = vpop.permute.xlu0 %1442
        %1444 = vset.pattern.permute.xlu0 0
        %1445 = vperm.xlu0 %1444, %v499
        %v1446 = vpop.permute.xlu0 %1445
        %1447 = vset.pattern.permute.xlu0 0
        %1448 = vperm.xlu0 %1447, %v500
        %v1449 = vpop.permute.xlu0 %1448
        %1450 = vset.pattern.permute.xlu0 0
        %1451 = vperm.xlu0 %1450, %v501
        %v1452 = vpop.permute.xlu0 %1451
        %1453 = vset.pattern.permute.xlu0 0
        %1454 = vperm.xlu0 %1453, %v502
        %v1455 = vpop.permute.xlu0 %1454
        %1456 = vset.pattern.permute.xlu0 0
        %1457 = vperm.xlu0 %1456, %v503
        %v1458 = vpop.permute.xlu0 %1457
        %1459 = vset.pattern.permute.xlu0 0
        %1460 = vperm.xlu0 %1459, %v504
        %v1461 = vpop.permute.xlu0 %1460
        %1462 = vset.pattern.permute.xlu0 0
        %1463 = vperm.xlu0 %1462, %v505
        %v1464 = vpop.permute.xlu0 %1463
        %1465 = vset.pattern.permute.xlu0 0
        %1466 = vperm.xlu0 %1465, %v506
        %v1467 = vpop.permute.xlu0 %1466
        %1468 = vset.pattern.permute.xlu0 0
        %1469 = vperm.xlu0 %1468, %v507
        %v1470 = vpop.permute.xlu0 %1469
        %vm1471 = vcmp.eq.s32.totalorder %v1278, %v1281
        %vm1472 = vcmp.eq.s32.totalorder %v1278, %v1284
        %vm1473 = vcmp.eq.s32.totalorder %v1278, %v1287
        %vm1474 = vcmp.eq.s32.totalorder %v1278, %v1290
        %vm1475 = vcmp.eq.s32.totalorder %v1278, %v1293
        %vm1476 = vcmp.eq.s32.totalorder %v1278, %v1296
        %vm1477 = vcmp.eq.s32.totalorder %v1278, %v1299
        %vm1478 = vcmp.eq.s32.totalorder %v1278, %v1302
        %vm1479 = vcmp.eq.s32.totalorder %v1278, %v1305
        %vm1480 = vcmp.eq.s32.totalorder %v1278, %v1308
        %vm1481 = vcmp.eq.s32.totalorder %v1278, %v1311
        %vm1482 = vcmp.eq.s32.totalorder %v1278, %v1314
        %vm1483 = vcmp.eq.s32.totalorder %v1278, %v1317
        %vm1484 = vcmp.eq.s32.totalorder %v1278, %v1320
        %vm1485 = vcmp.eq.s32.totalorder %v1278, %v1323
        %vm1486 = vcmp.eq.s32.totalorder %v1278, %v1326
        %vm1487 = vcmp.eq.s32.totalorder %v1278, %v1329
        %vm1488 = vcmp.eq.s32.totalorder %v1278, %v1332
        %vm1489 = vcmp.eq.s32.totalorder %v1278, %v1335
        %vm1490 = vcmp.eq.s32.totalorder %v1278, %v1338
        %vm1491 = vcmp.eq.s32.totalorder %v1278, %v1341
        %vm1492 = vcmp.eq.s32.totalorder %v1278, %v1344
        %vm1493 = vcmp.eq.s32.totalorder %v1278, %v1347
        %vm1494 = vcmp.eq.s32.totalorder %v1278, %v1350
        %vm1495 = vcmp.eq.s32.totalorder %v1278, %v1353
        %vm1496 = vcmp.eq.s32.totalorder %v1278, %v1356
        %vm1497 = vcmp.eq.s32.totalorder %v1278, %v1359
        %vm1498 = vcmp.eq.s32.totalorder %v1278, %v1362
        %vm1499 = vcmp.eq.s32.totalorder %v1278, %v1365
        %vm1500 = vcmp.eq.s32.totalorder %v1278, %v1368
        %vm1501 = vcmp.eq.s32.totalorder %v1278, %v1371
        %vm1502 = vcmp.eq.s32.totalorder %v1278, %v1374
        %vm1503 = vcmp.eq.s32.totalorder %v1278, %v1377
        %vm1504 = vcmp.eq.s32.totalorder %v1278, %v1380
        %vm1505 = vcmp.eq.s32.totalorder %v1278, %v1383
        %vm1506 = vcmp.eq.s32.totalorder %v1278, %v1386
        %vm1507 = vcmp.eq.s32.totalorder %v1278, %v1389
        %vm1508 = vcmp.eq.s32.totalorder %v1278, %v1392
        %vm1509 = vcmp.eq.s32.totalorder %v1278, %v1395
        %vm1510 = vcmp.eq.s32.totalorder %v1278, %v1398
        %vm1511 = vcmp.eq.s32.totalorder %v1278, %v1401
        %vm1512 = vcmp.eq.s32.totalorder %v1278, %v1404
        %vm1513 = vcmp.eq.s32.totalorder %v1278, %v1407
        %vm1514 = vcmp.eq.s32.totalorder %v1278, %v1410
        %vm1515 = vcmp.eq.s32.totalorder %v1278, %v1413
        %vm1516 = vcmp.eq.s32.totalorder %v1278, %v1416
        %vm1517 = vcmp.eq.s32.totalorder %v1278, %v1419
        %vm1518 = vcmp.eq.s32.totalorder %v1278, %v1422
        %vm1519 = vcmp.eq.s32.totalorder %v1278, %v1425
        %vm1520 = vcmp.eq.s32.totalorder %v1278, %v1428
        %vm1521 = vcmp.eq.s32.totalorder %v1278, %v1431
        %vm1522 = vcmp.eq.s32.totalorder %v1278, %v1434
        %vm1523 = vcmp.eq.s32.totalorder %v1278, %v1437
        %vm1524 = vcmp.eq.s32.totalorder %v1278, %v1440
        %vm1525 = vcmp.eq.s32.totalorder %v1278, %v1443
        %vm1526 = vcmp.eq.s32.totalorder %v1278, %v1446
        %vm1527 = vcmp.eq.s32.totalorder %v1278, %v1449
        %vm1528 = vcmp.eq.s32.totalorder %v1278, %v1452
        %vm1529 = vcmp.eq.s32.totalorder %v1278, %v1455
        %vm1530 = vcmp.eq.s32.totalorder %v1278, %v1458
        %vm1531 = vcmp.eq.s32.totalorder %v1278, %v1461
        %vm1532 = vcmp.eq.s32.totalorder %v1278, %v1464
        %vm1533 = vcmp.eq.s32.totalorder %v1278, %v1467
        %vm1534 = vcmp.eq.s32.totalorder %v1278, %v1470
        %v1535 = vsel %vm1471, 1, 0
        %v1536 = vsel %vm1472, 1, 0
        %v1537 = vsel %vm1473, 1, 0
        %v1538 = vsel %vm1474, 1, 0
        %v1539 = vsel %vm1475, 1, 0
        %v1540 = vsel %vm1476, 1, 0
        %v1541 = vsel %vm1477, 1, 0
        %v1542 = vsel %vm1478, 1, 0
        %v1543 = vsel %vm1479, 1, 0
        %v1544 = vsel %vm1480, 1, 0
        %v1545 = vsel %vm1481, 1, 0
        %v1546 = vsel %vm1482, 1, 0
        %v1547 = vsel %vm1483, 1, 0
        %v1548 = vsel %vm1484, 1, 0
        %v1549 = vsel %vm1485, 1, 0
        %v1550 = vsel %vm1486, 1, 0
        %v1551 = vsel %vm1487, 1, 0
        %v1552 = vsel %vm1488, 1, 0
        %v1553 = vsel %vm1489, 1, 0
        %v1554 = vsel %vm1490, 1, 0
        %v1555 = vsel %vm1491, 1, 0
        %v1556 = vsel %vm1492, 1, 0
        %v1557 = vsel %vm1493, 1, 0
        %v1558 = vsel %vm1494, 1, 0
        %v1559 = vsel %vm1495, 1, 0
        %v1560 = vsel %vm1496, 1, 0
        %v1561 = vsel %vm1497, 1, 0
        %v1562 = vsel %vm1498, 1, 0
        %v1563 = vsel %vm1499, 1, 0
        %v1564 = vsel %vm1500, 1, 0
        %v1565 = vsel %vm1501, 1, 0
        %v1566 = vsel %vm1502, 1, 0
        %v1567 = vsel %vm1503, 1, 0
        %v1568 = vsel %vm1504, 1, 0
        %v1569 = vsel %vm1505, 1, 0
        %v1570 = vsel %vm1506, 1, 0
        %v1571 = vsel %vm1507, 1, 0
        %v1572 = vsel %vm1508, 1, 0
        %v1573 = vsel %vm1509, 1, 0
        %v1574 = vsel %vm1510, 1, 0
        %v1575 = vsel %vm1511, 1, 0
        %v1576 = vsel %vm1512, 1, 0
        %v1577 = vsel %vm1513, 1, 0
        %v1578 = vsel %vm1514, 1, 0
        %v1579 = vsel %vm1515, 1, 0
        %v1580 = vsel %vm1516, 1, 0
        %v1581 = vsel %vm1517, 1, 0
        %v1582 = vsel %vm1518, 1, 0
        %v1583 = vsel %vm1519, 1, 0
        %v1584 = vsel %vm1520, 1, 0
        %v1585 = vsel %vm1521, 1, 0
        %v1586 = vsel %vm1522, 1, 0
        %v1587 = vsel %vm1523, 1, 0
        %v1588 = vsel %vm1524, 1, 0
        %v1589 = vsel %vm1525, 1, 0
        %v1590 = vsel %vm1526, 1, 0
        %v1591 = vsel %vm1527, 1, 0
        %v1592 = vsel %vm1528, 1, 0
        %v1593 = vsel %vm1529, 1, 0
        %v1594 = vsel %vm1530, 1, 0
        %v1595 = vsel %vm1531, 1, 0
        %v1596 = vsel %vm1532, 1, 0
        %v1597 = vsel %vm1533, 1, 0
        %v1598 = vsel %vm1534, 1, 0
        %v1599 = vcvt.s32.f32 %v1535
        %v1600 = vcvt.s32.f32 %v1536
        %v1601 = vcvt.s32.f32 %v1537
        %v1602 = vcvt.s32.f32 %v1538
        %v1603 = vcvt.s32.f32 %v1539
        %v1604 = vcvt.s32.f32 %v1540
        %v1605 = vcvt.s32.f32 %v1541
        %v1606 = vcvt.s32.f32 %v1542
        %v1607 = vcvt.s32.f32 %v1543
        %v1608 = vcvt.s32.f32 %v1544
        %v1609 = vcvt.s32.f32 %v1545
        %v1610 = vcvt.s32.f32 %v1546
        %v1611 = vcvt.s32.f32 %v1547
        %v1612 = vcvt.s32.f32 %v1548
        %v1613 = vcvt.s32.f32 %v1549
        %v1614 = vcvt.s32.f32 %v1550
        %v1615 = vcvt.s32.f32 %v1551
        %v1616 = vcvt.s32.f32 %v1552
        %v1617 = vcvt.s32.f32 %v1553
        %v1618 = vcvt.s32.f32 %v1554
        %v1619 = vcvt.s32.f32 %v1555
        %v1620 = vcvt.s32.f32 %v1556
        %v1621 = vcvt.s32.f32 %v1557
        %v1622 = vcvt.s32.f32 %v1558
        %v1623 = vcvt.s32.f32 %v1559
        %v1624 = vcvt.s32.f32 %v1560
        %v1625 = vcvt.s32.f32 %v1561
        %v1626 = vcvt.s32.f32 %v1562
        %v1627 = vcvt.s32.f32 %v1563
        %v1628 = vcvt.s32.f32 %v1564
        %v1629 = vcvt.s32.f32 %v1565
        %v1630 = vcvt.s32.f32 %v1566
        %v1631 = vcvt.s32.f32 %v1567
        %v1632 = vcvt.s32.f32 %v1568
        %v1633 = vcvt.s32.f32 %v1569
        %v1634 = vcvt.s32.f32 %v1570
        %v1635 = vcvt.s32.f32 %v1571
        %v1636 = vcvt.s32.f32 %v1572
        %v1637 = vcvt.s32.f32 %v1573
        %v1638 = vcvt.s32.f32 %v1574
        %v1639 = vcvt.s32.f32 %v1575
        %v1640 = vcvt.s32.f32 %v1576
        %v1641 = vcvt.s32.f32 %v1577
        %v1642 = vcvt.s32.f32 %v1578
        %v1643 = vcvt.s32.f32 %v1579
        %v1644 = vcvt.s32.f32 %v1580
        %v1645 = vcvt.s32.f32 %v1581
        %v1646 = vcvt.s32.f32 %v1582
        %v1647 = vcvt.s32.f32 %v1583
        %v1648 = vcvt.s32.f32 %v1584
        %v1649 = vcvt.s32.f32 %v1585
        %v1650 = vcvt.s32.f32 %v1586
        %v1651 = vcvt.s32.f32 %v1587
        %v1652 = vcvt.s32.f32 %v1588
        %v1653 = vcvt.s32.f32 %v1589
        %v1654 = vcvt.s32.f32 %v1590
        %v1655 = vcvt.s32.f32 %v1591
        %v1656 = vcvt.s32.f32 %v1592
        %v1657 = vcvt.s32.f32 %v1593
        %v1658 = vcvt.s32.f32 %v1594
        %v1659 = vcvt.s32.f32 %v1595
        %v1660 = vcvt.s32.f32 %v1596
        %v1661 = vcvt.s32.f32 %v1597
        %v1662 = vcvt.s32.f32 %v1598
        %v1663 = vmul.f32 %v1599, %v380
        %v1664 = vmul.f32 %v1600, %v381
        %v1665 = vmul.f32 %v1601, %v382
        %v1666 = vmul.f32 %v1602, %v383
        %v1667 = vmul.f32 %v1603, %v384
        %v1668 = vmul.f32 %v1604, %v385
        %v1669 = vmul.f32 %v1605, %v386
        %v1670 = vmul.f32 %v1606, %v387
        %v1671 = vmul.f32 %v1607, %v388
        %v1672 = vmul.f32 %v1608, %v389
        %v1673 = vmul.f32 %v1609, %v390
        %v1674 = vmul.f32 %v1610, %v391
        %v1675 = vmul.f32 %v1611, %v392
        %v1676 = vmul.f32 %v1612, %v393
        %v1677 = vmul.f32 %v1613, %v394
        %v1678 = vmul.f32 %v1614, %v395
        %v1679 = vmul.f32 %v1615, %v396
        %v1680 = vmul.f32 %v1616, %v397
        %v1681 = vmul.f32 %v1617, %v398
        %v1682 = vmul.f32 %v1618, %v399
        %v1683 = vmul.f32 %v1619, %v400
        %v1684 = vmul.f32 %v1620, %v401
        %v1685 = vmul.f32 %v1621, %v402
        %v1686 = vmul.f32 %v1622, %v403
        %v1687 = vmul.f32 %v1623, %v404
        %v1688 = vmul.f32 %v1624, %v405
        %v1689 = vmul.f32 %v1625, %v406
        %v1690 = vmul.f32 %v1626, %v407
        %v1691 = vmul.f32 %v1627, %v408
        %v1692 = vmul.f32 %v1628, %v409
        %v1693 = vmul.f32 %v1629, %v410
        %v1694 = vmul.f32 %v1630, %v411
        %v1695 = vmul.f32 %v1631, %v412
        %v1696 = vmul.f32 %v1632, %v413
        %v1697 = vmul.f32 %v1633, %v414
        %v1698 = vmul.f32 %v1634, %v415
        %v1699 = vmul.f32 %v1635, %v416
        %v1700 = vmul.f32 %v1636, %v417
        %v1701 = vmul.f32 %v1637, %v418
        %v1702 = vmul.f32 %v1638, %v419
        %v1703 = vmul.f32 %v1639, %v420
        %v1704 = vmul.f32 %v1640, %v421
        %v1705 = vmul.f32 %v1641, %v422
        %v1706 = vmul.f32 %v1642, %v423
        %v1707 = vmul.f32 %v1643, %v424
        %v1708 = vmul.f32 %v1644, %v425
        %v1709 = vmul.f32 %v1645, %v426
        %v1710 = vmul.f32 %v1646, %v427
        %v1711 = vmul.f32 %v1647, %v428
        %v1712 = vmul.f32 %v1648, %v429
        %v1713 = vmul.f32 %v1649, %v430
        %v1714 = vmul.f32 %v1650, %v431
        %v1715 = vmul.f32 %v1651, %v432
        %v1716 = vmul.f32 %v1652, %v433
        %v1717 = vmul.f32 %v1653, %v434
        %v1718 = vmul.f32 %v1654, %v435
        %v1719 = vmul.f32 %v1655, %v436
        %v1720 = vmul.f32 %v1656, %v437
        %v1721 = vmul.f32 %v1657, %v438
        %v1722 = vmul.f32 %v1658, %v439
        %v1723 = vmul.f32 %v1659, %v440
        %v1724 = vmul.f32 %v1660, %v441
        %v1725 = vmul.f32 %v1661, %v442
        %v1726 = vmul.f32 %v1662, %v443
        %v1727 = vsel %vm572, %v1663, 0.0
        %1728 = vadd.xlane.f32.xlu0 %v1727
        %v1729 = vpop.xlane.xlu0 %1728
        %v1730 = vsel %vm572, %v1664, 0.0
        %1731 = vadd.xlane.f32.xlu0 %v1730
        %v1732 = vpop.xlane.xlu0 %1731
        %v1733 = vsel %vm572, %v1665, 0.0
        %1734 = vadd.xlane.f32.xlu0 %v1733
        %v1735 = vpop.xlane.xlu0 %1734
        %v1736 = vsel %vm572, %v1666, 0.0
        %1737 = vadd.xlane.f32.xlu0 %v1736
        %v1738 = vpop.xlane.xlu0 %1737
        %v1739 = vsel %vm572, %v1667, 0.0
        %1740 = vadd.xlane.f32.xlu0 %v1739
        %v1741 = vpop.xlane.xlu0 %1740
        %v1742 = vsel %vm572, %v1668, 0.0
        %1743 = vadd.xlane.f32.xlu0 %v1742
        %v1744 = vpop.xlane.xlu0 %1743
        %v1745 = vsel %vm572, %v1669, 0.0
        %1746 = vadd.xlane.f32.xlu0 %v1745
        %v1747 = vpop.xlane.xlu0 %1746
        %v1748 = vsel %vm572, %v1670, 0.0
        %1749 = vadd.xlane.f32.xlu0 %v1748
        %v1750 = vpop.xlane.xlu0 %1749
        %v1751 = vsel %vm572, %v1671, 0.0
        %1752 = vadd.xlane.f32.xlu0 %v1751
        %v1753 = vpop.xlane.xlu0 %1752
        %v1754 = vsel %vm572, %v1672, 0.0
        %1755 = vadd.xlane.f32.xlu0 %v1754
        %v1756 = vpop.xlane.xlu0 %1755
        %v1757 = vsel %vm572, %v1673, 0.0
        %1758 = vadd.xlane.f32.xlu0 %v1757
        %v1759 = vpop.xlane.xlu0 %1758
        %v1760 = vsel %vm572, %v1674, 0.0
        %1761 = vadd.xlane.f32.xlu0 %v1760
        %v1762 = vpop.xlane.xlu0 %1761
        %v1763 = vsel %vm572, %v1675, 0.0
        %1764 = vadd.xlane.f32.xlu0 %v1763
        %v1765 = vpop.xlane.xlu0 %1764
        %v1766 = vsel %vm572, %v1676, 0.0
        %1767 = vadd.xlane.f32.xlu0 %v1766
        %v1768 = vpop.xlane.xlu0 %1767
        %v1769 = vsel %vm572, %v1677, 0.0
        %1770 = vadd.xlane.f32.xlu0 %v1769
        %v1771 = vpop.xlane.xlu0 %1770
        %v1772 = vsel %vm572, %v1678, 0.0
        %1773 = vadd.xlane.f32.xlu0 %v1772
        %v1774 = vpop.xlane.xlu0 %1773
        %v1775 = vsel %vm572, %v1679, 0.0
        %1776 = vadd.xlane.f32.xlu0 %v1775
        %v1777 = vpop.xlane.xlu0 %1776
        %v1778 = vsel %vm572, %v1680, 0.0
        %1779 = vadd.xlane.f32.xlu0 %v1778
        %v1780 = vpop.xlane.xlu0 %1779
        %v1781 = vsel %vm572, %v1681, 0.0
        %1782 = vadd.xlane.f32.xlu0 %v1781
        %v1783 = vpop.xlane.xlu0 %1782
        %v1784 = vsel %vm572, %v1682, 0.0
        %1785 = vadd.xlane.f32.xlu0 %v1784
        %v1786 = vpop.xlane.xlu0 %1785
        %v1787 = vsel %vm572, %v1683, 0.0
        %1788 = vadd.xlane.f32.xlu0 %v1787
        %v1789 = vpop.xlane.xlu0 %1788
        %v1790 = vsel %vm572, %v1684, 0.0
        %1791 = vadd.xlane.f32.xlu0 %v1790
        %v1792 = vpop.xlane.xlu0 %1791
        %v1793 = vsel %vm572, %v1685, 0.0
        %1794 = vadd.xlane.f32.xlu0 %v1793
        %v1795 = vpop.xlane.xlu0 %1794
        %v1796 = vsel %vm572, %v1686, 0.0
        %1797 = vadd.xlane.f32.xlu0 %v1796
        %v1798 = vpop.xlane.xlu0 %1797
        %v1799 = vsel %vm572, %v1687, 0.0
        %1800 = vadd.xlane.f32.xlu0 %v1799
        %v1801 = vpop.xlane.xlu0 %1800
        %v1802 = vsel %vm572, %v1688, 0.0
        %1803 = vadd.xlane.f32.xlu0 %v1802
        %v1804 = vpop.xlane.xlu0 %1803
        %v1805 = vsel %vm572, %v1689, 0.0
        %1806 = vadd.xlane.f32.xlu0 %v1805
        %v1807 = vpop.xlane.xlu0 %1806
        %v1808 = vsel %vm572, %v1690, 0.0
        %1809 = vadd.xlane.f32.xlu0 %v1808
        %v1810 = vpop.xlane.xlu0 %1809
        %v1811 = vsel %vm572, %v1691, 0.0
        %1812 = vadd.xlane.f32.xlu0 %v1811
        %v1813 = vpop.xlane.xlu0 %1812
        %v1814 = vsel %vm572, %v1692, 0.0
        %1815 = vadd.xlane.f32.xlu0 %v1814
        %v1816 = vpop.xlane.xlu0 %1815
        %v1817 = vsel %vm572, %v1693, 0.0
        %1818 = vadd.xlane.f32.xlu0 %v1817
        %v1819 = vpop.xlane.xlu0 %1818
        %v1820 = vsel %vm572, %v1694, 0.0
        %1821 = vadd.xlane.f32.xlu0 %v1820
        %v1822 = vpop.xlane.xlu0 %1821
        %v1823 = vsel %vm572, %v1695, 0.0
        %1824 = vadd.xlane.f32.xlu0 %v1823
        %v1825 = vpop.xlane.xlu0 %1824
        %v1826 = vsel %vm572, %v1696, 0.0
        %1827 = vadd.xlane.f32.xlu0 %v1826
        %v1828 = vpop.xlane.xlu0 %1827
        %v1829 = vsel %vm572, %v1697, 0.0
        %1830 = vadd.xlane.f32.xlu0 %v1829
        %v1831 = vpop.xlane.xlu0 %1830
        %v1832 = vsel %vm572, %v1698, 0.0
        %1833 = vadd.xlane.f32.xlu0 %v1832
        %v1834 = vpop.xlane.xlu0 %1833
        %v1835 = vsel %vm572, %v1699, 0.0
        %1836 = vadd.xlane.f32.xlu0 %v1835
        %v1837 = vpop.xlane.xlu0 %1836
        %v1838 = vsel %vm572, %v1700, 0.0
        %1839 = vadd.xlane.f32.xlu0 %v1838
        %v1840 = vpop.xlane.xlu0 %1839
        %v1841 = vsel %vm572, %v1701, 0.0
        %1842 = vadd.xlane.f32.xlu0 %v1841
        %v1843 = vpop.xlane.xlu0 %1842
        %v1844 = vsel %vm572, %v1702, 0.0
        %1845 = vadd.xlane.f32.xlu0 %v1844
        %v1846 = vpop.xlane.xlu0 %1845
        %v1847 = vsel %vm572, %v1703, 0.0
        %1848 = vadd.xlane.f32.xlu0 %v1847
        %v1849 = vpop.xlane.xlu0 %1848
        %v1850 = vsel %vm572, %v1704, 0.0
        %1851 = vadd.xlane.f32.xlu0 %v1850
        %v1852 = vpop.xlane.xlu0 %1851
        %v1853 = vsel %vm572, %v1705, 0.0
        %1854 = vadd.xlane.f32.xlu0 %v1853
        %v1855 = vpop.xlane.xlu0 %1854
        %v1856 = vsel %vm572, %v1706, 0.0
        %1857 = vadd.xlane.f32.xlu0 %v1856
        %v1858 = vpop.xlane.xlu0 %1857
        %v1859 = vsel %vm572, %v1707, 0.0
        %1860 = vadd.xlane.f32.xlu0 %v1859
        %v1861 = vpop.xlane.xlu0 %1860
        %v1862 = vsel %vm572, %v1708, 0.0
        %1863 = vadd.xlane.f32.xlu0 %v1862
        %v1864 = vpop.xlane.xlu0 %1863
        %v1865 = vsel %vm572, %v1709, 0.0
        %1866 = vadd.xlane.f32.xlu0 %v1865
        %v1867 = vpop.xlane.xlu0 %1866
        %v1868 = vsel %vm572, %v1710, 0.0
        %1869 = vadd.xlane.f32.xlu0 %v1868
        %v1870 = vpop.xlane.xlu0 %1869
        %v1871 = vsel %vm572, %v1711, 0.0
        %1872 = vadd.xlane.f32.xlu0 %v1871
        %v1873 = vpop.xlane.xlu0 %1872
        %v1874 = vsel %vm572, %v1712, 0.0
        %1875 = vadd.xlane.f32.xlu0 %v1874
        %v1876 = vpop.xlane.xlu0 %1875
        %v1877 = vsel %vm572, %v1713, 0.0
        %1878 = vadd.xlane.f32.xlu0 %v1877
        %v1879 = vpop.xlane.xlu0 %1878
        %v1880 = vsel %vm572, %v1714, 0.0
        %1881 = vadd.xlane.f32.xlu0 %v1880
        %v1882 = vpop.xlane.xlu0 %1881
        %v1883 = vsel %vm572, %v1715, 0.0
        %1884 = vadd.xlane.f32.xlu0 %v1883
        %v1885 = vpop.xlane.xlu0 %1884
        %v1886 = vsel %vm572, %v1716, 0.0
        %1887 = vadd.xlane.f32.xlu0 %v1886
        %v1888 = vpop.xlane.xlu0 %1887
        %v1889 = vsel %vm572, %v1717, 0.0
        %1890 = vadd.xlane.f32.xlu0 %v1889
        %v1891 = vpop.xlane.xlu0 %1890
        %v1892 = vsel %vm572, %v1718, 0.0
        %1893 = vadd.xlane.f32.xlu0 %v1892
        %v1894 = vpop.xlane.xlu0 %1893
        %v1895 = vsel %vm572, %v1719, 0.0
        %1896 = vadd.xlane.f32.xlu0 %v1895
        %v1897 = vpop.xlane.xlu0 %1896
        %v1898 = vsel %vm572, %v1720, 0.0
        %1899 = vadd.xlane.f32.xlu0 %v1898
        %v1900 = vpop.xlane.xlu0 %1899
        %v1901 = vsel %vm572, %v1721, 0.0
        %1902 = vadd.xlane.f32.xlu0 %v1901
        %v1903 = vpop.xlane.xlu0 %1902
        %v1904 = vsel %vm572, %v1722, 0.0
        %1905 = vadd.xlane.f32.xlu0 %v1904
        %v1906 = vpop.xlane.xlu0 %1905
        %v1907 = vsel %vm572, %v1723, 0.0
        %1908 = vadd.xlane.f32.xlu0 %v1907
        %v1909 = vpop.xlane.xlu0 %1908
        %v1910 = vsel %vm572, %v1724, 0.0
        %1911 = vadd.xlane.f32.xlu0 %v1910
        %v1912 = vpop.xlane.xlu0 %1911
        %v1913 = vsel %vm572, %v1725, 0.0
        %1914 = vadd.xlane.f32.xlu0 %v1913
        %v1915 = vpop.xlane.xlu0 %1914
        %v1916 = vsel %vm572, %v1726, 0.0
        %1917 = vadd.xlane.f32.xlu0 %v1916
        %v1918 = vpop.xlane.xlu0 %1917
        %v1919 = vadd.f32 %v575, %v1150
        %v1920 = vadd.f32 %v578, %v1152
        %v1921 = vadd.f32 %v581, %v1154
        %v1922 = vadd.f32 %v584, %v1156
        %v1923 = vadd.f32 %v587, %v1158
        %v1924 = vadd.f32 %v590, %v1160
        %v1925 = vadd.f32 %v593, %v1162
        %v1926 = vadd.f32 %v596, %v1164
        %v1927 = vadd.f32 %v599, %v1166
        %v1928 = vadd.f32 %v602, %v1168
        %v1929 = vadd.f32 %v605, %v1170
        %v1930 = vadd.f32 %v608, %v1172
        %v1931 = vadd.f32 %v611, %v1174
        %v1932 = vadd.f32 %v614, %v1176
        %v1933 = vadd.f32 %v617, %v1178
        %v1934 = vadd.f32 %v620, %v1180
        %v1935 = vadd.f32 %v623, %v1182
        %v1936 = vadd.f32 %v626, %v1184
        %v1937 = vadd.f32 %v629, %v1186
        %v1938 = vadd.f32 %v632, %v1188
        %v1939 = vadd.f32 %v635, %v1190
        %v1940 = vadd.f32 %v638, %v1192
        %v1941 = vadd.f32 %v641, %v1194
        %v1942 = vadd.f32 %v644, %v1196
        %v1943 = vadd.f32 %v647, %v1198
        %v1944 = vadd.f32 %v650, %v1200
        %v1945 = vadd.f32 %v653, %v1202
        %v1946 = vadd.f32 %v656, %v1204
        %v1947 = vadd.f32 %v659, %v1206
        %v1948 = vadd.f32 %v662, %v1208
        %v1949 = vadd.f32 %v665, %v1210
        %v1950 = vadd.f32 %v668, %v1212
        %v1951 = vadd.f32 %v671, %v1214
        %v1952 = vadd.f32 %v674, %v1216
        %v1953 = vadd.f32 %v677, %v1218
        %v1954 = vadd.f32 %v680, %v1220
        %v1955 = vadd.f32 %v683, %v1222
        %v1956 = vadd.f32 %v686, %v1224
        %v1957 = vadd.f32 %v689, %v1226
        %v1958 = vadd.f32 %v692, %v1228
        %v1959 = vadd.f32 %v695, %v1230
        %v1960 = vadd.f32 %v698, %v1232
        %v1961 = vadd.f32 %v701, %v1234
        %v1962 = vadd.f32 %v704, %v1236
        %v1963 = vadd.f32 %v707, %v1238
        %v1964 = vadd.f32 %v710, %v1240
        %v1965 = vadd.f32 %v713, %v1242
        %v1966 = vadd.f32 %v716, %v1244
        %v1967 = vadd.f32 %v719, %v1246
        %v1968 = vadd.f32 %v722, %v1248
        %v1969 = vadd.f32 %v725, %v1250
        %v1970 = vadd.f32 %v728, %v1252
        %v1971 = vadd.f32 %v731, %v1254
        %v1972 = vadd.f32 %v734, %v1256
        %v1973 = vadd.f32 %v737, %v1258
        %v1974 = vadd.f32 %v740, %v1260
        %v1975 = vadd.f32 %v743, %v1262
        %v1976 = vadd.f32 %v746, %v1264
        %v1977 = vadd.f32 %v749, %v1266
        %v1978 = vadd.f32 %v752, %v1268
        %v1979 = vadd.f32 %v755, %v1270
        %v1980 = vadd.f32 %v758, %v1272
        %v1981 = vadd.f32 %v761, %v1274
        %v1982 = vadd.f32 %v764, %v1276
        %v1983 = vsub.f32 %v1919, %v1729
        %v1984 = vsub.f32 %v1920, %v1732
        %v1985 = vsub.f32 %v1921, %v1735
        %v1986 = vsub.f32 %v1922, %v1738
        %v1987 = vsub.f32 %v1923, %v1741
        %v1988 = vsub.f32 %v1924, %v1744
        %v1989 = vsub.f32 %v1925, %v1747
        %v1990 = vsub.f32 %v1926, %v1750
        %v1991 = vsub.f32 %v1927, %v1753
        %v1992 = vsub.f32 %v1928, %v1756
        %v1993 = vsub.f32 %v1929, %v1759
        %v1994 = vsub.f32 %v1930, %v1762
        %v1995 = vsub.f32 %v1931, %v1765
        %v1996 = vsub.f32 %v1932, %v1768
        %v1997 = vsub.f32 %v1933, %v1771
        %v1998 = vsub.f32 %v1934, %v1774
        %v1999 = vsub.f32 %v1935, %v1777
        %v2000 = vsub.f32 %v1936, %v1780
        %v2001 = vsub.f32 %v1937, %v1783
        %v2002 = vsub.f32 %v1938, %v1786
        %v2003 = vsub.f32 %v1939, %v1789
        %v2004 = vsub.f32 %v1940, %v1792
        %v2005 = vsub.f32 %v1941, %v1795
        %v2006 = vsub.f32 %v1942, %v1798
        %v2007 = vsub.f32 %v1943, %v1801
        %v2008 = vsub.f32 %v1944, %v1804
        %v2009 = vsub.f32 %v1945, %v1807
        %v2010 = vsub.f32 %v1946, %v1810
        %v2011 = vsub.f32 %v1947, %v1813
        %v2012 = vsub.f32 %v1948, %v1816
        %v2013 = vsub.f32 %v1949, %v1819
        %v2014 = vsub.f32 %v1950, %v1822
        %v2015 = vsub.f32 %v1951, %v1825
        %v2016 = vsub.f32 %v1952, %v1828
        %v2017 = vsub.f32 %v1953, %v1831
        %v2018 = vsub.f32 %v1954, %v1834
        %v2019 = vsub.f32 %v1955, %v1837
        %v2020 = vsub.f32 %v1956, %v1840
        %v2021 = vsub.f32 %v1957, %v1843
        %v2022 = vsub.f32 %v1958, %v1846
        %v2023 = vsub.f32 %v1959, %v1849
        %v2024 = vsub.f32 %v1960, %v1852
        %v2025 = vsub.f32 %v1961, %v1855
        %v2026 = vsub.f32 %v1962, %v1858
        %v2027 = vsub.f32 %v1963, %v1861
        %v2028 = vsub.f32 %v1964, %v1864
        %v2029 = vsub.f32 %v1965, %v1867
        %v2030 = vsub.f32 %v1966, %v1870
        %v2031 = vsub.f32 %v1967, %v1873
        %v2032 = vsub.f32 %v1968, %v1876
        %v2033 = vsub.f32 %v1969, %v1879
        %v2034 = vsub.f32 %v1970, %v1882
        %v2035 = vsub.f32 %v1971, %v1885
        %v2036 = vsub.f32 %v1972, %v1888
        %v2037 = vsub.f32 %v1973, %v1891
        %v2038 = vsub.f32 %v1974, %v1894
        %v2039 = vsub.f32 %v1975, %v1897
        %v2040 = vsub.f32 %v1976, %v1900
        %v2041 = vsub.f32 %v1977, %v1903
        %v2042 = vsub.f32 %v1978, %v1906
        %v2043 = vsub.f32 %v1979, %v1909
        %v2044 = vsub.f32 %v1980, %v1912
        %v2045 = vsub.f32 %v1981, %v1915
        %v2046 = vsub.f32 %v1982, %v1918
        %v2047 = vld [vmem:[#allocation2] sm:$0xff]
        %v2048 = vld [vmem:[#allocation2 + $0x8] sm:$0xff]
        %v2049 = vld [vmem:[#allocation2 + $0x10] sm:$0xff]
        %v2050 = vld [vmem:[#allocation2 + $0x18] sm:$0xff]
        %v2051 = vld [vmem:[#allocation2 + $0x20] sm:$0xff]
        %v2052 = vld [vmem:[#allocation2 + $0x28] sm:$0xff]
        %v2053 = vld [vmem:[#allocation2 + $0x30] sm:$0xff]
        %v2054 = vld [vmem:[#allocation2 + $0x38] sm:$0xff]
        %v2055 = vld [vmem:[#allocation2 + $0x40] sm:$0xff]
        %v2056 = vld [vmem:[#allocation2 + $0x48] sm:$0xff]
        %v2057 = vld [vmem:[#allocation2 + $0x50] sm:$0xff]
        %v2058 = vld [vmem:[#allocation2 + $0x58] sm:$0xff]
        %v2059 = vld [vmem:[#allocation2 + $0x60] sm:$0xff]
        %v2060 = vld [vmem:[#allocation2 + $0x68] sm:$0xff]
        %v2061 = vld [vmem:[#allocation2 + $0x70] sm:$0xff]
        %v2062 = vld [vmem:[#allocation2 + $0x78] sm:$0xff]
        %v2063 = vld [vmem:[#allocation2 + $0x80] sm:$0xff]
        %v2064 = vld [vmem:[#allocation2 + $0x88] sm:$0xff]
        %v2065 = vld [vmem:[#allocation2 + $0x90] sm:$0xff]
        %v2066 = vld [vmem:[#allocation2 + $0x98] sm:$0xff]
        %v2067 = vld [vmem:[#allocation2 + $0xa0] sm:$0xff]
        %v2068 = vld [vmem:[#allocation2 + $0xa8] sm:$0xff]
        %v2069 = vld [vmem:[#allocation2 + $0xb0] sm:$0xff]
        %v2070 = vld [vmem:[#allocation2 + $0xb8] sm:$0xff]
        %v2071 = vld [vmem:[#allocation2 + $0xc0] sm:$0xff]
        %v2072 = vld [vmem:[#allocation2 + $0xc8] sm:$0xff]
        %v2073 = vld [vmem:[#allocation2 + $0xd0] sm:$0xff]
        %v2074 = vld [vmem:[#allocation2 + $0xd8] sm:$0xff]
        %v2075 = vld [vmem:[#allocation2 + $0xe0] sm:$0xff]
        %v2076 = vld [vmem:[#allocation2 + $0xe8] sm:$0xff]
        %v2077 = vld [vmem:[#allocation2 + $0xf0] sm:$0xff]
        %v2078 = vld [vmem:[#allocation2 + $0xf8] sm:$0xff]
        %v2079 = vld [vmem:[#allocation2 + $0x100] sm:$0xff]
        %v2080 = vld [vmem:[#allocation2 + $0x108] sm:$0xff]
        %v2081 = vld [vmem:[#allocation2 + $0x110] sm:$0xff]
        %v2082 = vld [vmem:[#allocation2 + $0x118] sm:$0xff]
        %v2083 = vld [vmem:[#allocation2 + $0x120] sm:$0xff]
        %v2084 = vld [vmem:[#allocation2 + $0x128] sm:$0xff]
        %v2085 = vld [vmem:[#allocation2 + $0x130] sm:$0xff]
        %v2086 = vld [vmem:[#allocation2 + $0x138] sm:$0xff]
        %v2087 = vld [vmem:[#allocation2 + $0x140] sm:$0xff]
        %v2088 = vld [vmem:[#allocation2 + $0x148] sm:$0xff]
        %v2089 = vld [vmem:[#allocation2 + $0x150] sm:$0xff]
        %v2090 = vld [vmem:[#allocation2 + $0x158] sm:$0xff]
        %v2091 = vld [vmem:[#allocation2 + $0x160] sm:$0xff]
        %v2092 = vld [vmem:[#allocation2 + $0x168] sm:$0xff]
        %v2093 = vld [vmem:[#allocation2 + $0x170] sm:$0xff]
        %v2094 = vld [vmem:[#allocation2 + $0x178] sm:$0xff]
        %v2095 = vld [vmem:[#allocation2 + $0x180] sm:$0xff]
        %v2096 = vld [vmem:[#allocation2 + $0x188] sm:$0xff]
        %v2097 = vld [vmem:[#allocation2 + $0x190] sm:$0xff]
        %v2098 = vld [vmem:[#allocation2 + $0x198] sm:$0xff]
        %v2099 = vld [vmem:[#allocation2 + $0x1a0] sm:$0xff]
        %v2100 = vld [vmem:[#allocation2 + $0x1a8] sm:$0xff]
        %v2101 = vld [vmem:[#allocation2 + $0x1b0] sm:$0xff]
        %v2102 = vld [vmem:[#allocation2 + $0x1b8] sm:$0xff]
        %v2103 = vld [vmem:[#allocation2 + $0x1c0] sm:$0xff]
        %v2104 = vld [vmem:[#allocation2 + $0x1c8] sm:$0xff]
        %v2105 = vld [vmem:[#allocation2 + $0x1d0] sm:$0xff]
        %v2106 = vld [vmem:[#allocation2 + $0x1d8] sm:$0xff]
        %v2107 = vld [vmem:[#allocation2 + $0x1e0] sm:$0xff]
        %v2108 = vld [vmem:[#allocation2 + $0x1e8] sm:$0xff]
        %v2109 = vld [vmem:[#allocation2 + $0x1f0] sm:$0xff]
        %v2110 = vld [vmem:[#allocation2 + $0x1f8] sm:$0xff]
        %v2111 = vmul.f32 %v508, %v1983
        %v2112 = vmul.f32 %v509, %v1984
        %v2113 = vmul.f32 %v510, %v1985
        %v2114 = vmul.f32 %v511, %v1986
        %v2115 = vmul.f32 %v512, %v1987
        %v2116 = vmul.f32 %v513, %v1988
        %v2117 = vmul.f32 %v514, %v1989
        %v2118 = vmul.f32 %v515, %v1990
        %v2119 = vmul.f32 %v516, %v1991
        %v2120 = vmul.f32 %v517, %v1992
        %v2121 = vmul.f32 %v518, %v1993
        %v2122 = vmul.f32 %v519, %v1994
        %v2123 = vmul.f32 %v520, %v1995
        %v2124 = vmul.f32 %v521, %v1996
        %v2125 = vmul.f32 %v522, %v1997
        %v2126 = vmul.f32 %v523, %v1998
        %v2127 = vmul.f32 %v524, %v1999
        %v2128 = vmul.f32 %v525, %v2000
        %v2129 = vmul.f32 %v526, %v2001
        %v2130 = vmul.f32 %v527, %v2002
        %v2131 = vmul.f32 %v528, %v2003
        %v2132 = vmul.f32 %v529, %v2004
        %v2133 = vmul.f32 %v530, %v2005
        %v2134 = vmul.f32 %v531, %v2006
        %v2135 = vmul.f32 %v532, %v2007
        %v2136 = vmul.f32 %v533, %v2008
        %v2137 = vmul.f32 %v534, %v2009
        %v2138 = vmul.f32 %v535, %v2010
        %v2139 = vmul.f32 %v536, %v2011
        %v2140 = vmul.f32 %v537, %v2012
        %v2141 = vmul.f32 %v538, %v2013
        %v2142 = vmul.f32 %v539, %v2014
        %v2143 = vmul.f32 %v540, %v2015
        %v2144 = vmul.f32 %v541, %v2016
        %v2145 = vmul.f32 %v542, %v2017
        %v2146 = vmul.f32 %v543, %v2018
        %v2147 = vmul.f32 %v544, %v2019
        %v2148 = vmul.f32 %v545, %v2020
        %v2149 = vmul.f32 %v546, %v2021
        %v2150 = vmul.f32 %v547, %v2022
        %v2151 = vmul.f32 %v548, %v2023
        %v2152 = vmul.f32 %v549, %v2024
        %v2153 = vmul.f32 %v550, %v2025
        %v2154 = vmul.f32 %v551, %v2026
        %v2155 = vmul.f32 %v552, %v2027
        %v2156 = vmul.f32 %v553, %v2028
        %v2157 = vmul.f32 %v554, %v2029
        %v2158 = vmul.f32 %v555, %v2030
        %v2159 = vmul.f32 %v556, %v2031
        %v2160 = vmul.f32 %v557, %v2032
        %v2161 = vmul.f32 %v558, %v2033
        %v2162 = vmul.f32 %v559, %v2034
        %v2163 = vmul.f32 %v560, %v2035
        %v2164 = vmul.f32 %v561, %v2036
        %v2165 = vmul.f32 %v562, %v2037
        %v2166 = vmul.f32 %v563, %v2038
        %v2167 = vmul.f32 %v564, %v2039
        %v2168 = vmul.f32 %v565, %v2040
        %v2169 = vmul.f32 %v566, %v2041
        %v2170 = vmul.f32 %v567, %v2042
        %v2171 = vmul.f32 %v568, %v2043
        %v2172 = vmul.f32 %v569, %v2044
        %v2173 = vmul.f32 %v570, %v2045
        %v2174 = vmul.f32 %v571, %v2046
        %v2175 = vadd.f32 %v2047, %v2111
        %v2176 = vadd.f32 %v2048, %v2112
        %v2177 = vadd.f32 %v2049, %v2113
        %v2178 = vadd.f32 %v2050, %v2114
        %v2179 = vadd.f32 %v2051, %v2115
        %v2180 = vadd.f32 %v2052, %v2116
        %v2181 = vadd.f32 %v2053, %v2117
        %v2182 = vadd.f32 %v2054, %v2118
        %v2183 = vadd.f32 %v2055, %v2119
        %v2184 = vadd.f32 %v2056, %v2120
        %v2185 = vadd.f32 %v2057, %v2121
        %v2186 = vadd.f32 %v2058, %v2122
        %v2187 = vadd.f32 %v2059, %v2123
        %v2188 = vadd.f32 %v2060, %v2124
        %v2189 = vadd.f32 %v2061, %v2125
        %v2190 = vadd.f32 %v2062, %v2126
        %v2191 = vadd.f32 %v2063, %v2127
        %v2192 = vadd.f32 %v2064, %v2128
        %v2193 = vadd.f32 %v2065, %v2129
        %v2194 = vadd.f32 %v2066, %v2130
        %v2195 = vadd.f32 %v2067, %v2131
        %v2196 = vadd.f32 %v2068, %v2132
        %v2197 = vadd.f32 %v2069, %v2133
        %v2198 = vadd.f32 %v2070, %v2134
        %v2199 = vadd.f32 %v2071, %v2135
        %v2200 = vadd.f32 %v2072, %v2136
        %v2201 = vadd.f32 %v2073, %v2137
        %v2202 = vadd.f32 %v2074, %v2138
        %v2203 = vadd.f32 %v2075, %v2139
        %v2204 = vadd.f32 %v2076, %v2140
        %v2205 = vadd.f32 %v2077, %v2141
        %v2206 = vadd.f32 %v2078, %v2142
        %v2207 = vadd.f32 %v2079, %v2143
        %v2208 = vadd.f32 %v2080, %v2144
        %v2209 = vadd.f32 %v2081, %v2145
        %v2210 = vadd.f32 %v2082, %v2146
        %v2211 = vadd.f32 %v2083, %v2147
        %v2212 = vadd.f32 %v2084, %v2148
        %v2213 = vadd.f32 %v2085, %v2149
        %v2214 = vadd.f32 %v2086, %v2150
        %v2215 = vadd.f32 %v2087, %v2151
        %v2216 = vadd.f32 %v2088, %v2152
        %v2217 = vadd.f32 %v2089, %v2153
        %v2218 = vadd.f32 %v2090, %v2154
        %v2219 = vadd.f32 %v2091, %v2155
        %v2220 = vadd.f32 %v2092, %v2156
        %v2221 = vadd.f32 %v2093, %v2157
        %v2222 = vadd.f32 %v2094, %v2158
        %v2223 = vadd.f32 %v2095, %v2159
        %v2224 = vadd.f32 %v2096, %v2160
        %v2225 = vadd.f32 %v2097, %v2161
        %v2226 = vadd.f32 %v2098, %v2162
        %v2227 = vadd.f32 %v2099, %v2163
        %v2228 = vadd.f32 %v2100, %v2164
        %v2229 = vadd.f32 %v2101, %v2165
        %v2230 = vadd.f32 %v2102, %v2166
        %v2231 = vadd.f32 %v2103, %v2167
        %v2232 = vadd.f32 %v2104, %v2168
        %v2233 = vadd.f32 %v2105, %v2169
        %v2234 = vadd.f32 %v2106, %v2170
        %v2235 = vadd.f32 %v2107, %v2171
        %v2236 = vadd.f32 %v2108, %v2172
        %v2237 = vadd.f32 %v2109, %v2173
        %v2238 = vadd.f32 %v2110, %v2174
        %vm2239 = vcmask 7168
        %2240 = vst.msk [vmem:[#allocation2] sm:$0xff] %vm2239, %v2175
        %2241 = vst.msk [vmem:[#allocation2 + $0x8] sm:$0xff] %vm2239, %v2176
        %2242 = vst.msk [vmem:[#allocation2 + $0x10] sm:$0xff] %vm2239, %v2177
        %2243 = vst.msk [vmem:[#allocation2 + $0x18] sm:$0xff] %vm2239, %v2178
        %2244 = vst.msk [vmem:[#allocation2 + $0x20] sm:$0xff] %vm2239, %v2179
        %2245 = vst.msk [vmem:[#allocation2 + $0x28] sm:$0xff] %vm2239, %v2180
        %2246 = vst.msk [vmem:[#allocation2 + $0x30] sm:$0xff] %vm2239, %v2181
        %2247 = vst.msk [vmem:[#allocation2 + $0x38] sm:$0xff] %vm2239, %v2182
        %2248 = vst.msk [vmem:[#allocation2 + $0x40] sm:$0xff] %vm2239, %v2183
        %2249 = vst.msk [vmem:[#allocation2 + $0x48] sm:$0xff] %vm2239, %v2184
        %2250 = vst.msk [vmem:[#allocation2 + $0x50] sm:$0xff] %vm2239, %v2185
        %2251 = vst.msk [vmem:[#allocation2 + $0x58] sm:$0xff] %vm2239, %v2186
        %2252 = vst.msk [vmem:[#allocation2 + $0x60] sm:$0xff] %vm2239, %v2187
        %2253 = vst.msk [vmem:[#allocation2 + $0x68] sm:$0xff] %vm2239, %v2188
        %2254 = vst.msk [vmem:[#allocation2 + $0x70] sm:$0xff] %vm2239, %v2189
        %2255 = vst.msk [vmem:[#allocation2 + $0x78] sm:$0xff] %vm2239, %v2190
        %2256 = vst.msk [vmem:[#allocation2 + $0x80] sm:$0xff] %vm2239, %v2191
        %2257 = vst.msk [vmem:[#allocation2 + $0x88] sm:$0xff] %vm2239, %v2192
        %2258 = vst.msk [vmem:[#allocation2 + $0x90] sm:$0xff] %vm2239, %v2193
        %2259 = vst.msk [vmem:[#allocation2 + $0x98] sm:$0xff] %vm2239, %v2194
        %2260 = vst.msk [vmem:[#allocation2 + $0xa0] sm:$0xff] %vm2239, %v2195
        %2261 = vst.msk [vmem:[#allocation2 + $0xa8] sm:$0xff] %vm2239, %v2196
        %2262 = vst.msk [vmem:[#allocation2 + $0xb0] sm:$0xff] %vm2239, %v2197
        %2263 = vst.msk [vmem:[#allocation2 + $0xb8] sm:$0xff] %vm2239, %v2198
        %2264 = vst.msk [vmem:[#allocation2 + $0xc0] sm:$0xff] %vm2239, %v2199
        %2265 = vst.msk [vmem:[#allocation2 + $0xc8] sm:$0xff] %vm2239, %v2200
        %2266 = vst.msk [vmem:[#allocation2 + $0xd0] sm:$0xff] %vm2239, %v2201
        %2267 = vst.msk [vmem:[#allocation2 + $0xd8] sm:$0xff] %vm2239, %v2202
        %2268 = vst.msk [vmem:[#allocation2 + $0xe0] sm:$0xff] %vm2239, %v2203
        %2269 = vst.msk [vmem:[#allocation2 + $0xe8] sm:$0xff] %vm2239, %v2204
        %2270 = vst.msk [vmem:[#allocation2 + $0xf0] sm:$0xff] %vm2239, %v2205
        %2271 = vst.msk [vmem:[#allocation2 + $0xf8] sm:$0xff] %vm2239, %v2206
        %2272 = vst.msk [vmem:[#allocation2 + $0x100] sm:$0xff] %vm2239, %v2207
        %2273 = vst.msk [vmem:[#allocation2 + $0x108] sm:$0xff] %vm2239, %v2208
        %2274 = vst.msk [vmem:[#allocation2 + $0x110] sm:$0xff] %vm2239, %v2209
        %2275 = vst.msk [vmem:[#allocation2 + $0x118] sm:$0xff] %vm2239, %v2210
        %2276 = vst.msk [vmem:[#allocation2 + $0x120] sm:$0xff] %vm2239, %v2211
        %2277 = vst.msk [vmem:[#allocation2 + $0x128] sm:$0xff] %vm2239, %v2212
        %2278 = vst.msk [vmem:[#allocation2 + $0x130] sm:$0xff] %vm2239, %v2213
        %2279 = vst.msk [vmem:[#allocation2 + $0x138] sm:$0xff] %vm2239, %v2214
        %2280 = vst.msk [vmem:[#allocation2 + $0x140] sm:$0xff] %vm2239, %v2215
        %2281 = vst.msk [vmem:[#allocation2 + $0x148] sm:$0xff] %vm2239, %v2216
        %2282 = vst.msk [vmem:[#allocation2 + $0x150] sm:$0xff] %vm2239, %v2217
        %2283 = vst.msk [vmem:[#allocation2 + $0x158] sm:$0xff] %vm2239, %v2218
        %2284 = vst.msk [vmem:[#allocation2 + $0x160] sm:$0xff] %vm2239, %v2219
        %2285 = vst.msk [vmem:[#allocation2 + $0x168] sm:$0xff] %vm2239, %v2220
        %2286 = vst.msk [vmem:[#allocation2 + $0x170] sm:$0xff] %vm2239, %v2221
        %2287 = vst.msk [vmem:[#allocation2 + $0x178] sm:$0xff] %vm2239, %v2222
        %2288 = vst.msk [vmem:[#allocation2 + $0x180] sm:$0xff] %vm2239, %v2223
        %2289 = vst.msk [vmem:[#allocation2 + $0x188] sm:$0xff] %vm2239, %v2224
        %2290 = vst.msk [vmem:[#allocation2 + $0x190] sm:$0xff] %vm2239, %v2225
        %2291 = vst.msk [vmem:[#allocation2 + $0x198] sm:$0xff] %vm2239, %v2226
        %2292 = vst.msk [vmem:[#allocation2 + $0x1a0] sm:$0xff] %vm2239, %v2227
        %2293 = vst.msk [vmem:[#allocation2 + $0x1a8] sm:$0xff] %vm2239, %v2228
        %2294 = vst.msk [vmem:[#allocation2 + $0x1b0] sm:$0xff] %vm2239, %v2229
        %2295 = vst.msk [vmem:[#allocation2 + $0x1b8] sm:$0xff] %vm2239, %v2230
        %2296 = vst.msk [vmem:[#allocation2 + $0x1c0] sm:$0xff] %vm2239, %v2231
        %2297 = vst.msk [vmem:[#allocation2 + $0x1c8] sm:$0xff] %vm2239, %v2232
        %2298 = vst.msk [vmem:[#allocation2 + $0x1d0] sm:$0xff] %vm2239, %v2233
        %2299 = vst.msk [vmem:[#allocation2 + $0x1d8] sm:$0xff] %vm2239, %v2234
        %2300 = vst.msk [vmem:[#allocation2 + $0x1e0] sm:$0xff] %vm2239, %v2235
        %2301 = vst.msk [vmem:[#allocation2 + $0x1e8] sm:$0xff] %vm2239, %v2236
        %2302 = vst.msk [vmem:[#allocation2 + $0x1f0] sm:$0xff] %vm2239, %v2237
        %2303 = vst.msk [vmem:[#allocation2 + $0x1f8] sm:$0xff] %vm2239, %v2238
        %vm2304 = vcmp.ne.s32.totalorder %v444, 6
        %vm2305 = vcmp.ne.s32.totalorder %v445, 6
        %vm2306 = vcmp.ne.s32.totalorder %v446, 6
        %vm2307 = vcmp.ne.s32.totalorder %v447, 6
        %vm2308 = vcmp.ne.s32.totalorder %v448, 6
        %vm2309 = vcmp.ne.s32.totalorder %v449, 6
        %vm2310 = vcmp.ne.s32.totalorder %v450, 6
        %vm2311 = vcmp.ne.s32.totalorder %v451, 6
        %vm2312 = vcmp.ne.s32.totalorder %v452, 6
        %vm2313 = vcmp.ne.s32.totalorder %v453, 6
        %vm2314 = vcmp.ne.s32.totalorder %v454, 6
        %vm2315 = vcmp.ne.s32.totalorder %v455, 6
        %vm2316 = vcmp.ne.s32.totalorder %v456, 6
        %vm2317 = vcmp.ne.s32.totalorder %v457, 6
        %vm2318 = vcmp.ne.s32.totalorder %v458, 6
        %vm2319 = vcmp.ne.s32.totalorder %v459, 6
        %vm2320 = vcmp.ne.s32.totalorder %v460, 6
        %vm2321 = vcmp.ne.s32.totalorder %v461, 6
        %vm2322 = vcmp.ne.s32.totalorder %v462, 6
        %vm2323 = vcmp.ne.s32.totalorder %v463, 6
        %vm2324 = vcmp.ne.s32.totalorder %v464, 6
        %vm2325 = vcmp.ne.s32.totalorder %v465, 6
        %vm2326 = vcmp.ne.s32.totalorder %v466, 6
        %vm2327 = vcmp.ne.s32.totalorder %v467, 6
        %vm2328 = vcmp.ne.s32.totalorder %v468, 6
        %vm2329 = vcmp.ne.s32.totalorder %v469, 6
        %vm2330 = vcmp.ne.s32.totalorder %v470, 6
        %vm2331 = vcmp.ne.s32.totalorder %v471, 6
        %vm2332 = vcmp.ne.s32.totalorder %v472, 6
        %vm2333 = vcmp.ne.s32.totalorder %v473, 6
        %vm2334 = vcmp.ne.s32.totalorder %v474, 6
        %vm2335 = vcmp.ne.s32.totalorder %v475, 6
        %vm2336 = vcmp.ne.s32.totalorder %v476, 6
        %vm2337 = vcmp.ne.s32.totalorder %v477, 6
        %vm2338 = vcmp.ne.s32.totalorder %v478, 6
        %vm2339 = vcmp.ne.s32.totalorder %v479, 6
        %vm2340 = vcmp.ne.s32.totalorder %v480, 6
        %vm2341 = vcmp.ne.s32.totalorder %v481, 6
        %vm2342 = vcmp.ne.s32.totalorder %v482, 6
        %vm2343 = vcmp.ne.s32.totalorder %v483, 6
        %vm2344 = vcmp.ne.s32.totalorder %v484, 6
        %vm2345 = vcmp.ne.s32.totalorder %v485, 6
        %vm2346 = vcmp.ne.s32.totalorder %v486, 6
        %vm2347 = vcmp.ne.s32.totalorder %v487, 6
        %vm2348 = vcmp.ne.s32.totalorder %v488, 6
        %vm2349 = vcmp.ne.s32.totalorder %v489, 6
        %vm2350 = vcmp.ne.s32.totalorder %v490, 6
        %vm2351 = vcmp.ne.s32.totalorder %v491, 6
        %vm2352 = vcmp.ne.s32.totalorder %v492, 6
        %vm2353 = vcmp.ne.s32.totalorder %v493, 6
        %vm2354 = vcmp.ne.s32.totalorder %v494, 6
        %vm2355 = vcmp.ne.s32.totalorder %v495, 6
        %vm2356 = vcmp.ne.s32.totalorder %v496, 6
        %vm2357 = vcmp.ne.s32.totalorder %v497, 6
        %vm2358 = vcmp.ne.s32.totalorder %v498, 6
        %vm2359 = vcmp.ne.s32.totalorder %v499, 6
        %vm2360 = vcmp.ne.s32.totalorder %v500, 6
        %vm2361 = vcmp.ne.s32.totalorder %v501, 6
        %vm2362 = vcmp.ne.s32.totalorder %v502, 6
        %vm2363 = vcmp.ne.s32.totalorder %v503, 6
        %vm2364 = vcmp.ne.s32.totalorder %v504, 6
        %vm2365 = vcmp.ne.s32.totalorder %v505, 6
        %vm2366 = vcmp.ne.s32.totalorder %v506, 6
        %vm2367 = vcmp.ne.s32.totalorder %v507, 6
        %vm2368 = vcmp.ge.f32.partialorder %v1729, %v575
        %vm2369 = vcmp.ge.f32.partialorder %v1732, %v578
        %vm2370 = vcmp.ge.f32.partialorder %v1735, %v581
        %vm2371 = vcmp.ge.f32.partialorder %v1738, %v584
        %vm2372 = vcmp.ge.f32.partialorder %v1741, %v587
        %vm2373 = vcmp.ge.f32.partialorder %v1744, %v590
        %vm2374 = vcmp.ge.f32.partialorder %v1747, %v593
        %vm2375 = vcmp.ge.f32.partialorder %v1750, %v596
        %vm2376 = vcmp.ge.f32.partialorder %v1753, %v599
        %vm2377 = vcmp.ge.f32.partialorder %v1756, %v602
        %vm2378 = vcmp.ge.f32.partialorder %v1759, %v605
        %vm2379 = vcmp.ge.f32.partialorder %v1762, %v608
        %vm2380 = vcmp.ge.f32.partialorder %v1765, %v611
        %vm2381 = vcmp.ge.f32.partialorder %v1768, %v614
        %vm2382 = vcmp.ge.f32.partialorder %v1771, %v617
        %vm2383 = vcmp.ge.f32.partialorder %v1774, %v620
        %vm2384 = vcmp.ge.f32.partialorder %v1777, %v623
        %vm2385 = vcmp.ge.f32.partialorder %v1780, %v626
        %vm2386 = vcmp.ge.f32.partialorder %v1783, %v629
        %vm2387 = vcmp.ge.f32.partialorder %v1786, %v632
        %vm2388 = vcmp.ge.f32.partialorder %v1789, %v635
        %vm2389 = vcmp.ge.f32.partialorder %v1792, %v638
        %vm2390 = vcmp.ge.f32.partialorder %v1795, %v641
        %vm2391 = vcmp.ge.f32.partialorder %v1798, %v644
        %vm2392 = vcmp.ge.f32.partialorder %v1801, %v647
        %vm2393 = vcmp.ge.f32.partialorder %v1804, %v650
        %vm2394 = vcmp.ge.f32.partialorder %v1807, %v653
        %vm2395 = vcmp.ge.f32.partialorder %v1810, %v656
        %vm2396 = vcmp.ge.f32.partialorder %v1813, %v659
        %vm2397 = vcmp.ge.f32.partialorder %v1816, %v662
        %vm2398 = vcmp.ge.f32.partialorder %v1819, %v665
        %vm2399 = vcmp.ge.f32.partialorder %v1822, %v668
        %vm2400 = vcmp.ge.f32.partialorder %v1825, %v671
        %vm2401 = vcmp.ge.f32.partialorder %v1828, %v674
        %vm2402 = vcmp.ge.f32.partialorder %v1831, %v677
        %vm2403 = vcmp.ge.f32.partialorder %v1834, %v680
        %vm2404 = vcmp.ge.f32.partialorder %v1837, %v683
        %vm2405 = vcmp.ge.f32.partialorder %v1840, %v686
        %vm2406 = vcmp.ge.f32.partialorder %v1843, %v689
        %vm2407 = vcmp.ge.f32.partialorder %v1846, %v692
        %vm2408 = vcmp.ge.f32.partialorder %v1849, %v695
        %vm2409 = vcmp.ge.f32.partialorder %v1852, %v698
        %vm2410 = vcmp.ge.f32.partialorder %v1855, %v701
        %vm2411 = vcmp.ge.f32.partialorder %v1858, %v704
        %vm2412 = vcmp.ge.f32.partialorder %v1861, %v707
        %vm2413 = vcmp.ge.f32.partialorder %v1864, %v710
        %vm2414 = vcmp.ge.f32.partialorder %v1867, %v713
        %vm2415 = vcmp.ge.f32.partialorder %v1870, %v716
        %vm2416 = vcmp.ge.f32.partialorder %v1873, %v719
        %vm2417 = vcmp.ge.f32.partialorder %v1876, %v722
        %vm2418 = vcmp.ge.f32.partialorder %v1879, %v725
        %vm2419 = vcmp.ge.f32.partialorder %v1882, %v728
        %vm2420 = vcmp.ge.f32.partialorder %v1885, %v731
        %vm2421 = vcmp.ge.f32.partialorder %v1888, %v734
        %vm2422 = vcmp.ge.f32.partialorder %v1891, %v737
        %vm2423 = vcmp.ge.f32.partialorder %v1894, %v740
        %vm2424 = vcmp.ge.f32.partialorder %v1897, %v743
        %vm2425 = vcmp.ge.f32.partialorder %v1900, %v746
        %vm2426 = vcmp.ge.f32.partialorder %v1903, %v749
        %vm2427 = vcmp.ge.f32.partialorder %v1906, %v752
        %vm2428 = vcmp.ge.f32.partialorder %v1909, %v755
        %vm2429 = vcmp.ge.f32.partialorder %v1912, %v758
        %vm2430 = vcmp.ge.f32.partialorder %v1915, %v761
        %vm2431 = vcmp.ge.f32.partialorder %v1918, %v764
        %vm2432 = vmand %vm2304, %vm2368
        %vm2433 = vmand %vm2305, %vm2369
        %vm2434 = vmand %vm2306, %vm2370
        %vm2435 = vmand %vm2307, %vm2371
        %vm2436 = vmand %vm2308, %vm2372
        %vm2437 = vmand %vm2309, %vm2373
        %vm2438 = vmand %vm2310, %vm2374
        %vm2439 = vmand %vm2311, %vm2375
        %vm2440 = vmand %vm2312, %vm2376
        %vm2441 = vmand %vm2313, %vm2377
        %vm2442 = vmand %vm2314, %vm2378
        %vm2443 = vmand %vm2315, %vm2379
        %vm2444 = vmand %vm2316, %vm2380
        %vm2445 = vmand %vm2317, %vm2381
        %vm2446 = vmand %vm2318, %vm2382
        %vm2447 = vmand %vm2319, %vm2383
        %vm2448 = vmand %vm2320, %vm2384
        %vm2449 = vmand %vm2321, %vm2385
        %vm2450 = vmand %vm2322, %vm2386
        %vm2451 = vmand %vm2323, %vm2387
        %vm2452 = vmand %vm2324, %vm2388
        %vm2453 = vmand %vm2325, %vm2389
        %vm2454 = vmand %vm2326, %vm2390
        %vm2455 = vmand %vm2327, %vm2391
        %vm2456 = vmand %vm2328, %vm2392
        %vm2457 = vmand %vm2329, %vm2393
        %vm2458 = vmand %vm2330, %vm2394
        %vm2459 = vmand %vm2331, %vm2395
        %vm2460 = vmand %vm2332, %vm2396
        %vm2461 = vmand %vm2333, %vm2397
        %vm2462 = vmand %vm2334, %vm2398
        %vm2463 = vmand %vm2335, %vm2399
        %vm2464 = vmand %vm2336, %vm2400
        %vm2465 = vmand %vm2337, %vm2401
        %vm2466 = vmand %vm2338, %vm2402
        %vm2467 = vmand %vm2339, %vm2403
        %vm2468 = vmand %vm2340, %vm2404
        %vm2469 = vmand %vm2341, %vm2405
        %vm2470 = vmand %vm2342, %vm2406
        %vm2471 = vmand %vm2343, %vm2407
        %vm2472 = vmand %vm2344, %vm2408
        %vm2473 = vmand %vm2345, %vm2409
        %vm2474 = vmand %vm2346, %vm2410
        %vm2475 = vmand %vm2347, %vm2411
        %vm2476 = vmand %vm2348, %vm2412
        %vm2477 = vmand %vm2349, %vm2413
        %vm2478 = vmand %vm2350, %vm2414
        %vm2479 = vmand %vm2351, %vm2415
        %vm2480 = vmand %vm2352, %vm2416
        %vm2481 = vmand %vm2353, %vm2417
        %vm2482 = vmand %vm2354, %vm2418
        %vm2483 = vmand %vm2355, %vm2419
        %vm2484 = vmand %vm2356, %vm2420
        %vm2485 = vmand %vm2357, %vm2421
        %vm2486 = vmand %vm2358, %vm2422
        %vm2487 = vmand %vm2359, %vm2423
        %vm2488 = vmand %vm2360, %vm2424
        %vm2489 = vmand %vm2361, %vm2425
        %vm2490 = vmand %vm2362, %vm2426
        %vm2491 = vmand %vm2363, %vm2427
        %vm2492 = vmand %vm2364, %vm2428
        %vm2493 = vmand %vm2365, %vm2429
        %vm2494 = vmand %vm2366, %vm2430
        %vm2495 = vmand %vm2367, %vm2431
        %v2496 = vld [vmem:[#allocation3] sm:$0xff]
        %v2497 = vld [vmem:[#allocation3 + $0x8] sm:$0xff]
        %v2498 = vld [vmem:[#allocation3 + $0x10] sm:$0xff]
        %v2499 = vld [vmem:[#allocation3 + $0x18] sm:$0xff]
        %v2500 = vld [vmem:[#allocation3 + $0x20] sm:$0xff]
        %v2501 = vld [vmem:[#allocation3 + $0x28] sm:$0xff]
        %v2502 = vld [vmem:[#allocation3 + $0x30] sm:$0xff]
        %v2503 = vld [vmem:[#allocation3 + $0x38] sm:$0xff]
        %v2504 = vld [vmem:[#allocation3 + $0x40] sm:$0xff]
        %v2505 = vld [vmem:[#allocation3 + $0x48] sm:$0xff]
        %v2506 = vld [vmem:[#allocation3 + $0x50] sm:$0xff]
        %v2507 = vld [vmem:[#allocation3 + $0x58] sm:$0xff]
        %v2508 = vld [vmem:[#allocation3 + $0x60] sm:$0xff]
        %v2509 = vld [vmem:[#allocation3 + $0x68] sm:$0xff]
        %v2510 = vld [vmem:[#allocation3 + $0x70] sm:$0xff]
        %v2511 = vld [vmem:[#allocation3 + $0x78] sm:$0xff]
        %v2512 = vld [vmem:[#allocation3 + $0x80] sm:$0xff]
        %v2513 = vld [vmem:[#allocation3 + $0x88] sm:$0xff]
        %v2514 = vld [vmem:[#allocation3 + $0x90] sm:$0xff]
        %v2515 = vld [vmem:[#allocation3 + $0x98] sm:$0xff]
        %v2516 = vld [vmem:[#allocation3 + $0xa0] sm:$0xff]
        %v2517 = vld [vmem:[#allocation3 + $0xa8] sm:$0xff]
        %v2518 = vld [vmem:[#allocation3 + $0xb0] sm:$0xff]
        %v2519 = vld [vmem:[#allocation3 + $0xb8] sm:$0xff]
        %v2520 = vld [vmem:[#allocation3 + $0xc0] sm:$0xff]
        %v2521 = vld [vmem:[#allocation3 + $0xc8] sm:$0xff]
        %v2522 = vld [vmem:[#allocation3 + $0xd0] sm:$0xff]
        %v2523 = vld [vmem:[#allocation3 + $0xd8] sm:$0xff]
        %v2524 = vld [vmem:[#allocation3 + $0xe0] sm:$0xff]
        %v2525 = vld [vmem:[#allocation3 + $0xe8] sm:$0xff]
        %v2526 = vld [vmem:[#allocation3 + $0xf0] sm:$0xff]
        %v2527 = vld [vmem:[#allocation3 + $0xf8] sm:$0xff]
        %v2528 = vld [vmem:[#allocation3 + $0x100] sm:$0xff]
        %v2529 = vld [vmem:[#allocation3 + $0x108] sm:$0xff]
        %v2530 = vld [vmem:[#allocation3 + $0x110] sm:$0xff]
        %v2531 = vld [vmem:[#allocation3 + $0x118] sm:$0xff]
        %v2532 = vld [vmem:[#allocation3 + $0x120] sm:$0xff]
        %v2533 = vld [vmem:[#allocation3 + $0x128] sm:$0xff]
        %v2534 = vld [vmem:[#allocation3 + $0x130] sm:$0xff]
        %v2535 = vld [vmem:[#allocation3 + $0x138] sm:$0xff]
        %v2536 = vld [vmem:[#allocation3 + $0x140] sm:$0xff]
        %v2537 = vld [vmem:[#allocation3 + $0x148] sm:$0xff]
        %v2538 = vld [vmem:[#allocation3 + $0x150] sm:$0xff]
        %v2539 = vld [vmem:[#allocation3 + $0x158] sm:$0xff]
        %v2540 = vld [vmem:[#allocation3 + $0x160] sm:$0xff]
        %v2541 = vld [vmem:[#allocation3 + $0x168] sm:$0xff]
        %v2542 = vld [vmem:[#allocation3 + $0x170] sm:$0xff]
        %v2543 = vld [vmem:[#allocation3 + $0x178] sm:$0xff]
        %v2544 = vld [vmem:[#allocation3 + $0x180] sm:$0xff]
        %v2545 = vld [vmem:[#allocation3 + $0x188] sm:$0xff]
        %v2546 = vld [vmem:[#allocation3 + $0x190] sm:$0xff]
        %v2547 = vld [vmem:[#allocation3 + $0x198] sm:$0xff]
        %v2548 = vld [vmem:[#allocation3 + $0x1a0] sm:$0xff]
        %v2549 = vld [vmem:[#allocation3 + $0x1a8] sm:$0xff]
        %v2550 = vld [vmem:[#allocation3 + $0x1b0] sm:$0xff]
        %v2551 = vld [vmem:[#allocation3 + $0x1b8] sm:$0xff]
        %v2552 = vld [vmem:[#allocation3 + $0x1c0] sm:$0xff]
        %v2553 = vld [vmem:[#allocation3 + $0x1c8] sm:$0xff]
        %v2554 = vld [vmem:[#allocation3 + $0x1d0] sm:$0xff]
        %v2555 = vld [vmem:[#allocation3 + $0x1d8] sm:$0xff]
        %v2556 = vld [vmem:[#allocation3 + $0x1e0] sm:$0xff]
        %v2557 = vld [vmem:[#allocation3 + $0x1e8] sm:$0xff]
        %v2558 = vld [vmem:[#allocation3 + $0x1f0] sm:$0xff]
        %v2559 = vld [vmem:[#allocation3 + $0x1f8] sm:$0xff]
        %v2560 = vsel %vm2432, 1.0, 0.0
        %v2561 = vsel %vm2433, 1.0, 0.0
        %v2562 = vsel %vm2434, 1.0, 0.0
        %v2563 = vsel %vm2435, 1.0, 0.0
        %v2564 = vsel %vm2436, 1.0, 0.0
        %v2565 = vsel %vm2437, 1.0, 0.0
        %v2566 = vsel %vm2438, 1.0, 0.0
        %v2567 = vsel %vm2439, 1.0, 0.0
        %v2568 = vsel %vm2440, 1.0, 0.0
        %v2569 = vsel %vm2441, 1.0, 0.0
        %v2570 = vsel %vm2442, 1.0, 0.0
        %v2571 = vsel %vm2443, 1.0, 0.0
        %v2572 = vsel %vm2444, 1.0, 0.0
        %v2573 = vsel %vm2445, 1.0, 0.0
        %v2574 = vsel %vm2446, 1.0, 0.0
        %v2575 = vsel %vm2447, 1.0, 0.0
        %v2576 = vsel %vm2448, 1.0, 0.0
        %v2577 = vsel %vm2449, 1.0, 0.0
        %v2578 = vsel %vm2450, 1.0, 0.0
        %v2579 = vsel %vm2451, 1.0, 0.0
        %v2580 = vsel %vm2452, 1.0, 0.0
        %v2581 = vsel %vm2453, 1.0, 0.0
        %v2582 = vsel %vm2454, 1.0, 0.0
        %v2583 = vsel %vm2455, 1.0, 0.0
        %v2584 = vsel %vm2456, 1.0, 0.0
        %v2585 = vsel %vm2457, 1.0, 0.0
        %v2586 = vsel %vm2458, 1.0, 0.0
        %v2587 = vsel %vm2459, 1.0, 0.0
        %v2588 = vsel %vm2460, 1.0, 0.0
        %v2589 = vsel %vm2461, 1.0, 0.0
        %v2590 = vsel %vm2462, 1.0, 0.0
        %v2591 = vsel %vm2463, 1.0, 0.0
        %v2592 = vsel %vm2464, 1.0, 0.0
        %v2593 = vsel %vm2465, 1.0, 0.0
        %v2594 = vsel %vm2466, 1.0, 0.0
        %v2595 = vsel %vm2467, 1.0, 0.0
        %v2596 = vsel %vm2468, 1.0, 0.0
        %v2597 = vsel %vm2469, 1.0, 0.0
        %v2598 = vsel %vm2470, 1.0, 0.0
        %v2599 = vsel %vm2471, 1.0, 0.0
        %v2600 = vsel %vm2472, 1.0, 0.0
        %v2601 = vsel %vm2473, 1.0, 0.0
        %v2602 = vsel %vm2474, 1.0, 0.0
        %v2603 = vsel %vm2475, 1.0, 0.0
        %v2604 = vsel %vm2476, 1.0, 0.0
        %v2605 = vsel %vm2477, 1.0, 0.0
        %v2606 = vsel %vm2478, 1.0, 0.0
        %v2607 = vsel %vm2479, 1.0, 0.0
        %v2608 = vsel %vm2480, 1.0, 0.0
        %v2609 = vsel %vm2481, 1.0, 0.0
        %v2610 = vsel %vm2482, 1.0, 0.0
        %v2611 = vsel %vm2483, 1.0, 0.0
        %v2612 = vsel %vm2484, 1.0, 0.0
        %v2613 = vsel %vm2485, 1.0, 0.0
        %v2614 = vsel %vm2486, 1.0, 0.0
        %v2615 = vsel %vm2487, 1.0, 0.0
        %v2616 = vsel %vm2488, 1.0, 0.0
        %v2617 = vsel %vm2489, 1.0, 0.0
        %v2618 = vsel %vm2490, 1.0, 0.0
        %v2619 = vsel %vm2491, 1.0, 0.0
        %v2620 = vsel %vm2492, 1.0, 0.0
        %v2621 = vsel %vm2493, 1.0, 0.0
        %v2622 = vsel %vm2494, 1.0, 0.0
        %v2623 = vsel %vm2495, 1.0, 0.0
        %v2624 = vadd.f32 %v2496, %v2560
        %v2625 = vadd.f32 %v2497, %v2561
        %v2626 = vadd.f32 %v2498, %v2562
        %v2627 = vadd.f32 %v2499, %v2563
        %v2628 = vadd.f32 %v2500, %v2564
        %v2629 = vadd.f32 %v2501, %v2565
        %v2630 = vadd.f32 %v2502, %v2566
        %v2631 = vadd.f32 %v2503, %v2567
        %v2632 = vadd.f32 %v2504, %v2568
        %v2633 = vadd.f32 %v2505, %v2569
        %v2634 = vadd.f32 %v2506, %v2570
        %v2635 = vadd.f32 %v2507, %v2571
        %v2636 = vadd.f32 %v2508, %v2572
        %v2637 = vadd.f32 %v2509, %v2573
        %v2638 = vadd.f32 %v2510, %v2574
        %v2639 = vadd.f32 %v2511, %v2575
        %v2640 = vadd.f32 %v2512, %v2576
        %v2641 = vadd.f32 %v2513, %v2577
        %v2642 = vadd.f32 %v2514, %v2578
        %v2643 = vadd.f32 %v2515, %v2579
        %v2644 = vadd.f32 %v2516, %v2580
        %v2645 = vadd.f32 %v2517, %v2581
        %v2646 = vadd.f32 %v2518, %v2582
        %v2647 = vadd.f32 %v2519, %v2583
        %v2648 = vadd.f32 %v2520, %v2584
        %v2649 = vadd.f32 %v2521, %v2585
        %v2650 = vadd.f32 %v2522, %v2586
        %v2651 = vadd.f32 %v2523, %v2587
        %v2652 = vadd.f32 %v2524, %v2588
        %v2653 = vadd.f32 %v2525, %v2589
        %v2654 = vadd.f32 %v2526, %v2590
        %v2655 = vadd.f32 %v2527, %v2591
        %v2656 = vadd.f32 %v2528, %v2592
        %v2657 = vadd.f32 %v2529, %v2593
        %v2658 = vadd.f32 %v2530, %v2594
        %v2659 = vadd.f32 %v2531, %v2595
        %v2660 = vadd.f32 %v2532, %v2596
        %v2661 = vadd.f32 %v2533, %v2597
        %v2662 = vadd.f32 %v2534, %v2598
        %v2663 = vadd.f32 %v2535, %v2599
        %v2664 = vadd.f32 %v2536, %v2600
        %v2665 = vadd.f32 %v2537, %v2601
        %v2666 = vadd.f32 %v2538, %v2602
        %v2667 = vadd.f32 %v2539, %v2603
        %v2668 = vadd.f32 %v2540, %v2604
        %v2669 = vadd.f32 %v2541, %v2605
        %v2670 = vadd.f32 %v2542, %v2606
        %v2671 = vadd.f32 %v2543, %v2607
        %v2672 = vadd.f32 %v2544, %v2608
        %v2673 = vadd.f32 %v2545, %v2609
        %v2674 = vadd.f32 %v2546, %v2610
        %v2675 = vadd.f32 %v2547, %v2611
        %v2676 = vadd.f32 %v2548, %v2612
        %v2677 = vadd.f32 %v2549, %v2613
        %v2678 = vadd.f32 %v2550, %v2614
        %v2679 = vadd.f32 %v2551, %v2615
        %v2680 = vadd.f32 %v2552, %v2616
        %v2681 = vadd.f32 %v2553, %v2617
        %v2682 = vadd.f32 %v2554, %v2618
        %v2683 = vadd.f32 %v2555, %v2619
        %v2684 = vadd.f32 %v2556, %v2620
        %v2685 = vadd.f32 %v2557, %v2621
        %v2686 = vadd.f32 %v2558, %v2622
        %v2687 = vadd.f32 %v2559, %v2623
        %2688 = vst.msk [vmem:[#allocation3] sm:$0xff] %vm2239, %v2624
        %2689 = vst.msk [vmem:[#allocation3 + $0x8] sm:$0xff] %vm2239, %v2625
        %2690 = vst.msk [vmem:[#allocation3 + $0x10] sm:$0xff] %vm2239, %v2626
        %2691 = vst.msk [vmem:[#allocation3 + $0x18] sm:$0xff] %vm2239, %v2627
        %2692 = vst.msk [vmem:[#allocation3 + $0x20] sm:$0xff] %vm2239, %v2628
        %2693 = vst.msk [vmem:[#allocation3 + $0x28] sm:$0xff] %vm2239, %v2629
        %2694 = vst.msk [vmem:[#allocation3 + $0x30] sm:$0xff] %vm2239, %v2630
        %2695 = vst.msk [vmem:[#allocation3 + $0x38] sm:$0xff] %vm2239, %v2631
        %2696 = vst.msk [vmem:[#allocation3 + $0x40] sm:$0xff] %vm2239, %v2632
        %2697 = vst.msk [vmem:[#allocation3 + $0x48] sm:$0xff] %vm2239, %v2633
        %2698 = vst.msk [vmem:[#allocation3 + $0x50] sm:$0xff] %vm2239, %v2634
        %2699 = vst.msk [vmem:[#allocation3 + $0x58] sm:$0xff] %vm2239, %v2635
        %2700 = vst.msk [vmem:[#allocation3 + $0x60] sm:$0xff] %vm2239, %v2636
        %2701 = vst.msk [vmem:[#allocation3 + $0x68] sm:$0xff] %vm2239, %v2637
        %2702 = vst.msk [vmem:[#allocation3 + $0x70] sm:$0xff] %vm2239, %v2638
        %2703 = vst.msk [vmem:[#allocation3 + $0x78] sm:$0xff] %vm2239, %v2639
        %2704 = vst.msk [vmem:[#allocation3 + $0x80] sm:$0xff] %vm2239, %v2640
        %2705 = vst.msk [vmem:[#allocation3 + $0x88] sm:$0xff] %vm2239, %v2641
        %2706 = vst.msk [vmem:[#allocation3 + $0x90] sm:$0xff] %vm2239, %v2642
        %2707 = vst.msk [vmem:[#allocation3 + $0x98] sm:$0xff] %vm2239, %v2643
        %2708 = vst.msk [vmem:[#allocation3 + $0xa0] sm:$0xff] %vm2239, %v2644
        %2709 = vst.msk [vmem:[#allocation3 + $0xa8] sm:$0xff] %vm2239, %v2645
        %2710 = vst.msk [vmem:[#allocation3 + $0xb0] sm:$0xff] %vm2239, %v2646
        %2711 = vst.msk [vmem:[#allocation3 + $0xb8] sm:$0xff] %vm2239, %v2647
        %2712 = vst.msk [vmem:[#allocation3 + $0xc0] sm:$0xff] %vm2239, %v2648
        %2713 = vst.msk [vmem:[#allocation3 + $0xc8] sm:$0xff] %vm2239, %v2649
        %2714 = vst.msk [vmem:[#allocation3 + $0xd0] sm:$0xff] %vm2239, %v2650
        %2715 = vst.msk [vmem:[#allocation3 + $0xd8] sm:$0xff] %vm2239, %v2651
        %2716 = vst.msk [vmem:[#allocation3 + $0xe0] sm:$0xff] %vm2239, %v2652
        %2717 = vst.msk [vmem:[#allocation3 + $0xe8] sm:$0xff] %vm2239, %v2653
        %2718 = vst.msk [vmem:[#allocation3 + $0xf0] sm:$0xff] %vm2239, %v2654
        %2719 = vst.msk [vmem:[#allocation3 + $0xf8] sm:$0xff] %vm2239, %v2655
        %2720 = vst.msk [vmem:[#allocation3 + $0x100] sm:$0xff] %vm2239, %v2656
        %2721 = vst.msk [vmem:[#allocation3 + $0x108] sm:$0xff] %vm2239, %v2657
        %2722 = vst.msk [vmem:[#allocation3 + $0x110] sm:$0xff] %vm2239, %v2658
        %2723 = vst.msk [vmem:[#allocation3 + $0x118] sm:$0xff] %vm2239, %v2659
        %2724 = vst.msk [vmem:[#allocation3 + $0x120] sm:$0xff] %vm2239, %v2660
        %2725 = vst.msk [vmem:[#allocation3 + $0x128] sm:$0xff] %vm2239, %v2661
        %2726 = vst.msk [vmem:[#allocation3 + $0x130] sm:$0xff] %vm2239, %v2662
        %2727 = vst.msk [vmem:[#allocation3 + $0x138] sm:$0xff] %vm2239, %v2663
        %2728 = vst.msk [vmem:[#allocation3 + $0x140] sm:$0xff] %vm2239, %v2664
        %2729 = vst.msk [vmem:[#allocation3 + $0x148] sm:$0xff] %vm2239, %v2665
        %2730 = vst.msk [vmem:[#allocation3 + $0x150] sm:$0xff] %vm2239, %v2666
        %2731 = vst.msk [vmem:[#allocation3 + $0x158] sm:$0xff] %vm2239, %v2667
        %2732 = vst.msk [vmem:[#allocation3 + $0x160] sm:$0xff] %vm2239, %v2668
        %2733 = vst.msk [vmem:[#allocation3 + $0x168] sm:$0xff] %vm2239, %v2669
        %2734 = vst.msk [vmem:[#allocation3 + $0x170] sm:$0xff] %vm2239, %v2670
        %2735 = vst.msk [vmem:[#allocation3 + $0x178] sm:$0xff] %vm2239, %v2671
        %2736 = vst.msk [vmem:[#allocation3 + $0x180] sm:$0xff] %vm2239, %v2672
        %2737 = vst.msk [vmem:[#allocation3 + $0x188] sm:$0xff] %vm2239, %v2673
        %2738 = vst.msk [vmem:[#allocation3 + $0x190] sm:$0xff] %vm2239, %v2674
        %2739 = vst.msk [vmem:[#allocation3 + $0x198] sm:$0xff] %vm2239, %v2675
        %2740 = vst.msk [vmem:[#allocation3 + $0x1a0] sm:$0xff] %vm2239, %v2676
        %2741 = vst.msk [vmem:[#allocation3 + $0x1a8] sm:$0xff] %vm2239, %v2677
        %2742 = vst.msk [vmem:[#allocation3 + $0x1b0] sm:$0xff] %vm2239, %v2678
        %2743 = vst.msk [vmem:[#allocation3 + $0x1b8] sm:$0xff] %vm2239, %v2679
        %2744 = vst.msk [vmem:[#allocation3 + $0x1c0] sm:$0xff] %vm2239, %v2680
        %2745 = vst.msk [vmem:[#allocation3 + $0x1c8] sm:$0xff] %vm2239, %v2681
        %2746 = vst.msk [vmem:[#allocation3 + $0x1d0] sm:$0xff] %vm2239, %v2682
        %2747 = vst.msk [vmem:[#allocation3 + $0x1d8] sm:$0xff] %vm2239, %v2683
        %2748 = vst.msk [vmem:[#allocation3 + $0x1e0] sm:$0xff] %vm2239, %v2684
        %2749 = vst.msk [vmem:[#allocation3 + $0x1e8] sm:$0xff] %vm2239, %v2685
        %2750 = vst.msk [vmem:[#allocation3 + $0x1f0] sm:$0xff] %vm2239, %v2686
        %2751 = vst.msk [vmem:[#allocation3 + $0x1f8] sm:$0xff] %vm2239, %v2687
        // Predicated region
        $region37: #{tpu_custom_call.1} parent=31 // pred_check
          %p2752 = pneg %p247
        $region38: #{tpu_custom_call.1} parent=31 // pred_check_branch
          %2754 = sbr.rel (%p2752) target = $region40
        $region39: #{tpu_custom_call.1} parent=31 // pred_region
          %v2755 = vld [vmem:[#allocation2] sm:$0xff]
          %v2756 = vld [vmem:[#allocation2 + $0x8] sm:$0xff]
          %v2757 = vld [vmem:[#allocation2 + $0x10] sm:$0xff]
          %v2758 = vld [vmem:[#allocation2 + $0x18] sm:$0xff]
          %v2759 = vld [vmem:[#allocation2 + $0x20] sm:$0xff]
          %v2760 = vld [vmem:[#allocation2 + $0x28] sm:$0xff]
          %v2761 = vld [vmem:[#allocation2 + $0x30] sm:$0xff]
          %v2762 = vld [vmem:[#allocation2 + $0x38] sm:$0xff]
          %v2763 = vld [vmem:[#allocation2 + $0x40] sm:$0xff]
          %v2764 = vld [vmem:[#allocation2 + $0x48] sm:$0xff]
          %v2765 = vld [vmem:[#allocation2 + $0x50] sm:$0xff]
          %v2766 = vld [vmem:[#allocation2 + $0x58] sm:$0xff]
          %v2767 = vld [vmem:[#allocation2 + $0x60] sm:$0xff]
          %v2768 = vld [vmem:[#allocation2 + $0x68] sm:$0xff]
          %v2769 = vld [vmem:[#allocation2 + $0x70] sm:$0xff]
          %v2770 = vld [vmem:[#allocation2 + $0x78] sm:$0xff]
          %v2771 = vld [vmem:[#allocation2 + $0x80] sm:$0xff]
          %v2772 = vld [vmem:[#allocation2 + $0x88] sm:$0xff]
          %v2773 = vld [vmem:[#allocation2 + $0x90] sm:$0xff]
          %v2774 = vld [vmem:[#allocation2 + $0x98] sm:$0xff]
          %v2775 = vld [vmem:[#allocation2 + $0xa0] sm:$0xff]
          %v2776 = vld [vmem:[#allocation2 + $0xa8] sm:$0xff]
          %v2777 = vld [vmem:[#allocation2 + $0xb0] sm:$0xff]
          %v2778 = vld [vmem:[#allocation2 + $0xb8] sm:$0xff]
          %v2779 = vld [vmem:[#allocation2 + $0xc0] sm:$0xff]
          %v2780 = vld [vmem:[#allocation2 + $0xc8] sm:$0xff]
          %v2781 = vld [vmem:[#allocation2 + $0xd0] sm:$0xff]
          %v2782 = vld [vmem:[#allocation2 + $0xd8] sm:$0xff]
          %v2783 = vld [vmem:[#allocation2 + $0xe0] sm:$0xff]
          %v2784 = vld [vmem:[#allocation2 + $0xe8] sm:$0xff]
          %v2785 = vld [vmem:[#allocation2 + $0xf0] sm:$0xff]
          %v2786 = vld [vmem:[#allocation2 + $0xf8] sm:$0xff]
          %v2787 = vld [vmem:[#allocation2 + $0x100] sm:$0xff]
          %v2788 = vld [vmem:[#allocation2 + $0x108] sm:$0xff]
          %v2789 = vld [vmem:[#allocation2 + $0x110] sm:$0xff]
          %v2790 = vld [vmem:[#allocation2 + $0x118] sm:$0xff]
          %v2791 = vld [vmem:[#allocation2 + $0x120] sm:$0xff]
          %v2792 = vld [vmem:[#allocation2 + $0x128] sm:$0xff]
          %v2793 = vld [vmem:[#allocation2 + $0x130] sm:$0xff]
          %v2794 = vld [vmem:[#allocation2 + $0x138] sm:$0xff]
          %v2795 = vld [vmem:[#allocation2 + $0x140] sm:$0xff]
          %v2796 = vld [vmem:[#allocation2 + $0x148] sm:$0xff]
          %v2797 = vld [vmem:[#allocation2 + $0x150] sm:$0xff]
          %v2798 = vld [vmem:[#allocation2 + $0x158] sm:$0xff]
          %v2799 = vld [vmem:[#allocation2 + $0x160] sm:$0xff]
          %v2800 = vld [vmem:[#allocation2 + $0x168] sm:$0xff]
          %v2801 = vld [vmem:[#allocation2 + $0x170] sm:$0xff]
          %v2802 = vld [vmem:[#allocation2 + $0x178] sm:$0xff]
          %v2803 = vld [vmem:[#allocation2 + $0x180] sm:$0xff]
          %v2804 = vld [vmem:[#allocation2 + $0x188] sm:$0xff]
          %v2805 = vld [vmem:[#allocation2 + $0x190] sm:$0xff]
          %v2806 = vld [vmem:[#allocation2 + $0x198] sm:$0xff]
          %v2807 = vld [vmem:[#allocation2 + $0x1a0] sm:$0xff]
          %v2808 = vld [vmem:[#allocation2 + $0x1a8] sm:$0xff]
          %v2809 = vld [vmem:[#allocation2 + $0x1b0] sm:$0xff]
          %v2810 = vld [vmem:[#allocation2 + $0x1b8] sm:$0xff]
          %v2811 = vld [vmem:[#allocation2 + $0x1c0] sm:$0xff]
          %v2812 = vld [vmem:[#allocation2 + $0x1c8] sm:$0xff]
          %v2813 = vld [vmem:[#allocation2 + $0x1d0] sm:$0xff]
          %v2814 = vld [vmem:[#allocation2 + $0x1d8] sm:$0xff]
          %v2815 = vld [vmem:[#allocation2 + $0x1e0] sm:$0xff]
          %v2816 = vld [vmem:[#allocation2 + $0x1e8] sm:$0xff]
          %v2817 = vld [vmem:[#allocation2 + $0x1f0] sm:$0xff]
          %v2818 = vld [vmem:[#allocation2 + $0x1f8] sm:$0xff]
          %v2819 = vsel %vm2239, %v2755, 0.0
          %v2820 = vsel %vm2239, %v2756, 0.0
          %v2821 = vadd.f32 %v2819, %v2820
          %v2822 = vsel %vm2239, %v2757, 0.0
          %v2823 = vadd.f32 %v2821, %v2822
          %v2824 = vsel %vm2239, %v2758, 0.0
          %v2825 = vadd.f32 %v2823, %v2824
          %v2826 = vsel %vm2239, %v2759, 0.0
          %v2827 = vadd.f32 %v2825, %v2826
          %v2828 = vsel %vm2239, %v2760, 0.0
          %v2829 = vadd.f32 %v2827, %v2828
          %v2830 = vsel %vm2239, %v2761, 0.0
          %v2831 = vadd.f32 %v2829, %v2830
          %v2832 = vsel %vm2239, %v2762, 0.0
          %v2833 = vadd.f32 %v2831, %v2832
          %v2834 = vsel %vm2239, %v2763, 0.0
          %v2835 = vadd.f32 %v2833, %v2834
          %v2836 = vsel %vm2239, %v2764, 0.0
          %v2837 = vadd.f32 %v2835, %v2836
          %v2838 = vsel %vm2239, %v2765, 0.0
          %v2839 = vadd.f32 %v2837, %v2838
          %v2840 = vsel %vm2239, %v2766, 0.0
          %v2841 = vadd.f32 %v2839, %v2840
          %v2842 = vsel %vm2239, %v2767, 0.0
          %v2843 = vadd.f32 %v2841, %v2842
          %v2844 = vsel %vm2239, %v2768, 0.0
          %v2845 = vadd.f32 %v2843, %v2844
          %v2846 = vsel %vm2239, %v2769, 0.0
          %v2847 = vadd.f32 %v2845, %v2846
          %v2848 = vsel %vm2239, %v2770, 0.0
          %v2849 = vadd.f32 %v2847, %v2848
          %v2850 = vsel %vm2239, %v2771, 0.0
          %v2851 = vadd.f32 %v2849, %v2850
          %v2852 = vsel %vm2239, %v2772, 0.0
          %v2853 = vadd.f32 %v2851, %v2852
          %v2854 = vsel %vm2239, %v2773, 0.0
          %v2855 = vadd.f32 %v2853, %v2854
          %v2856 = vsel %vm2239, %v2774, 0.0
          %v2857 = vadd.f32 %v2855, %v2856
          %v2858 = vsel %vm2239, %v2775, 0.0
          %v2859 = vadd.f32 %v2857, %v2858
          %v2860 = vsel %vm2239, %v2776, 0.0
          %v2861 = vadd.f32 %v2859, %v2860
          %v2862 = vsel %vm2239, %v2777, 0.0
          %v2863 = vadd.f32 %v2861, %v2862
          %v2864 = vsel %vm2239, %v2778, 0.0
          %v2865 = vadd.f32 %v2863, %v2864
          %v2866 = vsel %vm2239, %v2779, 0.0
          %v2867 = vadd.f32 %v2865, %v2866
          %v2868 = vsel %vm2239, %v2780, 0.0
          %v2869 = vadd.f32 %v2867, %v2868
          %v2870 = vsel %vm2239, %v2781, 0.0
          %v2871 = vadd.f32 %v2869, %v2870
          %v2872 = vsel %vm2239, %v2782, 0.0
          %v2873 = vadd.f32 %v2871, %v2872
          %v2874 = vsel %vm2239, %v2783, 0.0
          %v2875 = vadd.f32 %v2873, %v2874
          %v2876 = vsel %vm2239, %v2784, 0.0
          %v2877 = vadd.f32 %v2875, %v2876
          %v2878 = vsel %vm2239, %v2785, 0.0
          %v2879 = vadd.f32 %v2877, %v2878
          %v2880 = vsel %vm2239, %v2786, 0.0
          %v2881 = vadd.f32 %v2879, %v2880
          %v2882 = vsel %vm2239, %v2787, 0.0
          %v2883 = vadd.f32 %v2881, %v2882
          %v2884 = vsel %vm2239, %v2788, 0.0
          %v2885 = vadd.f32 %v2883, %v2884
          %v2886 = vsel %vm2239, %v2789, 0.0
          %v2887 = vadd.f32 %v2885, %v2886
          %v2888 = vsel %vm2239, %v2790, 0.0
          %v2889 = vadd.f32 %v2887, %v2888
          %v2890 = vsel %vm2239, %v2791, 0.0
          %v2891 = vadd.f32 %v2889, %v2890
          %v2892 = vsel %vm2239, %v2792, 0.0
          %v2893 = vadd.f32 %v2891, %v2892
          %v2894 = vsel %vm2239, %v2793, 0.0
          %v2895 = vadd.f32 %v2893, %v2894
          %v2896 = vsel %vm2239, %v2794, 0.0
          %v2897 = vadd.f32 %v2895, %v2896
          %v2898 = vsel %vm2239, %v2795, 0.0
          %v2899 = vadd.f32 %v2897, %v2898
          %v2900 = vsel %vm2239, %v2796, 0.0
          %v2901 = vadd.f32 %v2899, %v2900
          %v2902 = vsel %vm2239, %v2797, 0.0
          %v2903 = vadd.f32 %v2901, %v2902
          %v2904 = vsel %vm2239, %v2798, 0.0
          %v2905 = vadd.f32 %v2903, %v2904
          %v2906 = vsel %vm2239, %v2799, 0.0
          %v2907 = vadd.f32 %v2905, %v2906
          %v2908 = vsel %vm2239, %v2800, 0.0
          %v2909 = vadd.f32 %v2907, %v2908
          %v2910 = vsel %vm2239, %v2801, 0.0
          %v2911 = vadd.f32 %v2909, %v2910
          %v2912 = vsel %vm2239, %v2802, 0.0
          %v2913 = vadd.f32 %v2911, %v2912
          %v2914 = vsel %vm2239, %v2803, 0.0
          %v2915 = vadd.f32 %v2913, %v2914
          %v2916 = vsel %vm2239, %v2804, 0.0
          %v2917 = vadd.f32 %v2915, %v2916
          %v2918 = vsel %vm2239, %v2805, 0.0
          %v2919 = vadd.f32 %v2917, %v2918
          %v2920 = vsel %vm2239, %v2806, 0.0
          %v2921 = vadd.f32 %v2919, %v2920
          %v2922 = vsel %vm2239, %v2807, 0.0
          %v2923 = vadd.f32 %v2921, %v2922
          %v2924 = vsel %vm2239, %v2808, 0.0
          %v2925 = vadd.f32 %v2923, %v2924
          %v2926 = vsel %vm2239, %v2809, 0.0
          %v2927 = vadd.f32 %v2925, %v2926
          %v2928 = vsel %vm2239, %v2810, 0.0
          %v2929 = vadd.f32 %v2927, %v2928
          %v2930 = vsel %vm2239, %v2811, 0.0
          %v2931 = vadd.f32 %v2929, %v2930
          %v2932 = vsel %vm2239, %v2812, 0.0
          %v2933 = vadd.f32 %v2931, %v2932
          %v2934 = vsel %vm2239, %v2813, 0.0
          %v2935 = vadd.f32 %v2933, %v2934
          %v2936 = vsel %vm2239, %v2814, 0.0
          %v2937 = vadd.f32 %v2935, %v2936
          %v2938 = vsel %vm2239, %v2815, 0.0
          %v2939 = vadd.f32 %v2937, %v2938
          %v2940 = vsel %vm2239, %v2816, 0.0
          %v2941 = vadd.f32 %v2939, %v2940
          %v2942 = vsel %vm2239, %v2817, 0.0
          %v2943 = vadd.f32 %v2941, %v2942
          %v2944 = vsel %vm2239, %v2818, 0.0
          %v2945 = vadd.f32 %v2943, %v2944
          %2946 = vadd.xlane.f32.xlu0 %v2945
          %v2947 = vpop.xlane.xlu0 %2946
          %v2948 = vrot.slane %v2947, 4
          %v2949 = vadd.f32 %v2947, %v2948
          %v2950 = vrot.slane %v2949, 2
          %v2951 = vadd.f32 %v2949, %v2950
          %v2952 = vrot.slane %v2951, 1
          %v2953 = vadd.f32 %v2951, %v2952
          %s2954 = vtos %v2953
          %v2955 = vld [vmem:[#allocation3] sm:$0xff]
          %v2956 = vld [vmem:[#allocation3 + $0x8] sm:$0xff]
          %v2957 = vld [vmem:[#allocation3 + $0x10] sm:$0xff]
          %v2958 = vld [vmem:[#allocation3 + $0x18] sm:$0xff]
          %v2959 = vld [vmem:[#allocation3 + $0x20] sm:$0xff]
          %v2960 = vld [vmem:[#allocation3 + $0x28] sm:$0xff]
          %v2961 = vld [vmem:[#allocation3 + $0x30] sm:$0xff]
          %v2962 = vld [vmem:[#allocation3 + $0x38] sm:$0xff]
          %v2963 = vld [vmem:[#allocation3 + $0x40] sm:$0xff]
          %v2964 = vld [vmem:[#allocation3 + $0x48] sm:$0xff]
          %v2965 = vld [vmem:[#allocation3 + $0x50] sm:$0xff]
          %v2966 = vld [vmem:[#allocation3 + $0x58] sm:$0xff]
          %v2967 = vld [vmem:[#allocation3 + $0x60] sm:$0xff]
          %v2968 = vld [vmem:[#allocation3 + $0x68] sm:$0xff]
          %v2969 = vld [vmem:[#allocation3 + $0x70] sm:$0xff]
          %v2970 = vld [vmem:[#allocation3 + $0x78] sm:$0xff]
          %v2971 = vld [vmem:[#allocation3 + $0x80] sm:$0xff]
          %v2972 = vld [vmem:[#allocation3 + $0x88] sm:$0xff]
          %v2973 = vld [vmem:[#allocation3 + $0x90] sm:$0xff]
          %v2974 = vld [vmem:[#allocation3 + $0x98] sm:$0xff]
          %v2975 = vld [vmem:[#allocation3 + $0xa0] sm:$0xff]
          %v2976 = vld [vmem:[#allocation3 + $0xa8] sm:$0xff]
          %v2977 = vld [vmem:[#allocation3 + $0xb0] sm:$0xff]
          %v2978 = vld [vmem:[#allocation3 + $0xb8] sm:$0xff]
          %v2979 = vld [vmem:[#allocation3 + $0xc0] sm:$0xff]
          %v2980 = vld [vmem:[#allocation3 + $0xc8] sm:$0xff]
          %v2981 = vld [vmem:[#allocation3 + $0xd0] sm:$0xff]
          %v2982 = vld [vmem:[#allocation3 + $0xd8] sm:$0xff]
          %v2983 = vld [vmem:[#allocation3 + $0xe0] sm:$0xff]
          %v2984 = vld [vmem:[#allocation3 + $0xe8] sm:$0xff]
          %v2985 = vld [vmem:[#allocation3 + $0xf0] sm:$0xff]
          %v2986 = vld [vmem:[#allocation3 + $0xf8] sm:$0xff]
          %v2987 = vld [vmem:[#allocation3 + $0x100] sm:$0xff]
          %v2988 = vld [vmem:[#allocation3 + $0x108] sm:$0xff]
          %v2989 = vld [vmem:[#allocation3 + $0x110] sm:$0xff]
          %v2990 = vld [vmem:[#allocation3 + $0x118] sm:$0xff]
          %v2991 = vld [vmem:[#allocation3 + $0x120] sm:$0xff]
          %v2992 = vld [vmem:[#allocation3 + $0x128] sm:$0xff]
          %v2993 = vld [vmem:[#allocation3 + $0x130] sm:$0xff]
          %v2994 = vld [vmem:[#allocation3 + $0x138] sm:$0xff]
          %v2995 = vld [vmem:[#allocation3 + $0x140] sm:$0xff]
          %v2996 = vld [vmem:[#allocation3 + $0x148] sm:$0xff]
          %v2997 = vld [vmem:[#allocation3 + $0x150] sm:$0xff]
          %v2998 = vld [vmem:[#allocation3 + $0x158] sm:$0xff]
          %v2999 = vld [vmem:[#allocation3 + $0x160] sm:$0xff]
          %v3000 = vld [vmem:[#allocation3 + $0x168] sm:$0xff]
          %v3001 = vld [vmem:[#allocation3 + $0x170] sm:$0xff]
          %v3002 = vld [vmem:[#allocation3 + $0x178] sm:$0xff]
          %v3003 = vld [vmem:[#allocation3 + $0x180] sm:$0xff]
          %v3004 = vld [vmem:[#allocation3 + $0x188] sm:$0xff]
          %v3005 = vld [vmem:[#allocation3 + $0x190] sm:$0xff]
          %v3006 = vld [vmem:[#allocation3 + $0x198] sm:$0xff]
          %v3007 = vld [vmem:[#allocation3 + $0x1a0] sm:$0xff]
          %v3008 = vld [vmem:[#allocation3 + $0x1a8] sm:$0xff]
          %v3009 = vld [vmem:[#allocation3 + $0x1b0] sm:$0xff]
          %v3010 = vld [vmem:[#allocation3 + $0x1b8] sm:$0xff]
          %v3011 = vld [vmem:[#allocation3 + $0x1c0] sm:$0xff]
          %v3012 = vld [vmem:[#allocation3 + $0x1c8] sm:$0xff]
          %v3013 = vld [vmem:[#allocation3 + $0x1d0] sm:$0xff]
          %v3014 = vld [vmem:[#allocation3 + $0x1d8] sm:$0xff]
          %v3015 = vld [vmem:[#allocation3 + $0x1e0] sm:$0xff]
          %v3016 = vld [vmem:[#allocation3 + $0x1e8] sm:$0xff]
          %v3017 = vld [vmem:[#allocation3 + $0x1f0] sm:$0xff]
          %v3018 = vld [vmem:[#allocation3 + $0x1f8] sm:$0xff]
          %v3019 = vsel %vm2239, %v2955, 0.0
          %v3020 = vsel %vm2239, %v2956, 0.0
          %v3021 = vadd.f32 %v3019, %v3020
          %v3022 = vsel %vm2239, %v2957, 0.0
          %v3023 = vadd.f32 %v3021, %v3022
          %v3024 = vsel %vm2239, %v2958, 0.0
          %v3025 = vadd.f32 %v3023, %v3024
          %v3026 = vsel %vm2239, %v2959, 0.0
          %v3027 = vadd.f32 %v3025, %v3026
          %v3028 = vsel %vm2239, %v2960, 0.0
          %v3029 = vadd.f32 %v3027, %v3028
          %v3030 = vsel %vm2239, %v2961, 0.0
          %v3031 = vadd.f32 %v3029, %v3030
          %v3032 = vsel %vm2239, %v2962, 0.0
          %v3033 = vadd.f32 %v3031, %v3032
          %v3034 = vsel %vm2239, %v2963, 0.0
          %v3035 = vadd.f32 %v3033, %v3034
          %v3036 = vsel %vm2239, %v2964, 0.0
          %v3037 = vadd.f32 %v3035, %v3036
          %v3038 = vsel %vm2239, %v2965, 0.0
          %v3039 = vadd.f32 %v3037, %v3038
          %v3040 = vsel %vm2239, %v2966, 0.0
          %v3041 = vadd.f32 %v3039, %v3040
          %v3042 = vsel %vm2239, %v2967, 0.0
          %v3043 = vadd.f32 %v3041, %v3042
          %v3044 = vsel %vm2239, %v2968, 0.0
          %v3045 = vadd.f32 %v3043, %v3044
          %v3046 = vsel %vm2239, %v2969, 0.0
          %v3047 = vadd.f32 %v3045, %v3046
          %v3048 = vsel %vm2239, %v2970, 0.0
          %v3049 = vadd.f32 %v3047, %v3048
          %v3050 = vsel %vm2239, %v2971, 0.0
          %v3051 = vadd.f32 %v3049, %v3050
          %v3052 = vsel %vm2239, %v2972, 0.0
          %v3053 = vadd.f32 %v3051, %v3052
          %v3054 = vsel %vm2239, %v2973, 0.0
          %v3055 = vadd.f32 %v3053, %v3054
          %v3056 = vsel %vm2239, %v2974, 0.0
          %v3057 = vadd.f32 %v3055, %v3056
          %v3058 = vsel %vm2239, %v2975, 0.0
          %v3059 = vadd.f32 %v3057, %v3058
          %v3060 = vsel %vm2239, %v2976, 0.0
          %v3061 = vadd.f32 %v3059, %v3060
          %v3062 = vsel %vm2239, %v2977, 0.0
          %v3063 = vadd.f32 %v3061, %v3062
          %v3064 = vsel %vm2239, %v2978, 0.0
          %v3065 = vadd.f32 %v3063, %v3064
          %v3066 = vsel %vm2239, %v2979, 0.0
          %v3067 = vadd.f32 %v3065, %v3066
          %v3068 = vsel %vm2239, %v2980, 0.0
          %v3069 = vadd.f32 %v3067, %v3068
          %v3070 = vsel %vm2239, %v2981, 0.0
          %v3071 = vadd.f32 %v3069, %v3070
          %v3072 = vsel %vm2239, %v2982, 0.0
          %v3073 = vadd.f32 %v3071, %v3072
          %v3074 = vsel %vm2239, %v2983, 0.0
          %v3075 = vadd.f32 %v3073, %v3074
          %v3076 = vsel %vm2239, %v2984, 0.0
          %v3077 = vadd.f32 %v3075, %v3076
          %v3078 = vsel %vm2239, %v2985, 0.0
          %v3079 = vadd.f32 %v3077, %v3078
          %v3080 = vsel %vm2239, %v2986, 0.0
          %v3081 = vadd.f32 %v3079, %v3080
          %v3082 = vsel %vm2239, %v2987, 0.0
          %v3083 = vadd.f32 %v3081, %v3082
          %v3084 = vsel %vm2239, %v2988, 0.0
          %v3085 = vadd.f32 %v3083, %v3084
          %v3086 = vsel %vm2239, %v2989, 0.0
          %v3087 = vadd.f32 %v3085, %v3086
          %v3088 = vsel %vm2239, %v2990, 0.0
          %v3089 = vadd.f32 %v3087, %v3088
          %v3090 = vsel %vm2239, %v2991, 0.0
          %v3091 = vadd.f32 %v3089, %v3090
          %v3092 = vsel %vm2239, %v2992, 0.0
          %v3093 = vadd.f32 %v3091, %v3092
          %v3094 = vsel %vm2239, %v2993, 0.0
          %v3095 = vadd.f32 %v3093, %v3094
          %v3096 = vsel %vm2239, %v2994, 0.0
          %v3097 = vadd.f32 %v3095, %v3096
          %v3098 = vsel %vm2239, %v2995, 0.0
          %v3099 = vadd.f32 %v3097, %v3098
          %v3100 = vsel %vm2239, %v2996, 0.0
          %v3101 = vadd.f32 %v3099, %v3100
          %v3102 = vsel %vm2239, %v2997, 0.0
          %v3103 = vadd.f32 %v3101, %v3102
          %v3104 = vsel %vm2239, %v2998, 0.0
          %v3105 = vadd.f32 %v3103, %v3104
          %v3106 = vsel %vm2239, %v2999, 0.0
          %v3107 = vadd.f32 %v3105, %v3106
          %v3108 = vsel %vm2239, %v3000, 0.0
          %v3109 = vadd.f32 %v3107, %v3108
          %v3110 = vsel %vm2239, %v3001, 0.0
          %v3111 = vadd.f32 %v3109, %v3110
          %v3112 = vsel %vm2239, %v3002, 0.0
          %v3113 = vadd.f32 %v3111, %v3112
          %v3114 = vsel %vm2239, %v3003, 0.0
          %v3115 = vadd.f32 %v3113, %v3114
          %v3116 = vsel %vm2239, %v3004, 0.0
          %v3117 = vadd.f32 %v3115, %v3116
          %v3118 = vsel %vm2239, %v3005, 0.0
          %v3119 = vadd.f32 %v3117, %v3118
          %v3120 = vsel %vm2239, %v3006, 0.0
          %v3121 = vadd.f32 %v3119, %v3120
          %v3122 = vsel %vm2239, %v3007, 0.0
          %v3123 = vadd.f32 %v3121, %v3122
          %v3124 = vsel %vm2239, %v3008, 0.0
          %v3125 = vadd.f32 %v3123, %v3124
          %v3126 = vsel %vm2239, %v3009, 0.0
          %v3127 = vadd.f32 %v3125, %v3126
          %v3128 = vsel %vm2239, %v3010, 0.0
          %v3129 = vadd.f32 %v3127, %v3128
          %v3130 = vsel %vm2239, %v3011, 0.0
          %v3131 = vadd.f32 %v3129, %v3130
          %v3132 = vsel %vm2239, %v3012, 0.0
          %v3133 = vadd.f32 %v3131, %v3132
          %v3134 = vsel %vm2239, %v3013, 0.0
          %v3135 = vadd.f32 %v3133, %v3134
          %v3136 = vsel %vm2239, %v3014, 0.0
          %v3137 = vadd.f32 %v3135, %v3136
          %v3138 = vsel %vm2239, %v3015, 0.0
          %v3139 = vadd.f32 %v3137, %v3138
          %v3140 = vsel %vm2239, %v3016, 0.0
          %v3141 = vadd.f32 %v3139, %v3140
          %v3142 = vsel %vm2239, %v3017, 0.0
          %v3143 = vadd.f32 %v3141, %v3142
          %v3144 = vsel %vm2239, %v3018, 0.0
          %v3145 = vadd.f32 %v3143, %v3144
          %3146 = vadd.xlane.f32.xlu0 %v3145
          %v3147 = vpop.xlane.xlu0 %3146
          %v3148 = vrot.slane %v3147, 4
          %v3149 = vadd.f32 %v3147, %v3148
          %v3150 = vrot.slane %v3149, 2
          %v3151 = vadd.f32 %v3149, %v3150
          %v3152 = vrot.slane %v3151, 1
          %v3153 = vadd.f32 %v3151, %v3152
          %s3154 = vtos %v3153
          %vm3155 = vcmp.eq.s32.totalorder %v1278, 0
          %vm3156 = vcmp.eq.s32.totalorder %v1278, 1
          %v3157 = vstv %s3154
          %v3158 = vsel %vm3156, %v3157, 0.0
          %v3159 = vstv %s2954
          %v3160 = vsel %vm3155, %v3159, %v3158
          %3161 = vst [vmem:[%s222] sm:$0x1] %v3160
        $region40: #{tpu_custom_call.1} parent=31 // pred_fallthru
          _
        %s3162 = sand.u32 %s121, 1
        %s3163 = scalar_lea.sflag [#allocation5], %s3162
        %s3164 = sand.u32 %s121, 1
        %s3165 = scalar_lea.vmem [#allocation4], %s3164
        // Predicated region
        $region41: #{tpu_custom_call.1} parent=31 // pred_check
          %p3166 = pneg %p131
        $region42: #{tpu_custom_call.1} parent=31 // pred_check_branch
          %3168 = sbr.rel (%p3166) target = $region44
        $region43: #{tpu_custom_call.1} parent=31 // pred_region
          %s3170 = ssub.s32 16, 16
          %3171 = vsyncadd %s3163, %s3170
          %s3172 = smul.addr %s21, 16
          %s3173 = scalar_lea.hbm %s3, %s3172
          %s3175 = sshll.u32 %s3165, 4
          %s3176 = int_to_ptr.vmem [resolvable:$true] %s3175
          %3178 = dma.vmem_to_hbm [thread:$0]  %s3176, 16, %s3173, %s3163
        $region44: #{tpu_custom_call.1} parent=31 // pred_fallthru
          _
      $region32: #{tpu_custom_call.1} parent=5 // pred_fallthru
        _
      %p3179 = scmp.le.s32.totalorder 2, %s12
      // Predicated region
      $region45: #{tpu_custom_call.1} parent=5 // pred_check
        %p3180 = pneg %p3179
      $region46: #{tpu_custom_call.1} parent=5 // pred_check_branch
        %3182 = sbr.rel (%p3180) target = $region48
      $region47: #{tpu_custom_call.1} parent=5 // pred_region
        %s3183 = ssub.s32 %s12, 2
        // Predicated region
        $region49: #{tpu_custom_call.1} parent=47 // pred_check
          %p3184 = pneg %p137
        $region50: #{tpu_custom_call.1} parent=47 // pred_check_branch
          %3186 = sbr.rel (%p3184) target = $region52
        $region51: #{tpu_custom_call.1} parent=47 // pred_region
          %s3187 = sand.u32 %s122, 1
          %s3188 = scalar_lea.sflag [#allocation5], %s3187
          %s3189 = sand.u32 %s122, 1
          %s3190 = scalar_lea.vmem [#allocation4], %s3189
          %3191 = dma.done %s3188, 16
        $region52: #{tpu_custom_call.1} parent=47 // pred_fallthru
          _
      $region48: #{tpu_custom_call.1} parent=5 // pred_fallthru
        _
    $region6: #{tpu_custom_call.1} parent=1 // loop_footer
      %s16 = sadd.s32 1, %s12
    $region7: #{tpu_custom_call.1} parent=1 // loop_footer_branch
      %11 = sbr.rel target = $region3
    $region8: #{tpu_custom_call.1} parent=1 // loop_exit
      _
    %3192 = vsyncpa [#allocation5], 1
    %s3193 = scalar_lea.sflag [#allocation5], 1
    %3194 = vsyncpa %s3193, 1

</llo_original>
